<compile_context>
chip_gen: v5e
topology: v5e:2x2
jax: 0.10.0
libtpu: 0.0.40
codegen_flags: <defaults>
</compile_context>

<pallas_src>
import functools

import jax
import jax.numpy as jnp
from jax.experimental import pallas as pl
from jax.experimental.pallas import tpu as pltpu

NUM_BOXES = 5
FEAT_DIM = 1000            # resnet50.fc.out_features
BBOX_HIDDEN = 512
CORR_HIDDEN = 256
HID_CAT = BBOX_HIDDEN + CORR_HIDDEN   # 768
OUT_PAD = 128                         # lane-dense fused output width
MAX_TB = 1024                         # batch-tile cap (multiple of 16)


def _round_up(a: int, m: int) -> int:
    return ((a + m - 1) // m) * m


def _fused_heads_kernel(x_ref, w1_ref, b1_ref, w2_ref, b2_ref, out_ref,
                        *, bbox_dim: int, num_boxes: int):
    # x: (TB, 1000) f32 ; w1: (1000, 768) bf16 ; b1: (1, 768) f32
    # w2: (768, 128) bf16 (block-diagonal) ; b2: (1, 128) f32
    x = x_ref[...].astype(jnp.bfloat16)      # cast in-kernel; x stays f32 in HBM

    # fused first layer: [h_bbox | h_corr] = relu(x @ W1 + b1)  (both heads)
    h = jnp.dot(x, w1_ref[...], preferred_element_type=jnp.float32) + b1_ref[...]
    h = jnp.maximum(h, 0.0)

    # fused block-diagonal second layer:
    # cols 0:bbox_dim -> bbox coords, cols bbox_dim:bbox_dim+num_boxes -> logits.
    y = jnp.dot(h.astype(jnp.bfloat16), w2_ref[...],
                preferred_element_type=jnp.float32) + b2_ref[...]

    # softmax over the correctness lanes only, lane-dense with a mask so no
    # lane-sparse slices / masked stores appear.
    lane = jax.lax.broadcasted_iota(jnp.int32, y.shape, 1)
    corr_mask = (lane >= bbox_dim) & (lane < bbox_dim + num_boxes)
    logits = jnp.where(corr_mask, y, -jnp.inf)
    m = jnp.max(logits, axis=1, keepdims=True)
    e = jnp.exp(logits - m)                   # exactly 0 on non-correctness lanes
    s = jnp.sum(e, axis=1, keepdims=True)
    # Exact reciprocal so each softmax row sums to 1 to f32 precision
    # (approx=True only reaches ~1e-3 and failed the self-check).
    soft = e * pl.reciprocal(s, approx=False)

    out_ref[...] = jnp.where(corr_mask, soft, y)   # (TB, 128) lane-dense f32


@functools.partial(jax.jit, static_argnames=("num_boxes",))
def fire_detection_heads(x, packed_params, *, num_boxes=NUM_BOXES):
    """x: (B, FEAT_DIM) float32 encoder features.
    Returns (bboxes (B, num_boxes, 4), correctness (B, num_boxes))."""
    w1, b1, w2, b2 = packed_params
    B, K = x.shape
    bbox_dim = 4 * num_boxes

    # Batch tile: multiple of 16, capped at MAX_TB, ~ceil(B/2) so the grid has
    # >= 2 steps whenever B > 16 (shards across v7x's 2 TensorCores).
    TB = min(MAX_TB, _round_up(max(pl.cdiv(B, 2), 1), 16))
    grid = (pl.cdiv(B, TB),)

    kernel = functools.partial(_fused_heads_kernel,
                               bbox_dim=bbox_dim, num_boxes=num_boxes)

    out = pl.pallas_call(
        kernel,
        grid=grid,
        in_specs=[
            # x: unpadded f32; last block dim == full feature dim (legal) so no
            # wrapper-side pad/cast pass over x is needed.
            pl.BlockSpec((TB, K), lambda i: (i, 0)),
            # Constant index_maps: weight/bias blocks are fetched once and stay
            # VMEM-resident across grid steps (no per-step re-DMA).
            pl.BlockSpec(w1.shape, lambda i: (0, 0)),
            pl.BlockSpec(b1.shape, lambda i: (0, 0)),
            pl.BlockSpec(w2.shape, lambda i: (0, 0)),
            pl.BlockSpec(b2.shape, lambda i: (0, 0)),
        ],
        out_specs=pl.BlockSpec((TB, OUT_PAD), lambda i: (i, 0)),
        out_shape=jax.ShapeDtypeStruct((B, OUT_PAD), jnp.float32),
        compiler_params=pltpu.CompilerParams(
            dimension_semantics=("parallel",),
            # 32 MiB == v6e/v7x default scoped limit (no expansion there);
            # explicit raise over v5e's 16 MiB default so TB=1024 f32 x blocks
            # + resident weights + temporaries (~18 MiB) fit.
            vmem_limit_bytes=32 * 1024 * 1024,
        ),
    )(x, w1, b1, w2, b2)

    # Glue: same as PyTorch `bboxes.reshape(-1, num_boxes, 4)` + logits slice.
    bboxes = out[:, :bbox_dim].reshape(-1, num_boxes, 4)
    correctness = out[:, bbox_dim:bbox_dim + num_boxes]
    return bboxes, correctness


def init_params(key, num_boxes=NUM_BOXES):
    """Deterministic init mirroring torch.nn.Linear defaults
    (U[-1/sqrt(in), 1/sqrt(in)]). Weights stored transposed vs. PyTorch:
    (in_features, out_features); biases (out_features,)."""
    def linear(k, fan_in, fan_out):
        kw, kb = jax.random.split(k)
        bound = 1.0 / jnp.sqrt(float(fan_in))
        w = jax.random.uniform(kw, (fan_in, fan_out), jnp.float32, -bound, bound)
        b = jax.random.uniform(kb, (fan_out,), jnp.float32, -bound, bound)
        return w, b

    k1, k2, k3, k4 = jax.random.split(key, 4)
    wb1, bb1 = linear(k1, FEAT_DIM, BBOX_HIDDEN)           # l_bbox
    wb2, bb2 = linear(k2, BBOX_HIDDEN, 4 * num_boxes)      # l_bbox2
    wc1, bc1 = linear(k3, FEAT_DIM, CORR_HIDDEN)           # l_correctness
    wc2, bc2 = linear(k4, CORR_HIDDEN, num_boxes)          # l_correctness2
    return (wb1, bb1, wb2, bb2, wc1, bc1, wc2, bc2)


def pack_params(params, num_boxes=NUM_BOXES):
    """Pack the four Linear layers into the fused bf16 layout used by the
    kernel. Done once, outside the per-call path."""
    wb1, bb1, wb2, bb2, wc1, bc1, wc2, bc2 = params
    bbox_dim = 4 * num_boxes
    assert bbox_dim + num_boxes <= OUT_PAD

    # Fused first layer: (1000, 768). No K padding — x is consumed unpadded.
    w1 = jnp.concatenate([wb1, wc1], axis=1)
    b1 = jnp.concatenate([bb1, bc1], axis=-1).reshape(1, HID_CAT)

    # Fused block-diagonal second layer: (768, 128), lane-padded outputs
    # (cols 0:20 bboxes, cols 20:25 correctness logits, rest zero).
    w2 = jnp.zeros((HID_CAT, OUT_PAD), jnp.float32)
    w2 = w2.at[:BBOX_HIDDEN, :bbox_dim].set(wb2)
    w2 = w2.at[BBOX_HIDDEN:, bbox_dim:bbox_dim + num_boxes].set(wc2)
    b2 = jnp.zeros((1, OUT_PAD), jnp.float32)
    b2 = b2.at[0, :bbox_dim].set(bb2)
    b2 = b2.at[0, bbox_dim:bbox_dim + num_boxes].set(bc2)

    # bf16 weights (bf16-native MXU, halves the weight DMA); f32 biases.
    # Note (v7x-only option, not applied): fp8 weight storage with per-column
    # scales folded into the bias path would halve the weight DMA again.
    return (w1.astype(jnp.bfloat16), b1, w2.astype(jnp.bfloat16), b2)


def _reference(x, params, num_boxes=NUM_BOXES):
    """Pure-JAX f32 reference matching the PyTorch forward."""
    wb1, bb1, wb2, bb2, wc1, bc1, wc2, bc2 = params
    h_b = jnp.maximum(x @ wb1 + bb1, 0.0)
    bboxes = (h_b @ wb2 + bb2).reshape(-1, num_boxes, 4)
    h_c = jnp.maximum(x @ wc1 + bc1, 0.0)
    corr = jax.nn.softmax(h_c @ wc2 + bc2, axis=1)
    return bboxes, corr


if __name__ == "__main__":
    key = jax.random.PRNGKey(0)
    k_x, k_p = jax.random.split(key)

    B = 2
    # Encoder features (stand-in for the frozen ResNet-50 output of size 1000).
    x = jax.random.normal(k_x, (B, FEAT_DIM), jnp.float32)
    params = init_params(k_p)
    packed = pack_params(params)

    bboxes, correctness = fire_detection_heads(x, packed)
    jax.block_until_ready((bboxes, correctness))

    ref_bboxes, ref_corr = _reference(x, params)
    assert bboxes.shape == (B, NUM_BOXES, 4), bboxes.shape
    assert correctness.shape == (B, NUM_BOXES), correctness.shape
    # bf16 matmuls -> relaxed tolerances vs. the f32 reference.
    assert jnp.allclose(bboxes, ref_bboxes, atol=5e-2, rtol=5e-2)
    assert jnp.allclose(correctness, ref_corr, atol=2e-2, rtol=2e-2)
    # Exact reciprocal in the softmax -> rows sum to 1 to f32 precision.
    assert jnp.allclose(jnp.sum(correctness, axis=1), 1.0, atol=1e-3)

    print("KERNEL_OK")
</pallas_src>

<mosaic_0001>
module attributes {stable_mosaic.version = 11 : i64} {
  func.func @_fused_heads_kernel(%arg0: i32, %arg1: memref<16x1000xf32, #tpu.memory_space<vmem>>, %arg2: memref<1000x768xbf16, #tpu.memory_space<vmem>>, %arg3: memref<1x768xf32, #tpu.memory_space<vmem>>, %arg4: memref<768x128xbf16, #tpu.memory_space<vmem>>, %arg5: memref<1x128xf32, #tpu.memory_space<vmem>>, %arg6: memref<16x128xf32, #tpu.memory_space<vmem>>) attributes {dimension_semantics = [#tpu.dimension_semantics<parallel>], iteration_bounds = array<i64: 1>, scalar_prefetch = 0 : i64, scratch_operands = 0 : i64, tpu.core_type = #tpu.core_type<tc>, window_params = [{transform_indices = @transform_0, window_bounds = array<i64: 16, 1000>}, {pipeline_mode = #tpu.pipeline_mode<synchronous>, transform_indices = @transform_1, window_bounds = array<i64: 1000, 768>}, {pipeline_mode = #tpu.pipeline_mode<synchronous>, transform_indices = @transform_2, window_bounds = array<i64: 1, 768>}, {pipeline_mode = #tpu.pipeline_mode<synchronous>, transform_indices = @transform_3, window_bounds = array<i64: 768, 128>}, {pipeline_mode = #tpu.pipeline_mode<synchronous>, transform_indices = @transform_4, window_bounds = array<i64: 1, 128>}, {transform_indices = @transform_5, window_bounds = array<i64: 16, 128>}]} {
    %c0 = arith.constant 0 : index
    %c0_0 = arith.constant 0 : index
    %0 = vector.load %arg1[%c0, %c0_0] : memref<16x1000xf32, #tpu.memory_space<vmem>>, vector<16x1000xf32>
    %1 = arith.truncf %0 : vector<16x1000xf32> to vector<16x1000xbf16>
    %c0_1 = arith.constant 0 : index
    %c0_2 = arith.constant 0 : index
    %2 = vector.load %arg2[%c0_1, %c0_2] : memref<1000x768xbf16, #tpu.memory_space<vmem>>, vector<1000x768xbf16>
    %cst = arith.constant dense<0.000000e+00> : vector<16x768xf32>
    %3 = tpu.matmul %1, %2, %cst {dimension_numbers = #tpu.dot_dimension_numbers<[1], [0], [0], [1], [0, 0, 1, 1], [], []>} : vector<16x1000xbf16>, vector<1000x768xbf16>, vector<16x768xf32> -> vector<16x768xf32>
    %c0_3 = arith.constant 0 : index
    %c0_4 = arith.constant 0 : index
    %4 = vector.load %arg3[%c0_3, %c0_4] : memref<1x768xf32, #tpu.memory_space<vmem>>, vector<1x768xf32>
    %5 = vector.broadcast %4 : vector<1x768xf32> to vector<16x768xf32>
    %6 = arith.addf %3, %5 : vector<16x768xf32>
    %cst_5 = arith.constant 0.000000e+00 : f32
    %7 = vector.broadcast %cst_5 : f32 to vector<16x768xf32>
    %8 = arith.maximumf %6, %7 : vector<16x768xf32>
    %9 = arith.truncf %8 : vector<16x768xf32> to vector<16x768xbf16>
    %c0_6 = arith.constant 0 : index
    %c0_7 = arith.constant 0 : index
    %10 = vector.load %arg4[%c0_6, %c0_7] : memref<768x128xbf16, #tpu.memory_space<vmem>>, vector<768x128xbf16>
    %cst_8 = arith.constant dense<0.000000e+00> : vector<16x128xf32>
    %11 = tpu.matmul %9, %10, %cst_8 {dimension_numbers = #tpu.dot_dimension_numbers<[1], [0], [0], [1], [0, 0, 1, 1], [], []>} : vector<16x768xbf16>, vector<768x128xbf16>, vector<16x128xf32> -> vector<16x128xf32>
    %c0_9 = arith.constant 0 : index
    %c0_10 = arith.constant 0 : index
    %12 = vector.load %arg5[%c0_9, %c0_10] : memref<1x128xf32, #tpu.memory_space<vmem>>, vector<1x128xf32>
    %13 = vector.broadcast %12 : vector<1x128xf32> to vector<16x128xf32>
    %14 = arith.addf %11, %13 : vector<16x128xf32>
    %15 = tpu.iota {dimensions = array<i32: 1>} : vector<16x128xi32>
    %c20_i32 = arith.constant 20 : i32
    %16 = vector.broadcast %c20_i32 : i32 to vector<16x128xi32>
    %17 = arith.cmpi sge, %15, %16 : vector<16x128xi32>
    %c25_i32 = arith.constant 25 : i32
    %18 = vector.broadcast %c25_i32 : i32 to vector<16x128xi32>
    %19 = arith.cmpi slt, %15, %18 : vector<16x128xi32>
    %20 = arith.andi %17, %19 : vector<16x128xi1>
    %cst_11 = arith.constant 0xFF800000 : f32
    %21 = vector.broadcast %cst_11 : f32 to vector<16x128xf32>
    %22 = arith.select %20, %14, %21 : vector<16x128xi1>, vector<16x128xf32>
    %cst_12 = arith.constant dense<0xFF800000> : vector<16xf32>
    %23 = vector.multi_reduction <maximumf>, %22, %cst_12 [1] : vector<16x128xf32> to vector<16xf32>
    %24 = vector.shape_cast %23 : vector<16xf32> to vector<16x1xf32>
    %25 = vector.broadcast %24 : vector<16x1xf32> to vector<16x128xf32>
    %26 = arith.subf %22, %25 : vector<16x128xf32>
    %27 = math.exp %26 : vector<16x128xf32>
    %cst_13 = arith.constant dense<0.000000e+00> : vector<16xf32>
    %28 = vector.multi_reduction <add>, %27, %cst_13 [1] : vector<16x128xf32> to vector<16xf32>
    %29 = vector.shape_cast %28 : vector<16xf32> to vector<16x1xf32>
    %30 = tpu.reciprocal %29 : vector<16x1xf32> -> vector<16x1xf32>
    %31 = vector.broadcast %30 : vector<16x1xf32> to vector<16x128xf32>
    %32 = arith.mulf %27, %31 : vector<16x128xf32>
    %33 = arith.select %20, %32, %14 : vector<16x128xi1>, vector<16x128xf32>
    %c0_14 = arith.constant 0 : index
    %c0_15 = arith.constant 0 : index
    %34 = vector.load %arg6[%c0_14, %c0_15] : memref<16x128xf32, #tpu.memory_space<vmem>>, vector<16x128xf32>
    tpu.vector_store %arg6[%c0_14, %c0_15], %33 {strides = array<i32>} : memref<16x128xf32, #tpu.memory_space<vmem>>, vector<16x128xf32>,
    return
  }
  func.func @transform_0(%arg0: i32) -> (i32, i32) {
    %c0_i32 = arith.constant 0 : i32
    %c0_i32_0 = arith.constant 0 : i32
    return %arg0, %c0_i32 : i32, i32
  }
  func.func @transform_1(%arg0: i32) -> (i32, i32) {
    %c0_i32 = arith.constant 0 : i32
    %c0_i32_0 = arith.constant 0 : i32
    %c0_i32_1 = arith.constant 0 : i32
    return %c0_i32, %c0_i32_0 : i32, i32
  }
  func.func @transform_2(%arg0: i32) -> (i32, i32) {
    %c0_i32 = arith.constant 0 : i32
    %c0_i32_0 = arith.constant 0 : i32
    %c0_i32_1 = arith.constant 0 : i32
    return %c0_i32, %c0_i32_0 : i32, i32
  }
  func.func @transform_3(%arg0: i32) -> (i32, i32) {
    %c0_i32 = arith.constant 0 : i32
    %c0_i32_0 = arith.constant 0 : i32
    %c0_i32_1 = arith.constant 0 : i32
    return %c0_i32, %c0_i32_0 : i32, i32
  }
  func.func @transform_4(%arg0: i32) -> (i32, i32) {
    %c0_i32 = arith.constant 0 : i32
    %c0_i32_0 = arith.constant 0 : i32
    %c0_i32_1 = arith.constant 0 : i32
    return %c0_i32, %c0_i32_0 : i32, i32
  }
  func.func @transform_5(%arg0: i32) -> (i32, i32) {
    %c0_i32 = arith.constant 0 : i32
    %c0_i32_0 = arith.constant 0 : i32
    return %arg0, %c0_i32 : i32, i32
  }
}

</mosaic_0001>

<llo_original>
// kernel: fire_detection_heads.1
$region0: #{fire_detection_heads.1}
  #allocation0 [shape = 'u32[]', space=smem, size = 0x4, offset = 0x4, fixed_abs, tag = 'smem constant byte address 0x4 - core index']
  #allocation1 [shape = 'u32[72,128]{1,0:T(1,128)}', space=vmem, size = 0x9000, scoped, tag = 'internal scratch']
  %s0 = inlined_call_operand.hbm [shape: f32[2,1000], index: 0, kind: input, shape index: {}]
  %s1 = inlined_call_operand.hbm [shape: bf16[1000,768], index: 1, kind: input, shape index: {}]
  %s2 = inlined_call_operand.hbm [shape: f32[1,768], index: 2, kind: input, shape index: {}]
  %s3 = inlined_call_operand.hbm [shape: bf16[768,128], index: 3, kind: input, shape index: {}]
  %s4 = inlined_call_operand.hbm [shape: f32[1,128], index: 4, kind: input, shape index: {}]
  %s5 = inlined_call_operand.vmem [shape: f32[2,128], index: 5, kind: output, shape index: {}]
  %s6 = sld [smem:[#allocation0]]
  $region80: #{fire_detection_heads.1} parent=0
    _
  %s8 = ssub.s32 1, %s6
  %s9 = scalar_select 0, %s8, %s6
  $region1: #{fire_detection_heads.1} parent=0
    #allocation2 [shape = 'u8[65536]{0}', space=vmem, size = 0x10000, scoped, tag = 'input window, operand 0, single buffered']
    #allocation3 [shape = 's32[1]{0}', space=sflag, size = 0x4, scoped, tag = 'scoped memory for fire_detection_heads.1']
    #allocation4 [shape = 'u8[1536000]{0}', space=vmem, size = 0x177000, scoped, tag = 'input window, operand 1, single buffered']
    #allocation5 [shape = 's32[1]{0}', space=sflag, size = 0x4, scoped, tag = 'scoped memory for fire_detection_heads.1']
    #allocation6 [shape = 'u8[3072]{0}', space=vmem, size = 0xc00, scoped, tag = 'input window, operand 2, single buffered']
    #allocation7 [shape = 'u8[196608]{0}', space=vmem, size = 0x30000, scoped, tag = 'input window, operand 3, single buffered']
    #allocation8 [shape = 's32[1]{0}', space=sflag, size = 0x4, scoped, tag = 'scoped memory for fire_detection_heads.1']
    #allocation9 [shape = 'u8[512]{0}', space=vmem, size = 0x400, scoped, tag = 'input window, operand 4, single buffered']
    #allocation10 [shape = 'u8[8192]{0}', space=vmem, size = 0x2000, scoped, tag = 'output window, operand 0, single buffered']
    %10 = vsyncpa [#allocation3], 0
    %11 = vsyncpa [#allocation5], 0
    %12 = vsyncpa [#allocation8], 0
    // Predicated region
    $region2: #{fire_detection_heads.1} parent=1 // pred_check
      _
    $region3: #{fire_detection_heads.1} parent=1 // pred_check_branch
      %14 = sbr.rel (0) target = $region5
    $region4: #{fire_detection_heads.1} parent=1 // pred_region
      %16 = vsyncadd [#allocation3], 1792
      %s17 = sshll.u32 %s0, 4
      %s18 = int_to_ptr.hbm [resolvable:$true] %s17
      %s19 = sshll.u32 [#allocation2], 4
      %s20 = int_to_ptr.vmem [resolvable:$true] %s19
      %25 = dma.hbm_to_vmem [thread:$0]  %s18, 256, %s20, [#allocation3], 256, 256, 16
    $region5: #{fire_detection_heads.1} parent=1 // pred_fallthru
      _
    // Predicated region
    $region6: #{fire_detection_heads.1} parent=1 // pred_check
      _
    $region7: #{fire_detection_heads.1} parent=1 // pred_check_branch
      %27 = sbr.rel (0) target = $region9
    $region8: #{fire_detection_heads.1} parent=1 // pred_region
      %29 = vsyncadd [#allocation5], 0
      %s30 = sshll.u32 %s1, 4
      %s31 = int_to_ptr.hbm [resolvable:$true] %s30
      %s32 = sshll.u32 [#allocation4], 4
      %s33 = int_to_ptr.vmem [resolvable:$true] %s32
      %38 = dma.hbm_to_vmem [thread:$0]  %s31, 48000, %s33, [#allocation5], 384, 384, 24
    $region9: #{fire_detection_heads.1} parent=1 // pred_fallthru
      _
    // Predicated region
    $region10: #{fire_detection_heads.1} parent=1 // pred_check
      _
    $region11: #{fire_detection_heads.1} parent=1 // pred_check_branch
      %40 = sbr.rel (0) target = $region13
    $region12: #{fire_detection_heads.1} parent=1 // pred_region
      %42 = vsyncadd [#allocation5], 0
      %s44 = sshll.u32 %s2, 4
      %s45 = int_to_ptr.hbm [resolvable:$true] %s44
      %s46 = sshll.u32 [#allocation6], 4
      %s47 = int_to_ptr.vmem [resolvable:$true] %s46
      %49 = dma.hbm_to_vmem [thread:$0]  %s45, 96, %s47, [#allocation5]
    $region13: #{fire_detection_heads.1} parent=1 // pred_fallthru
      _
    // Predicated region
    $region14: #{fire_detection_heads.1} parent=1 // pred_check
      _
    $region15: #{fire_detection_heads.1} parent=1 // pred_check_branch
      %51 = sbr.rel (0) target = $region17
    $region16: #{fire_detection_heads.1} parent=1 // pred_region
      %53 = vsyncadd [#allocation8], 0
      %s54 = sshll.u32 %s3, 4
      %s55 = int_to_ptr.hbm [resolvable:$true] %s54
      %s56 = sshll.u32 [#allocation7], 4
      %s57 = int_to_ptr.vmem [resolvable:$true] %s56
      %62 = dma.hbm_to_vmem [thread:$0]  %s55, 6144, %s57, [#allocation8], 64, 64, 4
    $region17: #{fire_detection_heads.1} parent=1 // pred_fallthru
      _
    // Predicated region
    $region18: #{fire_detection_heads.1} parent=1 // pred_check
      _
    $region19: #{fire_detection_heads.1} parent=1 // pred_check_branch
      %64 = sbr.rel (0) target = $region21
    $region20: #{fire_detection_heads.1} parent=1 // pred_region
      %66 = vsyncadd [#allocation8], 0
      %s68 = sshll.u32 %s4, 4
      %s69 = int_to_ptr.hbm [resolvable:$true] %s68
      %s70 = sshll.u32 [#allocation9], 4
      %s71 = int_to_ptr.vmem [resolvable:$true] %s70
      %73 = dma.hbm_to_vmem [thread:$0]  %s69, 16, %s71, [#allocation8]
    $region21: #{fire_detection_heads.1} parent=1 // pred_fallthru
      _
    // Predicated region
    $region22: #{fire_detection_heads.1} parent=1 // pred_check
      _
    $region23: #{fire_detection_heads.1} parent=1 // pred_check_branch
      %75 = sbr.rel (0) target = $region25
    $region24: #{fire_detection_heads.1} parent=1 // pred_region
      %77 = dma.done [#allocation3], 2048
    $region25: #{fire_detection_heads.1} parent=1 // pred_fallthru
      _
    // Predicated region
    $region26: #{fire_detection_heads.1} parent=1 // pred_check
      _
    $region27: #{fire_detection_heads.1} parent=1 // pred_check_branch
      %79 = sbr.rel (0) target = $region29
    $region28: #{fire_detection_heads.1} parent=1 // pred_region
      %81 = dma.done [#allocation5], 48000
    $region29: #{fire_detection_heads.1} parent=1 // pred_fallthru
      _
    // Predicated region
    $region30: #{fire_detection_heads.1} parent=1 // pred_check
      _
    $region31: #{fire_detection_heads.1} parent=1 // pred_check_branch
      %83 = sbr.rel (0) target = $region33
    $region32: #{fire_detection_heads.1} parent=1 // pred_region
      %85 = dma.done [#allocation5], 96
    $region33: #{fire_detection_heads.1} parent=1 // pred_fallthru
      _
    // Predicated region
    $region34: #{fire_detection_heads.1} parent=1 // pred_check
      _
    $region35: #{fire_detection_heads.1} parent=1 // pred_check_branch
      %87 = sbr.rel (0) target = $region37
    $region36: #{fire_detection_heads.1} parent=1 // pred_region
      %89 = dma.done [#allocation8], 6144
    $region37: #{fire_detection_heads.1} parent=1 // pred_fallthru
      _
    // Predicated region
    $region38: #{fire_detection_heads.1} parent=1 // pred_check
      _
    $region39: #{fire_detection_heads.1} parent=1 // pred_check_branch
      %91 = sbr.rel (0) target = $region41
    $region40: #{fire_detection_heads.1} parent=1 // pred_region
      %93 = dma.done [#allocation8], 16
    $region41: #{fire_detection_heads.1} parent=1 // pred_fallthru
      _
    %v95 = vld [vmem:[#allocation2] sm:$0xff]
    %v96 = vld [vmem:[#allocation2 + $0x8] sm:$0xff]
    %v97 = vld [vmem:[#allocation2 + $0x10] sm:$0xff]
    %v98 = vld [vmem:[#allocation2 + $0x18] sm:$0xff]
    %v99 = vld [vmem:[#allocation2 + $0x20] sm:$0xff]
    %v100 = vld [vmem:[#allocation2 + $0x28] sm:$0xff]
    %v101 = vld [vmem:[#allocation2 + $0x30] sm:$0xff]
    %v102 = vld [vmem:[#allocation2 + $0x38] sm:$0xff]
    %v103 = vld [vmem:[#allocation2 + $0x40] sm:$0xff]
    %v104 = vld [vmem:[#allocation2 + $0x48] sm:$0xff]
    %v105 = vld [vmem:[#allocation2 + $0x50] sm:$0xff]
    %v106 = vld [vmem:[#allocation2 + $0x58] sm:$0xff]
    %v107 = vld [vmem:[#allocation2 + $0x60] sm:$0xff]
    %v108 = vld [vmem:[#allocation2 + $0x68] sm:$0xff]
    %v109 = vld [vmem:[#allocation2 + $0x70] sm:$0xff]
    %v110 = vld [vmem:[#allocation2 + $0x78] sm:$0xff]
    %127 = vst [vmem:[#allocation1] ss:$4 sm:$0xff] %v95
    %s128 = scalar_lea.vmem [#allocation1], 1
    %129 = vst [vmem:[%s128] ss:$4 sm:$0xff] %v97
    %s130 = scalar_lea.vmem [#allocation1], 2
    %131 = vst [vmem:[%s130] ss:$4 sm:$0xff] %v99
    %s132 = scalar_lea.vmem [#allocation1], 3
    %133 = vst [vmem:[%s132] ss:$4 sm:$0xff] %v101
    %s134 = scalar_lea.vmem [#allocation1], 32
    %135 = vst [vmem:[%s134] ss:$4 sm:$0xff] %v96
    %s136 = scalar_lea.vmem [#allocation1], 33
    %137 = vst [vmem:[%s136] ss:$4 sm:$0xff] %v98
    %s138 = scalar_lea.vmem [#allocation1], 34
    %139 = vst [vmem:[%s138] ss:$4 sm:$0xff] %v100
    %s140 = scalar_lea.vmem [#allocation1], 35
    %141 = vst [vmem:[%s140] ss:$4 sm:$0xff] %v102
    %v142 = vld.sshfl [vmem:[#allocation1] sm:$0xff pattern:$0x73625140]
    %v143 = vld.sshfl [vmem:[#allocation1 + $0x8] sm:$0xff pattern:$0x73625140]
    %v144 = vld.sshfl [vmem:[#allocation1 + $0x10] sm:$0xff pattern:$0x73625140]
    %v145 = vld.sshfl [vmem:[#allocation1 + $0x18] sm:$0xff pattern:$0x73625140]
    %v146 = vld.sshfl [vmem:[#allocation1 + $0x20] sm:$0xff pattern:$0x73625140]
    %v147 = vld.sshfl [vmem:[#allocation1 + $0x28] sm:$0xff pattern:$0x73625140]
    %v148 = vld.sshfl [vmem:[#allocation1 + $0x30] sm:$0xff pattern:$0x73625140]
    %v149 = vld.sshfl [vmem:[#allocation1 + $0x38] sm:$0xff pattern:$0x73625140]
    %150 = vst [vmem:[#allocation1] ss:$4 sm:$0xff] %v103
    %151 = vst [vmem:[%s128] ss:$4 sm:$0xff] %v105
    %152 = vst [vmem:[%s130] ss:$4 sm:$0xff] %v107
    %153 = vst [vmem:[%s132] ss:$4 sm:$0xff] %v109
    %154 = vst [vmem:[%s134] ss:$4 sm:$0xff] %v104
    %155 = vst [vmem:[%s136] ss:$4 sm:$0xff] %v106
    %156 = vst [vmem:[%s138] ss:$4 sm:$0xff] %v108
    %157 = vst [vmem:[%s140] ss:$4 sm:$0xff] %v110
    %v158 = vld.sshfl [vmem:[#allocation1] sm:$0xff pattern:$0x73625140]
    %v159 = vld.sshfl [vmem:[#allocation1 + $0x8] sm:$0xff pattern:$0x73625140]
    %v160 = vld.sshfl [vmem:[#allocation1 + $0x10] sm:$0xff pattern:$0x73625140]
    %v161 = vld.sshfl [vmem:[#allocation1 + $0x18] sm:$0xff pattern:$0x73625140]
    %v162 = vld.sshfl [vmem:[#allocation1 + $0x20] sm:$0xff pattern:$0x73625140]
    %v163 = vld.sshfl [vmem:[#allocation1 + $0x28] sm:$0xff pattern:$0x73625140]
    %v164 = vld.sshfl [vmem:[#allocation1 + $0x30] sm:$0xff pattern:$0x73625140]
    %v165 = vld.sshfl [vmem:[#allocation1 + $0x38] sm:$0xff pattern:$0x73625140]
    %v182 = vpack.c.bf16 %v158, %v142
    %v183 = vpack.c.bf16 %v159, %v143
    %v184 = vpack.c.bf16 %v160, %v144
    %v185 = vpack.c.bf16 %v161, %v145
    %v186 = vpack.c.bf16 %v162, %v146
    %v187 = vpack.c.bf16 %v163, %v147
    %v188 = vpack.c.bf16 %v164, %v148
    %v189 = vpack.c.bf16 %v165, %v149
    %v190 = vld [vmem:[#allocation4] sm:$0xff]
    %v191 = vld [vmem:[#allocation4 + $0x8] sm:$0xff]
    %v192 = vld [vmem:[#allocation4 + $0x10] sm:$0xff]
    %v193 = vld [vmem:[#allocation4 + $0x18] sm:$0xff]
    %v194 = vld [vmem:[#allocation4 + $0x20] sm:$0xff]
    %v195 = vld [vmem:[#allocation4 + $0x28] sm:$0xff]
    %v196 = vld [vmem:[#allocation4 + $0x30] sm:$0xff]
    %v197 = vld [vmem:[#allocation4 + $0x38] sm:$0xff]
    %v198 = vld [vmem:[#allocation4 + $0x40] sm:$0xff]
    %v199 = vld [vmem:[#allocation4 + $0x48] sm:$0xff]
    %v200 = vld [vmem:[#allocation4 + $0x50] sm:$0xff]
    %v201 = vld [vmem:[#allocation4 + $0x58] sm:$0xff]
    %v202 = vld [vmem:[#allocation4 + $0x60] sm:$0xff]
    %v203 = vld [vmem:[#allocation4 + $0x68] sm:$0xff]
    %v204 = vld [vmem:[#allocation4 + $0x70] sm:$0xff]
    %v205 = vld [vmem:[#allocation4 + $0x78] sm:$0xff]
    %v206 = vld [vmem:[#allocation4 + $0x80] sm:$0xff]
    %v207 = vld [vmem:[#allocation4 + $0x88] sm:$0xff]
    %v208 = vld [vmem:[#allocation4 + $0x90] sm:$0xff]
    %v209 = vld [vmem:[#allocation4 + $0x98] sm:$0xff]
    %v210 = vld [vmem:[#allocation4 + $0xa0] sm:$0xff]
    %v211 = vld [vmem:[#allocation4 + $0xa8] sm:$0xff]
    %v212 = vld [vmem:[#allocation4 + $0xb0] sm:$0xff]
    %v213 = vld [vmem:[#allocation4 + $0xb8] sm:$0xff]
    %v214 = vld [vmem:[#allocation4 + $0xc0] sm:$0xff]
    %v215 = vld [vmem:[#allocation4 + $0xc8] sm:$0xff]
    %v216 = vld [vmem:[#allocation4 + $0xd0] sm:$0xff]
    %v217 = vld [vmem:[#allocation4 + $0xd8] sm:$0xff]
    %v218 = vld [vmem:[#allocation4 + $0xe0] sm:$0xff]
    %v219 = vld [vmem:[#allocation4 + $0xe8] sm:$0xff]
    %v220 = vld [vmem:[#allocation4 + $0xf0] sm:$0xff]
    %v221 = vld [vmem:[#allocation4 + $0xf8] sm:$0xff]
    %v222 = vld [vmem:[#allocation4 + $0x100] sm:$0xff]
    %v223 = vld [vmem:[#allocation4 + $0x108] sm:$0xff]
    %v224 = vld [vmem:[#allocation4 + $0x110] sm:$0xff]
    %v225 = vld [vmem:[#allocation4 + $0x118] sm:$0xff]
    %v226 = vld [vmem:[#allocation4 + $0x120] sm:$0xff]
    %v227 = vld [vmem:[#allocation4 + $0x128] sm:$0xff]
    %v228 = vld [vmem:[#allocation4 + $0x130] sm:$0xff]
    %v229 = vld [vmem:[#allocation4 + $0x138] sm:$0xff]
    %v230 = vld [vmem:[#allocation4 + $0x140] sm:$0xff]
    %v231 = vld [vmem:[#allocation4 + $0x148] sm:$0xff]
    %v232 = vld [vmem:[#allocation4 + $0x150] sm:$0xff]
    %v233 = vld [vmem:[#allocation4 + $0x158] sm:$0xff]
    %v234 = vld [vmem:[#allocation4 + $0x160] sm:$0xff]
    %v235 = vld [vmem:[#allocation4 + $0x168] sm:$0xff]
    %v236 = vld [vmem:[#allocation4 + $0x170] sm:$0xff]
    %v237 = vld [vmem:[#allocation4 + $0x178] sm:$0xff]
    %v238 = vld [vmem:[#allocation4 + $0x180] sm:$0xff]
    %v239 = vld [vmem:[#allocation4 + $0x188] sm:$0xff]
    %v240 = vld [vmem:[#allocation4 + $0x190] sm:$0xff]
    %v241 = vld [vmem:[#allocation4 + $0x198] sm:$0xff]
    %v242 = vld [vmem:[#allocation4 + $0x1a0] sm:$0xff]
    %v243 = vld [vmem:[#allocation4 + $0x1a8] sm:$0xff]
    %v244 = vld [vmem:[#allocation4 + $0x1b0] sm:$0xff]
    %v245 = vld [vmem:[#allocation4 + $0x1b8] sm:$0xff]
    %v246 = vld [vmem:[#allocation4 + $0x1c0] sm:$0xff]
    %v247 = vld [vmem:[#allocation4 + $0x1c8] sm:$0xff]
    %v248 = vld [vmem:[#allocation4 + $0x1d0] sm:$0xff]
    %v249 = vld [vmem:[#allocation4 + $0x1d8] sm:$0xff]
    %v250 = vld [vmem:[#allocation4 + $0x1e0] sm:$0xff]
    %v251 = vld [vmem:[#allocation4 + $0x1e8] sm:$0xff]
    %v252 = vld [vmem:[#allocation4 + $0x1f0] sm:$0xff]
    %v253 = vld [vmem:[#allocation4 + $0x1f8] sm:$0xff]
    %v254 = vld [vmem:[#allocation4 + $0x200] sm:$0xff]
    %v255 = vld [vmem:[#allocation4 + $0x208] sm:$0xff]
    %v256 = vld [vmem:[#allocation4 + $0x210] sm:$0xff]
    %v257 = vld [vmem:[#allocation4 + $0x218] sm:$0xff]
    %v258 = vld [vmem:[#allocation4 + $0x220] sm:$0xff]
    %v259 = vld [vmem:[#allocation4 + $0x228] sm:$0xff]
    %v260 = vld [vmem:[#allocation4 + $0x230] sm:$0xff]
    %v261 = vld [vmem:[#allocation4 + $0x238] sm:$0xff]
    %v262 = vld [vmem:[#allocation4 + $0x240] sm:$0xff]
    %v263 = vld [vmem:[#allocation4 + $0x248] sm:$0xff]
    %v264 = vld [vmem:[#allocation4 + $0x250] sm:$0xff]
    %v265 = vld [vmem:[#allocation4 + $0x258] sm:$0xff]
    %v266 = vld [vmem:[#allocation4 + $0x260] sm:$0xff]
    %v267 = vld [vmem:[#allocation4 + $0x268] sm:$0xff]
    %v268 = vld [vmem:[#allocation4 + $0x270] sm:$0xff]
    %v269 = vld [vmem:[#allocation4 + $0x278] sm:$0xff]
    %v270 = vld [vmem:[#allocation4 + $0x280] sm:$0xff]
    %v271 = vld [vmem:[#allocation4 + $0x288] sm:$0xff]
    %v272 = vld [vmem:[#allocation4 + $0x290] sm:$0xff]
    %v273 = vld [vmem:[#allocation4 + $0x298] sm:$0xff]
    %v274 = vld [vmem:[#allocation4 + $0x2a0] sm:$0xff]
    %v275 = vld [vmem:[#allocation4 + $0x2a8] sm:$0xff]
    %v276 = vld [vmem:[#allocation4 + $0x2b0] sm:$0xff]
    %v277 = vld [vmem:[#allocation4 + $0x2b8] sm:$0xff]
    %v278 = vld [vmem:[#allocation4 + $0x2c0] sm:$0xff]
    %v279 = vld [vmem:[#allocation4 + $0x2c8] sm:$0xff]
    %v280 = vld [vmem:[#allocation4 + $0x2d0] sm:$0xff]
    %v281 = vld [vmem:[#allocation4 + $0x2d8] sm:$0xff]
    %v282 = vld [vmem:[#allocation4 + $0x2e0] sm:$0xff]
    %v283 = vld [vmem:[#allocation4 + $0x2e8] sm:$0xff]
    %v284 = vld [vmem:[#allocation4 + $0x2f0] sm:$0xff]
    %v285 = vld [vmem:[#allocation4 + $0x2f8] sm:$0xff]
    %v286 = vld [vmem:[#allocation4 + $0x300] sm:$0xff]
    %v287 = vld [vmem:[#allocation4 + $0x308] sm:$0xff]
    %v288 = vld [vmem:[#allocation4 + $0x310] sm:$0xff]
    %v289 = vld [vmem:[#allocation4 + $0x318] sm:$0xff]
    %v290 = vld [vmem:[#allocation4 + $0x320] sm:$0xff]
    %v291 = vld [vmem:[#allocation4 + $0x328] sm:$0xff]
    %v292 = vld [vmem:[#allocation4 + $0x330] sm:$0xff]
    %v293 = vld [vmem:[#allocation4 + $0x338] sm:$0xff]
    %v294 = vld [vmem:[#allocation4 + $0x340] sm:$0xff]
    %v295 = vld [vmem:[#allocation4 + $0x348] sm:$0xff]
    %v296 = vld [vmem:[#allocation4 + $0x350] sm:$0xff]
    %v297 = vld [vmem:[#allocation4 + $0x358] sm:$0xff]
    %v298 = vld [vmem:[#allocation4 + $0x360] sm:$0xff]
    %v299 = vld [vmem:[#allocation4 + $0x368] sm:$0xff]
    %v300 = vld [vmem:[#allocation4 + $0x370] sm:$0xff]
    %v301 = vld [vmem:[#allocation4 + $0x378] sm:$0xff]
    %v302 = vld [vmem:[#allocation4 + $0x380] sm:$0xff]
    %v303 = vld [vmem:[#allocation4 + $0x388] sm:$0xff]
    %v304 = vld [vmem:[#allocation4 + $0x390] sm:$0xff]
    %v305 = vld [vmem:[#allocation4 + $0x398] sm:$0xff]
    %v306 = vld [vmem:[#allocation4 + $0x3a0] sm:$0xff]
    %v307 = vld [vmem:[#allocation4 + $0x3a8] sm:$0xff]
    %v308 = vld [vmem:[#allocation4 + $0x3b0] sm:$0xff]
    %v309 = vld [vmem:[#allocation4 + $0x3b8] sm:$0xff]
    %v310 = vld [vmem:[#allocation4 + $0x3c0] sm:$0xff]
    %v311 = vld [vmem:[#allocation4 + $0x3c8] sm:$0xff]
    %v312 = vld [vmem:[#allocation4 + $0x3d0] sm:$0xff]
    %v313 = vld [vmem:[#allocation4 + $0x3d8] sm:$0xff]
    %v314 = vld [vmem:[#allocation4 + $0x3e0] sm:$0xff]
    %v315 = vld [vmem:[#allocation4 + $0x3e8] sm:$0xff]
    %v316 = vld [vmem:[#allocation4 + $0x3f0] sm:$0xff]
    %v317 = vld [vmem:[#allocation4 + $0x3f8] sm:$0xff]
    %v318 = vld [vmem:[#allocation4 + $0x400] sm:$0xff]
    %v319 = vld [vmem:[#allocation4 + $0x408] sm:$0xff]
    %v320 = vld [vmem:[#allocation4 + $0x410] sm:$0xff]
    %v321 = vld [vmem:[#allocation4 + $0x418] sm:$0xff]
    %v322 = vld [vmem:[#allocation4 + $0x420] sm:$0xff]
    %v323 = vld [vmem:[#allocation4 + $0x428] sm:$0xff]
    %v324 = vld [vmem:[#allocation4 + $0x430] sm:$0xff]
    %v325 = vld [vmem:[#allocation4 + $0x438] sm:$0xff]
    %v326 = vld [vmem:[#allocation4 + $0x440] sm:$0xff]
    %v327 = vld [vmem:[#allocation4 + $0x448] sm:$0xff]
    %v328 = vld [vmem:[#allocation4 + $0x450] sm:$0xff]
    %v329 = vld [vmem:[#allocation4 + $0x458] sm:$0xff]
    %v330 = vld [vmem:[#allocation4 + $0x460] sm:$0xff]
    %v331 = vld [vmem:[#allocation4 + $0x468] sm:$0xff]
    %v332 = vld [vmem:[#allocation4 + $0x470] sm:$0xff]
    %v333 = vld [vmem:[#allocation4 + $0x478] sm:$0xff]
    %v334 = vld [vmem:[#allocation4 + $0x480] sm:$0xff]
    %v335 = vld [vmem:[#allocation4 + $0x488] sm:$0xff]
    %v336 = vld [vmem:[#allocation4 + $0x490] sm:$0xff]
    %v337 = vld [vmem:[#allocation4 + $0x498] sm:$0xff]
    %v338 = vld [vmem:[#allocation4 + $0x4a0] sm:$0xff]
    %v339 = vld [vmem:[#allocation4 + $0x4a8] sm:$0xff]
    %v340 = vld [vmem:[#allocation4 + $0x4b0] sm:$0xff]
    %v341 = vld [vmem:[#allocation4 + $0x4b8] sm:$0xff]
    %v342 = vld [vmem:[#allocation4 + $0x4c0] sm:$0xff]
    %v343 = vld [vmem:[#allocation4 + $0x4c8] sm:$0xff]
    %v344 = vld [vmem:[#allocation4 + $0x4d0] sm:$0xff]
    %v345 = vld [vmem:[#allocation4 + $0x4d8] sm:$0xff]
    %v346 = vld [vmem:[#allocation4 + $0x4e0] sm:$0xff]
    %v347 = vld [vmem:[#allocation4 + $0x4e8] sm:$0xff]
    %v348 = vld [vmem:[#allocation4 + $0x4f0] sm:$0xff]
    %v349 = vld [vmem:[#allocation4 + $0x4f8] sm:$0xff]
    %v350 = vld [vmem:[#allocation4 + $0x500] sm:$0xff]
    %v351 = vld [vmem:[#allocation4 + $0x508] sm:$0xff]
    %v352 = vld [vmem:[#allocation4 + $0x510] sm:$0xff]
    %v353 = vld [vmem:[#allocation4 + $0x518] sm:$0xff]
    %v354 = vld [vmem:[#allocation4 + $0x520] sm:$0xff]
    %v355 = vld [vmem:[#allocation4 + $0x528] sm:$0xff]
    %v356 = vld [vmem:[#allocation4 + $0x530] sm:$0xff]
    %v357 = vld [vmem:[#allocation4 + $0x538] sm:$0xff]
    %v358 = vld [vmem:[#allocation4 + $0x540] sm:$0xff]
    %v359 = vld [vmem:[#allocation4 + $0x548] sm:$0xff]
    %v360 = vld [vmem:[#allocation4 + $0x550] sm:$0xff]
    %v361 = vld [vmem:[#allocation4 + $0x558] sm:$0xff]
    %v362 = vld [vmem:[#allocation4 + $0x560] sm:$0xff]
    %v363 = vld [vmem:[#allocation4 + $0x568] sm:$0xff]
    %v364 = vld [vmem:[#allocation4 + $0x570] sm:$0xff]
    %v365 = vld [vmem:[#allocation4 + $0x578] sm:$0xff]
    %v366 = vld [vmem:[#allocation4 + $0x580] sm:$0xff]
    %v367 = vld [vmem:[#allocation4 + $0x588] sm:$0xff]
    %v368 = vld [vmem:[#allocation4 + $0x590] sm:$0xff]
    %v369 = vld [vmem:[#allocation4 + $0x598] sm:$0xff]
    %v370 = vld [vmem:[#allocation4 + $0x5a0] sm:$0xff]
    %v371 = vld [vmem:[#allocation4 + $0x5a8] sm:$0xff]
    %v372 = vld [vmem:[#allocation4 + $0x5b0] sm:$0xff]
    %v373 = vld [vmem:[#allocation4 + $0x5b8] sm:$0xff]
    %v374 = vld [vmem:[#allocation4 + $0x5c0] sm:$0xff]
    %v375 = vld [vmem:[#allocation4 + $0x5c8] sm:$0xff]
    %v376 = vld [vmem:[#allocation4 + $0x5d0] sm:$0xff]
    %v377 = vld [vmem:[#allocation4 + $0x5d8] sm:$0xff]
    %v378 = vld [vmem:[#allocation4 + $0x5e0] sm:$0xff]
    %v379 = vld [vmem:[#allocation4 + $0x5e8] sm:$0xff]
    %v380 = vld [vmem:[#allocation4 + $0x5f0] sm:$0xff]
    %v381 = vld [vmem:[#allocation4 + $0x5f8] sm:$0xff]
    %v382 = vld [vmem:[#allocation4 + $0x600] sm:$0xff]
    %v383 = vld [vmem:[#allocation4 + $0x608] sm:$0xff]
    %v384 = vld [vmem:[#allocation4 + $0x610] sm:$0xff]
    %v385 = vld [vmem:[#allocation4 + $0x618] sm:$0xff]
    %v386 = vld [vmem:[#allocation4 + $0x620] sm:$0xff]
    %v387 = vld [vmem:[#allocation4 + $0x628] sm:$0xff]
    %v388 = vld [vmem:[#allocation4 + $0x630] sm:$0xff]
    %v389 = vld [vmem:[#allocation4 + $0x638] sm:$0xff]
    %v390 = vld [vmem:[#allocation4 + $0x640] sm:$0xff]
    %v391 = vld [vmem:[#allocation4 + $0x648] sm:$0xff]
    %v392 = vld [vmem:[#allocation4 + $0x650] sm:$0xff]
    %v393 = vld [vmem:[#allocation4 + $0x658] sm:$0xff]
    %v394 = vld [vmem:[#allocation4 + $0x660] sm:$0xff]
    %v395 = vld [vmem:[#allocation4 + $0x668] sm:$0xff]
    %v396 = vld [vmem:[#allocation4 + $0x670] sm:$0xff]
    %v397 = vld [vmem:[#allocation4 + $0x678] sm:$0xff]
    %v398 = vld [vmem:[#allocation4 + $0x680] sm:$0xff]
    %v399 = vld [vmem:[#allocation4 + $0x688] sm:$0xff]
    %v400 = vld [vmem:[#allocation4 + $0x690] sm:$0xff]
    %v401 = vld [vmem:[#allocation4 + $0x698] sm:$0xff]
    %v402 = vld [vmem:[#allocation4 + $0x6a0] sm:$0xff]
    %v403 = vld [vmem:[#allocation4 + $0x6a8] sm:$0xff]
    %v404 = vld [vmem:[#allocation4 + $0x6b0] sm:$0xff]
    %v405 = vld [vmem:[#allocation4 + $0x6b8] sm:$0xff]
    %v406 = vld [vmem:[#allocation4 + $0x6c0] sm:$0xff]
    %v407 = vld [vmem:[#allocation4 + $0x6c8] sm:$0xff]
    %v408 = vld [vmem:[#allocation4 + $0x6d0] sm:$0xff]
    %v409 = vld [vmem:[#allocation4 + $0x6d8] sm:$0xff]
    %v410 = vld [vmem:[#allocation4 + $0x6e0] sm:$0xff]
    %v411 = vld [vmem:[#allocation4 + $0x6e8] sm:$0xff]
    %v412 = vld [vmem:[#allocation4 + $0x6f0] sm:$0xff]
    %v413 = vld [vmem:[#allocation4 + $0x6f8] sm:$0xff]
    %v414 = vld [vmem:[#allocation4 + $0x700] sm:$0xff]
    %v415 = vld [vmem:[#allocation4 + $0x708] sm:$0xff]
    %v416 = vld [vmem:[#allocation4 + $0x710] sm:$0xff]
    %v417 = vld [vmem:[#allocation4 + $0x718] sm:$0xff]
    %v418 = vld [vmem:[#allocation4 + $0x720] sm:$0xff]
    %v419 = vld [vmem:[#allocation4 + $0x728] sm:$0xff]
    %v420 = vld [vmem:[#allocation4 + $0x730] sm:$0xff]
    %v421 = vld [vmem:[#allocation4 + $0x738] sm:$0xff]
    %v422 = vld [vmem:[#allocation4 + $0x740] sm:$0xff]
    %v423 = vld [vmem:[#allocation4 + $0x748] sm:$0xff]
    %v424 = vld [vmem:[#allocation4 + $0x750] sm:$0xff]
    %v425 = vld [vmem:[#allocation4 + $0x758] sm:$0xff]
    %v426 = vld [vmem:[#allocation4 + $0x760] sm:$0xff]
    %v427 = vld [vmem:[#allocation4 + $0x768] sm:$0xff]
    %v428 = vld [vmem:[#allocation4 + $0x770] sm:$0xff]
    %v429 = vld [vmem:[#allocation4 + $0x778] sm:$0xff]
    %v430 = vld [vmem:[#allocation4 + $0x780] sm:$0xff]
    %v431 = vld [vmem:[#allocation4 + $0x788] sm:$0xff]
    %v432 = vld [vmem:[#allocation4 + $0x790] sm:$0xff]
    %v433 = vld [vmem:[#allocation4 + $0x798] sm:$0xff]
    %v434 = vld [vmem:[#allocation4 + $0x7a0] sm:$0xff]
    %v435 = vld [vmem:[#allocation4 + $0x7a8] sm:$0xff]
    %v436 = vld [vmem:[#allocation4 + $0x7b0] sm:$0xff]
    %v437 = vld [vmem:[#allocation4 + $0x7b8] sm:$0xff]
    %v438 = vld [vmem:[#allocation4 + $0x7c0] sm:$0xff]
    %v439 = vld [vmem:[#allocation4 + $0x7c8] sm:$0xff]
    %v440 = vld [vmem:[#allocation4 + $0x7d0] sm:$0xff]
    %v441 = vld [vmem:[#allocation4 + $0x7d8] sm:$0xff]
    %v442 = vld [vmem:[#allocation4 + $0x7e0] sm:$0xff]
    %v443 = vld [vmem:[#allocation4 + $0x7e8] sm:$0xff]
    %v444 = vld [vmem:[#allocation4 + $0x7f0] sm:$0xff]
    %v445 = vld [vmem:[#allocation4 + $0x7f8] sm:$0xff]
    %v446 = vld [vmem:[#allocation4 + $0x800] sm:$0xff]
    %v447 = vld [vmem:[#allocation4 + $0x808] sm:$0xff]
    %v448 = vld [vmem:[#allocation4 + $0x810] sm:$0xff]
    %v449 = vld [vmem:[#allocation4 + $0x818] sm:$0xff]
    %v450 = vld [vmem:[#allocation4 + $0x820] sm:$0xff]
    %v451 = vld [vmem:[#allocation4 + $0x828] sm:$0xff]
    %v452 = vld [vmem:[#allocation4 + $0x830] sm:$0xff]
    %v453 = vld [vmem:[#allocation4 + $0x838] sm:$0xff]
    %v454 = vld [vmem:[#allocation4 + $0x840] sm:$0xff]
    %v455 = vld [vmem:[#allocation4 + $0x848] sm:$0xff]
    %v456 = vld [vmem:[#allocation4 + $0x850] sm:$0xff]
    %v457 = vld [vmem:[#allocation4 + $0x858] sm:$0xff]
    %v458 = vld [vmem:[#allocation4 + $0x860] sm:$0xff]
    %v459 = vld [vmem:[#allocation4 + $0x868] sm:$0xff]
    %v460 = vld [vmem:[#allocation4 + $0x870] sm:$0xff]
    %v461 = vld [vmem:[#allocation4 + $0x878] sm:$0xff]
    %v462 = vld [vmem:[#allocation4 + $0x880] sm:$0xff]
    %v463 = vld [vmem:[#allocation4 + $0x888] sm:$0xff]
    %v464 = vld [vmem:[#allocation4 + $0x890] sm:$0xff]
    %v465 = vld [vmem:[#allocation4 + $0x898] sm:$0xff]
    %v466 = vld [vmem:[#allocation4 + $0x8a0] sm:$0xff]
    %v467 = vld [vmem:[#allocation4 + $0x8a8] sm:$0xff]
    %v468 = vld [vmem:[#allocation4 + $0x8b0] sm:$0xff]
    %v469 = vld [vmem:[#allocation4 + $0x8b8] sm:$0xff]
    %v470 = vld [vmem:[#allocation4 + $0x8c0] sm:$0xff]
    %v471 = vld [vmem:[#allocation4 + $0x8c8] sm:$0xff]
    %v472 = vld [vmem:[#allocation4 + $0x8d0] sm:$0xff]
    %v473 = vld [vmem:[#allocation4 + $0x8d8] sm:$0xff]
    %v474 = vld [vmem:[#allocation4 + $0x8e0] sm:$0xff]
    %v475 = vld [vmem:[#allocation4 + $0x8e8] sm:$0xff]
    %v476 = vld [vmem:[#allocation4 + $0x8f0] sm:$0xff]
    %v477 = vld [vmem:[#allocation4 + $0x8f8] sm:$0xff]
    %v478 = vld [vmem:[#allocation4 + $0x900] sm:$0xff]
    %v479 = vld [vmem:[#allocation4 + $0x908] sm:$0xff]
    %v480 = vld [vmem:[#allocation4 + $0x910] sm:$0xff]
    %v481 = vld [vmem:[#allocation4 + $0x918] sm:$0xff]
    %v482 = vld [vmem:[#allocation4 + $0x920] sm:$0xff]
    %v483 = vld [vmem:[#allocation4 + $0x928] sm:$0xff]
    %v484 = vld [vmem:[#allocation4 + $0x930] sm:$0xff]
    %v485 = vld [vmem:[#allocation4 + $0x938] sm:$0xff]
    %v486 = vld [vmem:[#allocation4 + $0x940] sm:$0xff]
    %v487 = vld [vmem:[#allocation4 + $0x948] sm:$0xff]
    %v488 = vld [vmem:[#allocation4 + $0x950] sm:$0xff]
    %v489 = vld [vmem:[#allocation4 + $0x958] sm:$0xff]
    %v490 = vld [vmem:[#allocation4 + $0x960] sm:$0xff]
    %v491 = vld [vmem:[#allocation4 + $0x968] sm:$0xff]
    %v492 = vld [vmem:[#allocation4 + $0x970] sm:$0xff]
    %v493 = vld [vmem:[#allocation4 + $0x978] sm:$0xff]
    %v494 = vld [vmem:[#allocation4 + $0x980] sm:$0xff]
    %v495 = vld [vmem:[#allocation4 + $0x988] sm:$0xff]
    %v496 = vld [vmem:[#allocation4 + $0x990] sm:$0xff]
    %v497 = vld [vmem:[#allocation4 + $0x998] sm:$0xff]
    %v498 = vld [vmem:[#allocation4 + $0x9a0] sm:$0xff]
    %v499 = vld [vmem:[#allocation4 + $0x9a8] sm:$0xff]
    %v500 = vld [vmem:[#allocation4 + $0x9b0] sm:$0xff]
    %v501 = vld [vmem:[#allocation4 + $0x9b8] sm:$0xff]
    %v502 = vld [vmem:[#allocation4 + $0x9c0] sm:$0xff]
    %v503 = vld [vmem:[#allocation4 + $0x9c8] sm:$0xff]
    %v504 = vld [vmem:[#allocation4 + $0x9d0] sm:$0xff]
    %v505 = vld [vmem:[#allocation4 + $0x9d8] sm:$0xff]
    %v506 = vld [vmem:[#allocation4 + $0x9e0] sm:$0xff]
    %v507 = vld [vmem:[#allocation4 + $0x9e8] sm:$0xff]
    %v508 = vld [vmem:[#allocation4 + $0x9f0] sm:$0xff]
    %v509 = vld [vmem:[#allocation4 + $0x9f8] sm:$0xff]
    %v510 = vld [vmem:[#allocation4 + $0xa00] sm:$0xff]
    %v511 = vld [vmem:[#allocation4 + $0xa08] sm:$0xff]
    %v512 = vld [vmem:[#allocation4 + $0xa10] sm:$0xff]
    %v513 = vld [vmem:[#allocation4 + $0xa18] sm:$0xff]
    %v514 = vld [vmem:[#allocation4 + $0xa20] sm:$0xff]
    %v515 = vld [vmem:[#allocation4 + $0xa28] sm:$0xff]
    %v516 = vld [vmem:[#allocation4 + $0xa30] sm:$0xff]
    %v517 = vld [vmem:[#allocation4 + $0xa38] sm:$0xff]
    %v518 = vld [vmem:[#allocation4 + $0xa40] sm:$0xff]
    %v519 = vld [vmem:[#allocation4 + $0xa48] sm:$0xff]
    %v520 = vld [vmem:[#allocation4 + $0xa50] sm:$0xff]
    %v521 = vld [vmem:[#allocation4 + $0xa58] sm:$0xff]
    %v522 = vld [vmem:[#allocation4 + $0xa60] sm:$0xff]
    %v523 = vld [vmem:[#allocation4 + $0xa68] sm:$0xff]
    %v524 = vld [vmem:[#allocation4 + $0xa70] sm:$0xff]
    %v525 = vld [vmem:[#allocation4 + $0xa78] sm:$0xff]
    %v526 = vld [vmem:[#allocation4 + $0xa80] sm:$0xff]
    %v527 = vld [vmem:[#allocation4 + $0xa88] sm:$0xff]
    %v528 = vld [vmem:[#allocation4 + $0xa90] sm:$0xff]
    %v529 = vld [vmem:[#allocation4 + $0xa98] sm:$0xff]
    %v530 = vld [vmem:[#allocation4 + $0xaa0] sm:$0xff]
    %v531 = vld [vmem:[#allocation4 + $0xaa8] sm:$0xff]
    %v532 = vld [vmem:[#allocation4 + $0xab0] sm:$0xff]
    %v533 = vld [vmem:[#allocation4 + $0xab8] sm:$0xff]
    %v534 = vld [vmem:[#allocation4 + $0xac0] sm:$0xff]
    %v535 = vld [vmem:[#allocation4 + $0xac8] sm:$0xff]
    %v536 = vld [vmem:[#allocation4 + $0xad0] sm:$0xff]
    %v537 = vld [vmem:[#allocation4 + $0xad8] sm:$0xff]
    %v538 = vld [vmem:[#allocation4 + $0xae0] sm:$0xff]
    %v539 = vld [vmem:[#allocation4 + $0xae8] sm:$0xff]
    %v540 = vld [vmem:[#allocation4 + $0xaf0] sm:$0xff]
    %v541 = vld [vmem:[#allocation4 + $0xaf8] sm:$0xff]
    %v542 = vld [vmem:[#allocation4 + $0xb00] sm:$0xff]
    %v543 = vld [vmem:[#allocation4 + $0xb08] sm:$0xff]
    %v544 = vld [vmem:[#allocation4 + $0xb10] sm:$0xff]
    %v545 = vld [vmem:[#allocation4 + $0xb18] sm:$0xff]
    %v546 = vld [vmem:[#allocation4 + $0xb20] sm:$0xff]
    %v547 = vld [vmem:[#allocation4 + $0xb28] sm:$0xff]
    %v548 = vld [vmem:[#allocation4 + $0xb30] sm:$0xff]
    %v549 = vld [vmem:[#allocation4 + $0xb38] sm:$0xff]
    %v550 = vld [vmem:[#allocation4 + $0xb40] sm:$0xff]
    %v551 = vld [vmem:[#allocation4 + $0xb48] sm:$0xff]
    %v552 = vld [vmem:[#allocation4 + $0xb50] sm:$0xff]
    %v553 = vld [vmem:[#allocation4 + $0xb58] sm:$0xff]
    %v554 = vld [vmem:[#allocation4 + $0xb60] sm:$0xff]
    %v555 = vld [vmem:[#allocation4 + $0xb68] sm:$0xff]
    %v556 = vld [vmem:[#allocation4 + $0xb70] sm:$0xff]
    %v557 = vld [vmem:[#allocation4 + $0xb78] sm:$0xff]
    %v558 = vld [vmem:[#allocation4 + $0xb80] sm:$0xff]
    %v559 = vld [vmem:[#allocation4 + $0xb88] sm:$0xff]
    %v560 = vld [vmem:[#allocation4 + $0xb90] sm:$0xff]
    %v561 = vld [vmem:[#allocation4 + $0xb98] sm:$0xff]
    %v562 = vld [vmem:[#allocation4 + $0xba0] sm:$0xff]
    %v563 = vld [vmem:[#allocation4 + $0xba8] sm:$0xff]
    %v564 = vld [vmem:[#allocation4 + $0xbb0] sm:$0xff]
    %v565 = vld [vmem:[#allocation6] sm:$0x3f]
    %v567 = vperm.slane %v565, 0
    %v568 = vperm.slane %v565, 1
    %v569 = vperm.slane %v565, 2
    %v570 = vperm.slane %v565, 3
    %v571 = vperm.slane %v565, 4
    %v572 = vperm.slane %v565, 5
    %v954 = vunpack.c.l.b16 %v190
    %v955 = vunpack.c.h.b16 %v190
    %v956 = vunpack.c.l.b16 %v191
    %v957 = vunpack.c.h.b16 %v191
    %v958 = vunpack.c.l.b16 %v192
    %v959 = vunpack.c.h.b16 %v192
    %v960 = vunpack.c.l.b16 %v193
    %v961 = vunpack.c.h.b16 %v193
    %v962 = vunpack.c.l.b16 %v194
    %v963 = vunpack.c.h.b16 %v194
    %v964 = vunpack.c.l.b16 %v195
    %v965 = vunpack.c.h.b16 %v195
    %v966 = vunpack.c.l.b16 %v196
    %v967 = vunpack.c.h.b16 %v196
    %v968 = vunpack.c.l.b16 %v197
    %v969 = vunpack.c.h.b16 %v197
    %v970 = vunpack.c.l.b16 %v198
    %v971 = vunpack.c.h.b16 %v198
    %v972 = vunpack.c.l.b16 %v199
    %v973 = vunpack.c.h.b16 %v199
    %v974 = vunpack.c.l.b16 %v200
    %v975 = vunpack.c.h.b16 %v200
    %v976 = vunpack.c.l.b16 %v201
    %v977 = vunpack.c.h.b16 %v201
    %v978 = vunpack.c.l.b16 %v202
    %v979 = vunpack.c.h.b16 %v202
    %v980 = vunpack.c.l.b16 %v203
    %v981 = vunpack.c.h.b16 %v203
    %v982 = vunpack.c.l.b16 %v204
    %v983 = vunpack.c.h.b16 %v204
    %v984 = vunpack.c.l.b16 %v205
    %v985 = vunpack.c.h.b16 %v205
    %v986 = vunpack.c.l.b16 %v206
    %v987 = vunpack.c.h.b16 %v206
    %v988 = vunpack.c.l.b16 %v207
    %v989 = vunpack.c.h.b16 %v207
    %v990 = vunpack.c.l.b16 %v208
    %v991 = vunpack.c.h.b16 %v208
    %v992 = vunpack.c.l.b16 %v209
    %v993 = vunpack.c.h.b16 %v209
    %v994 = vunpack.c.l.b16 %v210
    %v995 = vunpack.c.h.b16 %v210
    %v996 = vunpack.c.l.b16 %v211
    %v997 = vunpack.c.h.b16 %v211
    %v998 = vunpack.c.l.b16 %v212
    %v999 = vunpack.c.h.b16 %v212
    %v1000 = vunpack.c.l.b16 %v213
    %v1001 = vunpack.c.h.b16 %v213
    %v1002 = vunpack.c.l.b16 %v214
    %v1003 = vunpack.c.h.b16 %v214
    %v1004 = vunpack.c.l.b16 %v215
    %v1005 = vunpack.c.h.b16 %v215
    %v1006 = vunpack.c.l.b16 %v216
    %v1007 = vunpack.c.h.b16 %v216
    %v1008 = vunpack.c.l.b16 %v217
    %v1009 = vunpack.c.h.b16 %v217
    %v1010 = vunpack.c.l.b16 %v218
    %v1011 = vunpack.c.h.b16 %v218
    %v1012 = vunpack.c.l.b16 %v219
    %v1013 = vunpack.c.h.b16 %v219
    %v1014 = vunpack.c.l.b16 %v220
    %v1015 = vunpack.c.h.b16 %v220
    %v1016 = vunpack.c.l.b16 %v221
    %v1017 = vunpack.c.h.b16 %v221
    %v1018 = vunpack.c.l.b16 %v222
    %v1019 = vunpack.c.h.b16 %v222
    %v1020 = vunpack.c.l.b16 %v223
    %v1021 = vunpack.c.h.b16 %v223
    %v1022 = vunpack.c.l.b16 %v224
    %v1023 = vunpack.c.h.b16 %v224
    %v1024 = vunpack.c.l.b16 %v225
    %v1025 = vunpack.c.h.b16 %v225
    %v1026 = vunpack.c.l.b16 %v226
    %v1027 = vunpack.c.h.b16 %v226
    %v1028 = vunpack.c.l.b16 %v227
    %v1029 = vunpack.c.h.b16 %v227
    %v1030 = vunpack.c.l.b16 %v228
    %v1031 = vunpack.c.h.b16 %v228
    %v1032 = vunpack.c.l.b16 %v229
    %v1033 = vunpack.c.h.b16 %v229
    %v1034 = vunpack.c.l.b16 %v230
    %v1035 = vunpack.c.h.b16 %v230
    %v1036 = vunpack.c.l.b16 %v231
    %v1037 = vunpack.c.h.b16 %v231
    %v1038 = vunpack.c.l.b16 %v232
    %v1039 = vunpack.c.h.b16 %v232
    %v1040 = vunpack.c.l.b16 %v233
    %v1041 = vunpack.c.h.b16 %v233
    %v1042 = vunpack.c.l.b16 %v234
    %v1043 = vunpack.c.h.b16 %v234
    %v1044 = vunpack.c.l.b16 %v235
    %v1045 = vunpack.c.h.b16 %v235
    %v1046 = vunpack.c.l.b16 %v236
    %v1047 = vunpack.c.h.b16 %v236
    %v1048 = vunpack.c.l.b16 %v237
    %v1049 = vunpack.c.h.b16 %v237
    %v1050 = vunpack.c.l.b16 %v238
    %v1051 = vunpack.c.h.b16 %v238
    %v1052 = vunpack.c.l.b16 %v239
    %v1053 = vunpack.c.h.b16 %v239
    %v1054 = vunpack.c.l.b16 %v240
    %v1055 = vunpack.c.h.b16 %v240
    %v1056 = vunpack.c.l.b16 %v241
    %v1057 = vunpack.c.h.b16 %v241
    %v1058 = vunpack.c.l.b16 %v242
    %v1059 = vunpack.c.h.b16 %v242
    %v1060 = vunpack.c.l.b16 %v243
    %v1061 = vunpack.c.h.b16 %v243
    %v1062 = vunpack.c.l.b16 %v244
    %v1063 = vunpack.c.h.b16 %v244
    %v1064 = vunpack.c.l.b16 %v245
    %v1065 = vunpack.c.h.b16 %v245
    %v1066 = vunpack.c.l.b16 %v246
    %v1067 = vunpack.c.h.b16 %v246
    %v1068 = vunpack.c.l.b16 %v247
    %v1069 = vunpack.c.h.b16 %v247
    %v1070 = vunpack.c.l.b16 %v248
    %v1071 = vunpack.c.h.b16 %v248
    %v1072 = vunpack.c.l.b16 %v249
    %v1073 = vunpack.c.h.b16 %v249
    %v1074 = vunpack.c.l.b16 %v250
    %v1075 = vunpack.c.h.b16 %v250
    %v1076 = vunpack.c.l.b16 %v251
    %v1077 = vunpack.c.h.b16 %v251
    %v1078 = vunpack.c.l.b16 %v252
    %v1079 = vunpack.c.h.b16 %v252
    %v1080 = vunpack.c.l.b16 %v253
    %v1081 = vunpack.c.h.b16 %v253
    %v1082 = vunpack.c.l.b16 %v254
    %v1083 = vunpack.c.h.b16 %v254
    %v1084 = vunpack.c.l.b16 %v255
    %v1085 = vunpack.c.h.b16 %v255
    %v1086 = vunpack.c.l.b16 %v256
    %v1087 = vunpack.c.h.b16 %v256
    %v1088 = vunpack.c.l.b16 %v257
    %v1089 = vunpack.c.h.b16 %v257
    %v1090 = vunpack.c.l.b16 %v258
    %v1091 = vunpack.c.h.b16 %v258
    %v1092 = vunpack.c.l.b16 %v259
    %v1093 = vunpack.c.h.b16 %v259
    %v1094 = vunpack.c.l.b16 %v260
    %v1095 = vunpack.c.h.b16 %v260
    %v1096 = vunpack.c.l.b16 %v261
    %v1097 = vunpack.c.h.b16 %v261
    %v1098 = vunpack.c.l.b16 %v262
    %v1099 = vunpack.c.h.b16 %v262
    %v1100 = vunpack.c.l.b16 %v263
    %v1101 = vunpack.c.h.b16 %v263
    %v1102 = vunpack.c.l.b16 %v264
    %v1103 = vunpack.c.h.b16 %v264
    %v1104 = vunpack.c.l.b16 %v265
    %v1105 = vunpack.c.h.b16 %v265
    %v1106 = vunpack.c.l.b16 %v266
    %v1107 = vunpack.c.h.b16 %v266
    %v1108 = vunpack.c.l.b16 %v267
    %v1109 = vunpack.c.h.b16 %v267
    %v1110 = vunpack.c.l.b16 %v268
    %v1111 = vunpack.c.h.b16 %v268
    %v1112 = vunpack.c.l.b16 %v269
    %v1113 = vunpack.c.h.b16 %v269
    %v1114 = vunpack.c.l.b16 %v270
    %v1115 = vunpack.c.h.b16 %v270
    %v1116 = vunpack.c.l.b16 %v271
    %v1117 = vunpack.c.h.b16 %v271
    %v1118 = vunpack.c.l.b16 %v272
    %v1119 = vunpack.c.h.b16 %v272
    %v1120 = vunpack.c.l.b16 %v273
    %v1121 = vunpack.c.h.b16 %v273
    %v1122 = vunpack.c.l.b16 %v274
    %v1123 = vunpack.c.h.b16 %v274
    %v1124 = vunpack.c.l.b16 %v275
    %v1125 = vunpack.c.h.b16 %v275
    %v1126 = vunpack.c.l.b16 %v276
    %v1127 = vunpack.c.h.b16 %v276
    %v1128 = vunpack.c.l.b16 %v277
    %v1129 = vunpack.c.h.b16 %v277
    %v1130 = vunpack.c.l.b16 %v278
    %v1131 = vunpack.c.h.b16 %v278
    %v1132 = vunpack.c.l.b16 %v279
    %v1133 = vunpack.c.h.b16 %v279
    %v1134 = vunpack.c.l.b16 %v280
    %v1135 = vunpack.c.h.b16 %v280
    %v1136 = vunpack.c.l.b16 %v281
    %v1137 = vunpack.c.h.b16 %v281
    %v1138 = vunpack.c.l.b16 %v282
    %v1139 = vunpack.c.h.b16 %v282
    %v1140 = vunpack.c.l.b16 %v283
    %v1141 = vunpack.c.h.b16 %v283
    %v1142 = vunpack.c.l.b16 %v284
    %v1143 = vunpack.c.h.b16 %v284
    %v1144 = vunpack.c.l.b16 %v285
    %v1145 = vunpack.c.h.b16 %v285
    %v1146 = vunpack.c.l.b16 %v286
    %v1147 = vunpack.c.h.b16 %v286
    %v1148 = vunpack.c.l.b16 %v287
    %v1149 = vunpack.c.h.b16 %v287
    %v1150 = vunpack.c.l.b16 %v288
    %v1151 = vunpack.c.h.b16 %v288
    %v1152 = vunpack.c.l.b16 %v289
    %v1153 = vunpack.c.h.b16 %v289
    %v1154 = vunpack.c.l.b16 %v290
    %v1155 = vunpack.c.h.b16 %v290
    %v1156 = vunpack.c.l.b16 %v291
    %v1157 = vunpack.c.h.b16 %v291
    %v1158 = vunpack.c.l.b16 %v292
    %v1159 = vunpack.c.h.b16 %v292
    %v1160 = vunpack.c.l.b16 %v293
    %v1161 = vunpack.c.h.b16 %v293
    %v1162 = vunpack.c.l.b16 %v294
    %v1163 = vunpack.c.h.b16 %v294
    %v1164 = vunpack.c.l.b16 %v295
    %v1165 = vunpack.c.h.b16 %v295
    %v1166 = vunpack.c.l.b16 %v296
    %v1167 = vunpack.c.h.b16 %v296
    %v1168 = vunpack.c.l.b16 %v297
    %v1169 = vunpack.c.h.b16 %v297
    %v1170 = vunpack.c.l.b16 %v298
    %v1171 = vunpack.c.h.b16 %v298
    %v1172 = vunpack.c.l.b16 %v299
    %v1173 = vunpack.c.h.b16 %v299
    %v1174 = vunpack.c.l.b16 %v300
    %v1175 = vunpack.c.h.b16 %v300
    %v1176 = vunpack.c.l.b16 %v301
    %v1177 = vunpack.c.h.b16 %v301
    %v1178 = vunpack.c.l.b16 %v302
    %v1179 = vunpack.c.h.b16 %v302
    %v1180 = vunpack.c.l.b16 %v303
    %v1181 = vunpack.c.h.b16 %v303
    %v1182 = vunpack.c.l.b16 %v304
    %v1183 = vunpack.c.h.b16 %v304
    %v1184 = vunpack.c.l.b16 %v305
    %v1185 = vunpack.c.h.b16 %v305
    %v1186 = vunpack.c.l.b16 %v306
    %v1187 = vunpack.c.h.b16 %v306
    %v1188 = vunpack.c.l.b16 %v307
    %v1189 = vunpack.c.h.b16 %v307
    %v1190 = vunpack.c.l.b16 %v308
    %v1191 = vunpack.c.h.b16 %v308
    %v1192 = vunpack.c.l.b16 %v309
    %v1193 = vunpack.c.h.b16 %v309
    %v1194 = vunpack.c.l.b16 %v310
    %v1195 = vunpack.c.h.b16 %v310
    %v1196 = vunpack.c.l.b16 %v311
    %v1197 = vunpack.c.h.b16 %v311
    %v1198 = vunpack.c.l.b16 %v312
    %v1199 = vunpack.c.h.b16 %v312
    %v1200 = vunpack.c.l.b16 %v313
    %v1201 = vunpack.c.h.b16 %v313
    %v1202 = vunpack.c.l.b16 %v314
    %v1203 = vunpack.c.h.b16 %v314
    %v1204 = vunpack.c.l.b16 %v315
    %v1205 = vunpack.c.h.b16 %v315
    %v1206 = vunpack.c.l.b16 %v316
    %v1207 = vunpack.c.h.b16 %v316
    %v1208 = vunpack.c.l.b16 %v317
    %v1209 = vunpack.c.h.b16 %v317
    %v1210 = vunpack.c.l.b16 %v318
    %v1211 = vunpack.c.h.b16 %v318
    %v1212 = vunpack.c.l.b16 %v319
    %v1213 = vunpack.c.h.b16 %v319
    %v1214 = vunpack.c.l.b16 %v320
    %v1215 = vunpack.c.h.b16 %v320
    %v1216 = vunpack.c.l.b16 %v321
    %v1217 = vunpack.c.h.b16 %v321
    %v1218 = vunpack.c.l.b16 %v322
    %v1219 = vunpack.c.h.b16 %v322
    %v1220 = vunpack.c.l.b16 %v323
    %v1221 = vunpack.c.h.b16 %v323
    %v1222 = vunpack.c.l.b16 %v324
    %v1223 = vunpack.c.h.b16 %v324
    %v1224 = vunpack.c.l.b16 %v325
    %v1225 = vunpack.c.h.b16 %v325
    %v1226 = vunpack.c.l.b16 %v326
    %v1227 = vunpack.c.h.b16 %v326
    %v1228 = vunpack.c.l.b16 %v327
    %v1229 = vunpack.c.h.b16 %v327
    %v1230 = vunpack.c.l.b16 %v328
    %v1231 = vunpack.c.h.b16 %v328
    %v1232 = vunpack.c.l.b16 %v329
    %v1233 = vunpack.c.h.b16 %v329
    %v1234 = vunpack.c.l.b16 %v330
    %v1235 = vunpack.c.h.b16 %v330
    %v1236 = vunpack.c.l.b16 %v331
    %v1237 = vunpack.c.h.b16 %v331
    %v1238 = vunpack.c.l.b16 %v332
    %v1239 = vunpack.c.h.b16 %v332
    %v1240 = vunpack.c.l.b16 %v333
    %v1241 = vunpack.c.h.b16 %v333
    %v1242 = vunpack.c.l.b16 %v334
    %v1243 = vunpack.c.h.b16 %v334
    %v1244 = vunpack.c.l.b16 %v335
    %v1245 = vunpack.c.h.b16 %v335
    %v1246 = vunpack.c.l.b16 %v336
    %v1247 = vunpack.c.h.b16 %v336
    %v1248 = vunpack.c.l.b16 %v337
    %v1249 = vunpack.c.h.b16 %v337
    %v1250 = vunpack.c.l.b16 %v338
    %v1251 = vunpack.c.h.b16 %v338
    %v1252 = vunpack.c.l.b16 %v339
    %v1253 = vunpack.c.h.b16 %v339
    %v1254 = vunpack.c.l.b16 %v340
    %v1255 = vunpack.c.h.b16 %v340
    %v1256 = vunpack.c.l.b16 %v341
    %v1257 = vunpack.c.h.b16 %v341
    %v1258 = vunpack.c.l.b16 %v342
    %v1259 = vunpack.c.h.b16 %v342
    %v1260 = vunpack.c.l.b16 %v343
    %v1261 = vunpack.c.h.b16 %v343
    %v1262 = vunpack.c.l.b16 %v344
    %v1263 = vunpack.c.h.b16 %v344
    %v1264 = vunpack.c.l.b16 %v345
    %v1265 = vunpack.c.h.b16 %v345
    %v1266 = vunpack.c.l.b16 %v346
    %v1267 = vunpack.c.h.b16 %v346
    %v1268 = vunpack.c.l.b16 %v347
    %v1269 = vunpack.c.h.b16 %v347
    %v1270 = vunpack.c.l.b16 %v348
    %v1271 = vunpack.c.h.b16 %v348
    %v1272 = vunpack.c.l.b16 %v349
    %v1273 = vunpack.c.h.b16 %v349
    %v1274 = vunpack.c.l.b16 %v350
    %v1275 = vunpack.c.h.b16 %v350
    %v1276 = vunpack.c.l.b16 %v351
    %v1277 = vunpack.c.h.b16 %v351
    %v1278 = vunpack.c.l.b16 %v352
    %v1279 = vunpack.c.h.b16 %v352
    %v1280 = vunpack.c.l.b16 %v353
    %v1281 = vunpack.c.h.b16 %v353
    %v1282 = vunpack.c.l.b16 %v354
    %v1283 = vunpack.c.h.b16 %v354
    %v1284 = vunpack.c.l.b16 %v355
    %v1285 = vunpack.c.h.b16 %v355
    %v1286 = vunpack.c.l.b16 %v356
    %v1287 = vunpack.c.h.b16 %v356
    %v1288 = vunpack.c.l.b16 %v357
    %v1289 = vunpack.c.h.b16 %v357
    %v1290 = vunpack.c.l.b16 %v358
    %v1291 = vunpack.c.h.b16 %v358
    %v1292 = vunpack.c.l.b16 %v359
    %v1293 = vunpack.c.h.b16 %v359
    %v1294 = vunpack.c.l.b16 %v360
    %v1295 = vunpack.c.h.b16 %v360
    %v1296 = vunpack.c.l.b16 %v361
    %v1297 = vunpack.c.h.b16 %v361
    %v1298 = vunpack.c.l.b16 %v362
    %v1299 = vunpack.c.h.b16 %v362
    %v1300 = vunpack.c.l.b16 %v363
    %v1301 = vunpack.c.h.b16 %v363
    %v1302 = vunpack.c.l.b16 %v364
    %v1303 = vunpack.c.h.b16 %v364
    %v1304 = vunpack.c.l.b16 %v365
    %v1305 = vunpack.c.h.b16 %v365
    %v1306 = vunpack.c.l.b16 %v366
    %v1307 = vunpack.c.h.b16 %v366
    %v1308 = vunpack.c.l.b16 %v367
    %v1309 = vunpack.c.h.b16 %v367
    %v1310 = vunpack.c.l.b16 %v368
    %v1311 = vunpack.c.h.b16 %v368
    %v1312 = vunpack.c.l.b16 %v369
    %v1313 = vunpack.c.h.b16 %v369
    %v1314 = vunpack.c.l.b16 %v370
    %v1315 = vunpack.c.h.b16 %v370
    %v1316 = vunpack.c.l.b16 %v371
    %v1317 = vunpack.c.h.b16 %v371
    %v1318 = vunpack.c.l.b16 %v372
    %v1319 = vunpack.c.h.b16 %v372
    %v1320 = vunpack.c.l.b16 %v373
    %v1321 = vunpack.c.h.b16 %v373
    %v1322 = vunpack.c.l.b16 %v374
    %v1323 = vunpack.c.h.b16 %v374
    %v1324 = vunpack.c.l.b16 %v375
    %v1325 = vunpack.c.h.b16 %v375
    %v1326 = vunpack.c.l.b16 %v376
    %v1327 = vunpack.c.h.b16 %v376
    %v1328 = vunpack.c.l.b16 %v377
    %v1329 = vunpack.c.h.b16 %v377
    %v1330 = vunpack.c.l.b16 %v378
    %v1331 = vunpack.c.h.b16 %v378
    %v1332 = vunpack.c.l.b16 %v379
    %v1333 = vunpack.c.h.b16 %v379
    %v1334 = vunpack.c.l.b16 %v380
    %v1335 = vunpack.c.h.b16 %v380
    %v1336 = vunpack.c.l.b16 %v381
    %v1337 = vunpack.c.h.b16 %v381
    %v1338 = vunpack.c.l.b16 %v382
    %v1339 = vunpack.c.h.b16 %v382
    %v1340 = vunpack.c.l.b16 %v383
    %v1341 = vunpack.c.h.b16 %v383
    %v1342 = vunpack.c.l.b16 %v384
    %v1343 = vunpack.c.h.b16 %v384
    %v1344 = vunpack.c.l.b16 %v385
    %v1345 = vunpack.c.h.b16 %v385
    %v1346 = vunpack.c.l.b16 %v386
    %v1347 = vunpack.c.h.b16 %v386
    %v1348 = vunpack.c.l.b16 %v387
    %v1349 = vunpack.c.h.b16 %v387
    %v1350 = vunpack.c.l.b16 %v388
    %v1351 = vunpack.c.h.b16 %v388
    %v1352 = vunpack.c.l.b16 %v389
    %v1353 = vunpack.c.h.b16 %v389
    %v1354 = vunpack.c.l.b16 %v390
    %v1355 = vunpack.c.h.b16 %v390
    %v1356 = vunpack.c.l.b16 %v391
    %v1357 = vunpack.c.h.b16 %v391
    %v1358 = vunpack.c.l.b16 %v392
    %v1359 = vunpack.c.h.b16 %v392
    %v1360 = vunpack.c.l.b16 %v393
    %v1361 = vunpack.c.h.b16 %v393
    %v1362 = vunpack.c.l.b16 %v394
    %v1363 = vunpack.c.h.b16 %v394
    %v1364 = vunpack.c.l.b16 %v395
    %v1365 = vunpack.c.h.b16 %v395
    %v1366 = vunpack.c.l.b16 %v396
    %v1367 = vunpack.c.h.b16 %v396
    %v1368 = vunpack.c.l.b16 %v397
    %v1369 = vunpack.c.h.b16 %v397
    %v1370 = vunpack.c.l.b16 %v398
    %v1371 = vunpack.c.h.b16 %v398
    %v1372 = vunpack.c.l.b16 %v399
    %v1373 = vunpack.c.h.b16 %v399
    %v1374 = vunpack.c.l.b16 %v400
    %v1375 = vunpack.c.h.b16 %v400
    %v1376 = vunpack.c.l.b16 %v401
    %v1377 = vunpack.c.h.b16 %v401
    %v1378 = vunpack.c.l.b16 %v402
    %v1379 = vunpack.c.h.b16 %v402
    %v1380 = vunpack.c.l.b16 %v403
    %v1381 = vunpack.c.h.b16 %v403
    %v1382 = vunpack.c.l.b16 %v404
    %v1383 = vunpack.c.h.b16 %v404
    %v1384 = vunpack.c.l.b16 %v405
    %v1385 = vunpack.c.h.b16 %v405
    %v1386 = vunpack.c.l.b16 %v406
    %v1387 = vunpack.c.h.b16 %v406
    %v1388 = vunpack.c.l.b16 %v407
    %v1389 = vunpack.c.h.b16 %v407
    %v1390 = vunpack.c.l.b16 %v408
    %v1391 = vunpack.c.h.b16 %v408
    %v1392 = vunpack.c.l.b16 %v409
    %v1393 = vunpack.c.h.b16 %v409
    %v1394 = vunpack.c.l.b16 %v410
    %v1395 = vunpack.c.h.b16 %v410
    %v1396 = vunpack.c.l.b16 %v411
    %v1397 = vunpack.c.h.b16 %v411
    %v1398 = vunpack.c.l.b16 %v412
    %v1399 = vunpack.c.h.b16 %v412
    %v1400 = vunpack.c.l.b16 %v413
    %v1401 = vunpack.c.h.b16 %v413
    %v1402 = vunpack.c.l.b16 %v414
    %v1403 = vunpack.c.h.b16 %v414
    %v1404 = vunpack.c.l.b16 %v415
    %v1405 = vunpack.c.h.b16 %v415
    %v1406 = vunpack.c.l.b16 %v416
    %v1407 = vunpack.c.h.b16 %v416
    %v1408 = vunpack.c.l.b16 %v417
    %v1409 = vunpack.c.h.b16 %v417
    %v1410 = vunpack.c.l.b16 %v418
    %v1411 = vunpack.c.h.b16 %v418
    %v1412 = vunpack.c.l.b16 %v419
    %v1413 = vunpack.c.h.b16 %v419
    %v1414 = vunpack.c.l.b16 %v420
    %v1415 = vunpack.c.h.b16 %v420
    %v1416 = vunpack.c.l.b16 %v421
    %v1417 = vunpack.c.h.b16 %v421
    %v1418 = vunpack.c.l.b16 %v422
    %v1419 = vunpack.c.h.b16 %v422
    %v1420 = vunpack.c.l.b16 %v423
    %v1421 = vunpack.c.h.b16 %v423
    %v1422 = vunpack.c.l.b16 %v424
    %v1423 = vunpack.c.h.b16 %v424
    %v1424 = vunpack.c.l.b16 %v425
    %v1425 = vunpack.c.h.b16 %v425
    %v1426 = vunpack.c.l.b16 %v426
    %v1427 = vunpack.c.h.b16 %v426
    %v1428 = vunpack.c.l.b16 %v427
    %v1429 = vunpack.c.h.b16 %v427
    %v1430 = vunpack.c.l.b16 %v428
    %v1431 = vunpack.c.h.b16 %v428
    %v1432 = vunpack.c.l.b16 %v429
    %v1433 = vunpack.c.h.b16 %v429
    %v1434 = vunpack.c.l.b16 %v430
    %v1435 = vunpack.c.h.b16 %v430
    %v1436 = vunpack.c.l.b16 %v431
    %v1437 = vunpack.c.h.b16 %v431
    %v1438 = vunpack.c.l.b16 %v432
    %v1439 = vunpack.c.h.b16 %v432
    %v1440 = vunpack.c.l.b16 %v433
    %v1441 = vunpack.c.h.b16 %v433
    %v1442 = vunpack.c.l.b16 %v434
    %v1443 = vunpack.c.h.b16 %v434
    %v1444 = vunpack.c.l.b16 %v435
    %v1445 = vunpack.c.h.b16 %v435
    %v1446 = vunpack.c.l.b16 %v436
    %v1447 = vunpack.c.h.b16 %v436
    %v1448 = vunpack.c.l.b16 %v437
    %v1449 = vunpack.c.h.b16 %v437
    %v1450 = vunpack.c.l.b16 %v438
    %v1451 = vunpack.c.h.b16 %v438
    %v1452 = vunpack.c.l.b16 %v439
    %v1453 = vunpack.c.h.b16 %v439
    %v1454 = vunpack.c.l.b16 %v440
    %v1455 = vunpack.c.h.b16 %v440
    %v1456 = vunpack.c.l.b16 %v441
    %v1457 = vunpack.c.h.b16 %v441
    %v1458 = vunpack.c.l.b16 %v442
    %v1459 = vunpack.c.h.b16 %v442
    %v1460 = vunpack.c.l.b16 %v443
    %v1461 = vunpack.c.h.b16 %v443
    %v1462 = vunpack.c.l.b16 %v444
    %v1463 = vunpack.c.h.b16 %v444
    %v1464 = vunpack.c.l.b16 %v445
    %v1465 = vunpack.c.h.b16 %v445
    %v1466 = vunpack.c.l.b16 %v446
    %v1467 = vunpack.c.h.b16 %v446
    %v1468 = vunpack.c.l.b16 %v447
    %v1469 = vunpack.c.h.b16 %v447
    %v1470 = vunpack.c.l.b16 %v448
    %v1471 = vunpack.c.h.b16 %v448
    %v1472 = vunpack.c.l.b16 %v449
    %v1473 = vunpack.c.h.b16 %v449
    %v1474 = vunpack.c.l.b16 %v450
    %v1475 = vunpack.c.h.b16 %v450
    %v1476 = vunpack.c.l.b16 %v451
    %v1477 = vunpack.c.h.b16 %v451
    %v1478 = vunpack.c.l.b16 %v452
    %v1479 = vunpack.c.h.b16 %v452
    %v1480 = vunpack.c.l.b16 %v453
    %v1481 = vunpack.c.h.b16 %v453
    %v1482 = vunpack.c.l.b16 %v454
    %v1483 = vunpack.c.h.b16 %v454
    %v1484 = vunpack.c.l.b16 %v455
    %v1485 = vunpack.c.h.b16 %v455
    %v1486 = vunpack.c.l.b16 %v456
    %v1487 = vunpack.c.h.b16 %v456
    %v1488 = vunpack.c.l.b16 %v457
    %v1489 = vunpack.c.h.b16 %v457
    %v1490 = vunpack.c.l.b16 %v458
    %v1491 = vunpack.c.h.b16 %v458
    %v1492 = vunpack.c.l.b16 %v459
    %v1493 = vunpack.c.h.b16 %v459
    %v1494 = vunpack.c.l.b16 %v460
    %v1495 = vunpack.c.h.b16 %v460
    %v1496 = vunpack.c.l.b16 %v461
    %v1497 = vunpack.c.h.b16 %v461
    %v1498 = vunpack.c.l.b16 %v462
    %v1499 = vunpack.c.h.b16 %v462
    %v1500 = vunpack.c.l.b16 %v463
    %v1501 = vunpack.c.h.b16 %v463
    %v1502 = vunpack.c.l.b16 %v464
    %v1503 = vunpack.c.h.b16 %v464
    %v1504 = vunpack.c.l.b16 %v465
    %v1505 = vunpack.c.h.b16 %v465
    %v1506 = vunpack.c.l.b16 %v466
    %v1507 = vunpack.c.h.b16 %v466
    %v1508 = vunpack.c.l.b16 %v467
    %v1509 = vunpack.c.h.b16 %v467
    %v1510 = vunpack.c.l.b16 %v468
    %v1511 = vunpack.c.h.b16 %v468
    %v1512 = vunpack.c.l.b16 %v469
    %v1513 = vunpack.c.h.b16 %v469
    %v1514 = vunpack.c.l.b16 %v470
    %v1515 = vunpack.c.h.b16 %v470
    %v1516 = vunpack.c.l.b16 %v471
    %v1517 = vunpack.c.h.b16 %v471
    %v1518 = vunpack.c.l.b16 %v472
    %v1519 = vunpack.c.h.b16 %v472
    %v1520 = vunpack.c.l.b16 %v473
    %v1521 = vunpack.c.h.b16 %v473
    %v1522 = vunpack.c.l.b16 %v474
    %v1523 = vunpack.c.h.b16 %v474
    %v1524 = vunpack.c.l.b16 %v475
    %v1525 = vunpack.c.h.b16 %v475
    %v1526 = vunpack.c.l.b16 %v476
    %v1527 = vunpack.c.h.b16 %v476
    %v1528 = vunpack.c.l.b16 %v477
    %v1529 = vunpack.c.h.b16 %v477
    %v1530 = vunpack.c.l.b16 %v478
    %v1531 = vunpack.c.h.b16 %v478
    %v1532 = vunpack.c.l.b16 %v479
    %v1533 = vunpack.c.h.b16 %v479
    %v1534 = vunpack.c.l.b16 %v480
    %v1535 = vunpack.c.h.b16 %v480
    %v1536 = vunpack.c.l.b16 %v481
    %v1537 = vunpack.c.h.b16 %v481
    %v1538 = vunpack.c.l.b16 %v482
    %v1539 = vunpack.c.h.b16 %v482
    %v1540 = vunpack.c.l.b16 %v483
    %v1541 = vunpack.c.h.b16 %v483
    %v1542 = vunpack.c.l.b16 %v484
    %v1543 = vunpack.c.h.b16 %v484
    %v1544 = vunpack.c.l.b16 %v485
    %v1545 = vunpack.c.h.b16 %v485
    %v1546 = vunpack.c.l.b16 %v486
    %v1547 = vunpack.c.h.b16 %v486
    %v1548 = vunpack.c.l.b16 %v487
    %v1549 = vunpack.c.h.b16 %v487
    %v1550 = vunpack.c.l.b16 %v488
    %v1551 = vunpack.c.h.b16 %v488
    %v1552 = vunpack.c.l.b16 %v489
    %v1553 = vunpack.c.h.b16 %v489
    %v1554 = vunpack.c.l.b16 %v490
    %v1555 = vunpack.c.h.b16 %v490
    %v1556 = vunpack.c.l.b16 %v491
    %v1557 = vunpack.c.h.b16 %v491
    %v1558 = vunpack.c.l.b16 %v492
    %v1559 = vunpack.c.h.b16 %v492
    %v1560 = vunpack.c.l.b16 %v493
    %v1561 = vunpack.c.h.b16 %v493
    %v1562 = vunpack.c.l.b16 %v494
    %v1563 = vunpack.c.h.b16 %v494
    %v1564 = vunpack.c.l.b16 %v495
    %v1565 = vunpack.c.h.b16 %v495
    %v1566 = vunpack.c.l.b16 %v496
    %v1567 = vunpack.c.h.b16 %v496
    %v1568 = vunpack.c.l.b16 %v497
    %v1569 = vunpack.c.h.b16 %v497
    %v1570 = vunpack.c.l.b16 %v498
    %v1571 = vunpack.c.h.b16 %v498
    %v1572 = vunpack.c.l.b16 %v499
    %v1573 = vunpack.c.h.b16 %v499
    %v1574 = vunpack.c.l.b16 %v500
    %v1575 = vunpack.c.h.b16 %v500
    %v1576 = vunpack.c.l.b16 %v501
    %v1577 = vunpack.c.h.b16 %v501
    %v1578 = vunpack.c.l.b16 %v502
    %v1579 = vunpack.c.h.b16 %v502
    %v1580 = vunpack.c.l.b16 %v503
    %v1581 = vunpack.c.h.b16 %v503
    %v1582 = vunpack.c.l.b16 %v504
    %v1583 = vunpack.c.h.b16 %v504
    %v1584 = vunpack.c.l.b16 %v505
    %v1585 = vunpack.c.h.b16 %v505
    %v1586 = vunpack.c.l.b16 %v506
    %v1587 = vunpack.c.h.b16 %v506
    %v1588 = vunpack.c.l.b16 %v507
    %v1589 = vunpack.c.h.b16 %v507
    %v1590 = vunpack.c.l.b16 %v508
    %v1591 = vunpack.c.h.b16 %v508
    %v1592 = vunpack.c.l.b16 %v509
    %v1593 = vunpack.c.h.b16 %v509
    %v1594 = vunpack.c.l.b16 %v510
    %v1595 = vunpack.c.h.b16 %v510
    %v1596 = vunpack.c.l.b16 %v511
    %v1597 = vunpack.c.h.b16 %v511
    %v1598 = vunpack.c.l.b16 %v512
    %v1599 = vunpack.c.h.b16 %v512
    %v1600 = vunpack.c.l.b16 %v513
    %v1601 = vunpack.c.h.b16 %v513
    %v1602 = vunpack.c.l.b16 %v514
    %v1603 = vunpack.c.h.b16 %v514
    %v1604 = vunpack.c.l.b16 %v515
    %v1605 = vunpack.c.h.b16 %v515
    %v1606 = vunpack.c.l.b16 %v516
    %v1607 = vunpack.c.h.b16 %v516
    %v1608 = vunpack.c.l.b16 %v517
    %v1609 = vunpack.c.h.b16 %v517
    %v1610 = vunpack.c.l.b16 %v518
    %v1611 = vunpack.c.h.b16 %v518
    %v1612 = vunpack.c.l.b16 %v519
    %v1613 = vunpack.c.h.b16 %v519
    %v1614 = vunpack.c.l.b16 %v520
    %v1615 = vunpack.c.h.b16 %v520
    %v1616 = vunpack.c.l.b16 %v521
    %v1617 = vunpack.c.h.b16 %v521
    %v1618 = vunpack.c.l.b16 %v522
    %v1619 = vunpack.c.h.b16 %v522
    %v1620 = vunpack.c.l.b16 %v523
    %v1621 = vunpack.c.h.b16 %v523
    %v1622 = vunpack.c.l.b16 %v524
    %v1623 = vunpack.c.h.b16 %v524
    %v1624 = vunpack.c.l.b16 %v525
    %v1625 = vunpack.c.h.b16 %v525
    %v1626 = vunpack.c.l.b16 %v526
    %v1627 = vunpack.c.h.b16 %v526
    %v1628 = vunpack.c.l.b16 %v527
    %v1629 = vunpack.c.h.b16 %v527
    %v1630 = vunpack.c.l.b16 %v528
    %v1631 = vunpack.c.h.b16 %v528
    %v1632 = vunpack.c.l.b16 %v529
    %v1633 = vunpack.c.h.b16 %v529
    %v1634 = vunpack.c.l.b16 %v530
    %v1635 = vunpack.c.h.b16 %v530
    %v1636 = vunpack.c.l.b16 %v531
    %v1637 = vunpack.c.h.b16 %v531
    %v1638 = vunpack.c.l.b16 %v532
    %v1639 = vunpack.c.h.b16 %v532
    %v1640 = vunpack.c.l.b16 %v533
    %v1641 = vunpack.c.h.b16 %v533
    %v1642 = vunpack.c.l.b16 %v534
    %v1643 = vunpack.c.h.b16 %v534
    %v1644 = vunpack.c.l.b16 %v535
    %v1645 = vunpack.c.h.b16 %v535
    %v1646 = vunpack.c.l.b16 %v536
    %v1647 = vunpack.c.h.b16 %v536
    %v1648 = vunpack.c.l.b16 %v537
    %v1649 = vunpack.c.h.b16 %v537
    %v1650 = vunpack.c.l.b16 %v538
    %v1651 = vunpack.c.h.b16 %v538
    %v1652 = vunpack.c.l.b16 %v539
    %v1653 = vunpack.c.h.b16 %v539
    %v1654 = vunpack.c.l.b16 %v540
    %v1655 = vunpack.c.h.b16 %v540
    %v1656 = vunpack.c.l.b16 %v541
    %v1657 = vunpack.c.h.b16 %v541
    %v1658 = vunpack.c.l.b16 %v542
    %v1659 = vunpack.c.h.b16 %v542
    %v1660 = vunpack.c.l.b16 %v543
    %v1661 = vunpack.c.h.b16 %v543
    %v1662 = vunpack.c.l.b16 %v544
    %v1663 = vunpack.c.h.b16 %v544
    %v1664 = vunpack.c.l.b16 %v545
    %v1665 = vunpack.c.h.b16 %v545
    %v1666 = vunpack.c.l.b16 %v546
    %v1667 = vunpack.c.h.b16 %v546
    %v1668 = vunpack.c.l.b16 %v547
    %v1669 = vunpack.c.h.b16 %v547
    %v1670 = vunpack.c.l.b16 %v548
    %v1671 = vunpack.c.h.b16 %v548
    %v1672 = vunpack.c.l.b16 %v549
    %v1673 = vunpack.c.h.b16 %v549
    %v1674 = vunpack.c.l.b16 %v550
    %v1675 = vunpack.c.h.b16 %v550
    %v1676 = vunpack.c.l.b16 %v551
    %v1677 = vunpack.c.h.b16 %v551
    %v1678 = vunpack.c.l.b16 %v552
    %v1679 = vunpack.c.h.b16 %v552
    %v1680 = vunpack.c.l.b16 %v553
    %v1681 = vunpack.c.h.b16 %v553
    %v1682 = vunpack.c.l.b16 %v554
    %v1683 = vunpack.c.h.b16 %v554
    %v1684 = vunpack.c.l.b16 %v555
    %v1685 = vunpack.c.h.b16 %v555
    %v1686 = vunpack.c.l.b16 %v556
    %v1687 = vunpack.c.h.b16 %v556
    %v1688 = vunpack.c.l.b16 %v557
    %v1689 = vunpack.c.h.b16 %v557
    %v1690 = vunpack.c.l.b16 %v558
    %v1691 = vunpack.c.h.b16 %v558
    %v1692 = vunpack.c.l.b16 %v559
    %v1693 = vunpack.c.h.b16 %v559
    %v1694 = vunpack.c.l.b16 %v560
    %v1695 = vunpack.c.h.b16 %v560
    %v1696 = vunpack.c.l.b16 %v561
    %v1697 = vunpack.c.h.b16 %v561
    %v1698 = vunpack.c.l.b16 %v562
    %v1699 = vunpack.c.h.b16 %v562
    %v1700 = vunpack.c.l.b16 %v563
    %v1701 = vunpack.c.h.b16 %v563
    %v1702 = vunpack.c.l.b16 %v564
    %v1703 = vunpack.c.h.b16 %v564
    %v1704 = vpack.c.b16 %v960, %v954
    %v1705 = vpack.c.b16 %v961, %v955
    %v1706 = vpack.c.b16 %v962, %v956
    %v1707 = vpack.c.b16 %v963, %v957
    %v1708 = vpack.c.b16 %v964, %v958
    %v1709 = vpack.c.b16 %v965, %v959
    %v1710 = vpack.c.b16 %v972, %v966
    %v1711 = vpack.c.b16 %v973, %v967
    %v1712 = vpack.c.b16 %v974, %v968
    %v1713 = vpack.c.b16 %v975, %v969
    %v1714 = vpack.c.b16 %v976, %v970
    %v1715 = vpack.c.b16 %v977, %v971
    %v1716 = vpack.c.b16 %v984, %v978
    %v1717 = vpack.c.b16 %v985, %v979
    %v1718 = vpack.c.b16 %v986, %v980
    %v1719 = vpack.c.b16 %v987, %v981
    %v1720 = vpack.c.b16 %v988, %v982
    %v1721 = vpack.c.b16 %v989, %v983
    %v1722 = vpack.c.b16 %v996, %v990
    %v1723 = vpack.c.b16 %v997, %v991
    %v1724 = vpack.c.b16 %v998, %v992
    %v1725 = vpack.c.b16 %v999, %v993
    %v1726 = vpack.c.b16 %v1000, %v994
    %v1727 = vpack.c.b16 %v1001, %v995
    %v1728 = vpack.c.b16 %v1008, %v1002
    %v1729 = vpack.c.b16 %v1009, %v1003
    %v1730 = vpack.c.b16 %v1010, %v1004
    %v1731 = vpack.c.b16 %v1011, %v1005
    %v1732 = vpack.c.b16 %v1012, %v1006
    %v1733 = vpack.c.b16 %v1013, %v1007
    %v1734 = vpack.c.b16 %v1020, %v1014
    %v1735 = vpack.c.b16 %v1021, %v1015
    %v1736 = vpack.c.b16 %v1022, %v1016
    %v1737 = vpack.c.b16 %v1023, %v1017
    %v1738 = vpack.c.b16 %v1024, %v1018
    %v1739 = vpack.c.b16 %v1025, %v1019
    %v1740 = vpack.c.b16 %v1032, %v1026
    %v1741 = vpack.c.b16 %v1033, %v1027
    %v1742 = vpack.c.b16 %v1034, %v1028
    %v1743 = vpack.c.b16 %v1035, %v1029
    %v1744 = vpack.c.b16 %v1036, %v1030
    %v1745 = vpack.c.b16 %v1037, %v1031
    %v1746 = vpack.c.b16 %v1044, %v1038
    %v1747 = vpack.c.b16 %v1045, %v1039
    %v1748 = vpack.c.b16 %v1046, %v1040
    %v1749 = vpack.c.b16 %v1047, %v1041
    %v1750 = vpack.c.b16 %v1048, %v1042
    %v1751 = vpack.c.b16 %v1049, %v1043
    %v1752 = vpack.c.b16 %v1056, %v1050
    %v1753 = vpack.c.b16 %v1057, %v1051
    %v1754 = vpack.c.b16 %v1058, %v1052
    %v1755 = vpack.c.b16 %v1059, %v1053
    %v1756 = vpack.c.b16 %v1060, %v1054
    %v1757 = vpack.c.b16 %v1061, %v1055
    %v1758 = vpack.c.b16 %v1068, %v1062
    %v1759 = vpack.c.b16 %v1069, %v1063
    %v1760 = vpack.c.b16 %v1070, %v1064
    %v1761 = vpack.c.b16 %v1071, %v1065
    %v1762 = vpack.c.b16 %v1072, %v1066
    %v1763 = vpack.c.b16 %v1073, %v1067
    %v1764 = vpack.c.b16 %v1080, %v1074
    %v1765 = vpack.c.b16 %v1081, %v1075
    %v1766 = vpack.c.b16 %v1082, %v1076
    %v1767 = vpack.c.b16 %v1083, %v1077
    %v1768 = vpack.c.b16 %v1084, %v1078
    %v1769 = vpack.c.b16 %v1085, %v1079
    %v1770 = vpack.c.b16 %v1092, %v1086
    %v1771 = vpack.c.b16 %v1093, %v1087
    %v1772 = vpack.c.b16 %v1094, %v1088
    %v1773 = vpack.c.b16 %v1095, %v1089
    %v1774 = vpack.c.b16 %v1096, %v1090
    %v1775 = vpack.c.b16 %v1097, %v1091
    %v1776 = vpack.c.b16 %v1104, %v1098
    %v1777 = vpack.c.b16 %v1105, %v1099
    %v1778 = vpack.c.b16 %v1106, %v1100
    %v1779 = vpack.c.b16 %v1107, %v1101
    %v1780 = vpack.c.b16 %v1108, %v1102
    %v1781 = vpack.c.b16 %v1109, %v1103
    %v1782 = vpack.c.b16 %v1116, %v1110
    %v1783 = vpack.c.b16 %v1117, %v1111
    %v1784 = vpack.c.b16 %v1118, %v1112
    %v1785 = vpack.c.b16 %v1119, %v1113
    %v1786 = vpack.c.b16 %v1120, %v1114
    %v1787 = vpack.c.b16 %v1121, %v1115
    %v1788 = vpack.c.b16 %v1128, %v1122
    %v1789 = vpack.c.b16 %v1129, %v1123
    %v1790 = vpack.c.b16 %v1130, %v1124
    %v1791 = vpack.c.b16 %v1131, %v1125
    %v1792 = vpack.c.b16 %v1132, %v1126
    %v1793 = vpack.c.b16 %v1133, %v1127
    %v1794 = vpack.c.b16 %v1140, %v1134
    %v1795 = vpack.c.b16 %v1141, %v1135
    %v1796 = vpack.c.b16 %v1142, %v1136
    %v1797 = vpack.c.b16 %v1143, %v1137
    %v1798 = vpack.c.b16 %v1144, %v1138
    %v1799 = vpack.c.b16 %v1145, %v1139
    %v1800 = vpack.c.b16 %v1152, %v1146
    %v1801 = vpack.c.b16 %v1153, %v1147
    %v1802 = vpack.c.b16 %v1154, %v1148
    %v1803 = vpack.c.b16 %v1155, %v1149
    %v1804 = vpack.c.b16 %v1156, %v1150
    %v1805 = vpack.c.b16 %v1157, %v1151
    %v1806 = vpack.c.b16 %v1164, %v1158
    %v1807 = vpack.c.b16 %v1165, %v1159
    %v1808 = vpack.c.b16 %v1166, %v1160
    %v1809 = vpack.c.b16 %v1167, %v1161
    %v1810 = vpack.c.b16 %v1168, %v1162
    %v1811 = vpack.c.b16 %v1169, %v1163
    %v1812 = vpack.c.b16 %v1176, %v1170
    %v1813 = vpack.c.b16 %v1177, %v1171
    %v1814 = vpack.c.b16 %v1178, %v1172
    %v1815 = vpack.c.b16 %v1179, %v1173
    %v1816 = vpack.c.b16 %v1180, %v1174
    %v1817 = vpack.c.b16 %v1181, %v1175
    %v1818 = vpack.c.b16 %v1188, %v1182
    %v1819 = vpack.c.b16 %v1189, %v1183
    %v1820 = vpack.c.b16 %v1190, %v1184
    %v1821 = vpack.c.b16 %v1191, %v1185
    %v1822 = vpack.c.b16 %v1192, %v1186
    %v1823 = vpack.c.b16 %v1193, %v1187
    %v1824 = vpack.c.b16 %v1200, %v1194
    %v1825 = vpack.c.b16 %v1201, %v1195
    %v1826 = vpack.c.b16 %v1202, %v1196
    %v1827 = vpack.c.b16 %v1203, %v1197
    %v1828 = vpack.c.b16 %v1204, %v1198
    %v1829 = vpack.c.b16 %v1205, %v1199
    %v1830 = vpack.c.b16 %v1212, %v1206
    %v1831 = vpack.c.b16 %v1213, %v1207
    %v1832 = vpack.c.b16 %v1214, %v1208
    %v1833 = vpack.c.b16 %v1215, %v1209
    %v1834 = vpack.c.b16 %v1216, %v1210
    %v1835 = vpack.c.b16 %v1217, %v1211
    %v1836 = vpack.c.b16 %v1224, %v1218
    %v1837 = vpack.c.b16 %v1225, %v1219
    %v1838 = vpack.c.b16 %v1226, %v1220
    %v1839 = vpack.c.b16 %v1227, %v1221
    %v1840 = vpack.c.b16 %v1228, %v1222
    %v1841 = vpack.c.b16 %v1229, %v1223
    %v1842 = vpack.c.b16 %v1236, %v1230
    %v1843 = vpack.c.b16 %v1237, %v1231
    %v1844 = vpack.c.b16 %v1238, %v1232
    %v1845 = vpack.c.b16 %v1239, %v1233
    %v1846 = vpack.c.b16 %v1240, %v1234
    %v1847 = vpack.c.b16 %v1241, %v1235
    %v1848 = vpack.c.b16 %v1248, %v1242
    %v1849 = vpack.c.b16 %v1249, %v1243
    %v1850 = vpack.c.b16 %v1250, %v1244
    %v1851 = vpack.c.b16 %v1251, %v1245
    %v1852 = vpack.c.b16 %v1252, %v1246
    %v1853 = vpack.c.b16 %v1253, %v1247
    %v1854 = vpack.c.b16 %v1260, %v1254
    %v1855 = vpack.c.b16 %v1261, %v1255
    %v1856 = vpack.c.b16 %v1262, %v1256
    %v1857 = vpack.c.b16 %v1263, %v1257
    %v1858 = vpack.c.b16 %v1264, %v1258
    %v1859 = vpack.c.b16 %v1265, %v1259
    %v1860 = vpack.c.b16 %v1272, %v1266
    %v1861 = vpack.c.b16 %v1273, %v1267
    %v1862 = vpack.c.b16 %v1274, %v1268
    %v1863 = vpack.c.b16 %v1275, %v1269
    %v1864 = vpack.c.b16 %v1276, %v1270
    %v1865 = vpack.c.b16 %v1277, %v1271
    %v1866 = vpack.c.b16 %v1284, %v1278
    %v1867 = vpack.c.b16 %v1285, %v1279
    %v1868 = vpack.c.b16 %v1286, %v1280
    %v1869 = vpack.c.b16 %v1287, %v1281
    %v1870 = vpack.c.b16 %v1288, %v1282
    %v1871 = vpack.c.b16 %v1289, %v1283
    %v1872 = vpack.c.b16 %v1296, %v1290
    %v1873 = vpack.c.b16 %v1297, %v1291
    %v1874 = vpack.c.b16 %v1298, %v1292
    %v1875 = vpack.c.b16 %v1299, %v1293
    %v1876 = vpack.c.b16 %v1300, %v1294
    %v1877 = vpack.c.b16 %v1301, %v1295
    %v1878 = vpack.c.b16 %v1308, %v1302
    %v1879 = vpack.c.b16 %v1309, %v1303
    %v1880 = vpack.c.b16 %v1310, %v1304
    %v1881 = vpack.c.b16 %v1311, %v1305
    %v1882 = vpack.c.b16 %v1312, %v1306
    %v1883 = vpack.c.b16 %v1313, %v1307
    %v1884 = vpack.c.b16 %v1320, %v1314
    %v1885 = vpack.c.b16 %v1321, %v1315
    %v1886 = vpack.c.b16 %v1322, %v1316
    %v1887 = vpack.c.b16 %v1323, %v1317
    %v1888 = vpack.c.b16 %v1324, %v1318
    %v1889 = vpack.c.b16 %v1325, %v1319
    %v1890 = vpack.c.b16 %v1332, %v1326
    %v1891 = vpack.c.b16 %v1333, %v1327
    %v1892 = vpack.c.b16 %v1334, %v1328
    %v1893 = vpack.c.b16 %v1335, %v1329
    %v1894 = vpack.c.b16 %v1336, %v1330
    %v1895 = vpack.c.b16 %v1337, %v1331
    %v1896 = vpack.c.b16 %v1344, %v1338
    %v1897 = vpack.c.b16 %v1345, %v1339
    %v1898 = vpack.c.b16 %v1346, %v1340
    %v1899 = vpack.c.b16 %v1347, %v1341
    %v1900 = vpack.c.b16 %v1348, %v1342
    %v1901 = vpack.c.b16 %v1349, %v1343
    %v1902 = vpack.c.b16 %v1356, %v1350
    %v1903 = vpack.c.b16 %v1357, %v1351
    %v1904 = vpack.c.b16 %v1358, %v1352
    %v1905 = vpack.c.b16 %v1359, %v1353
    %v1906 = vpack.c.b16 %v1360, %v1354
    %v1907 = vpack.c.b16 %v1361, %v1355
    %v1908 = vpack.c.b16 %v1368, %v1362
    %v1909 = vpack.c.b16 %v1369, %v1363
    %v1910 = vpack.c.b16 %v1370, %v1364
    %v1911 = vpack.c.b16 %v1371, %v1365
    %v1912 = vpack.c.b16 %v1372, %v1366
    %v1913 = vpack.c.b16 %v1373, %v1367
    %v1914 = vpack.c.b16 %v1380, %v1374
    %v1915 = vpack.c.b16 %v1381, %v1375
    %v1916 = vpack.c.b16 %v1382, %v1376
    %v1917 = vpack.c.b16 %v1383, %v1377
    %v1918 = vpack.c.b16 %v1384, %v1378
    %v1919 = vpack.c.b16 %v1385, %v1379
    %v1920 = vpack.c.b16 %v1392, %v1386
    %v1921 = vpack.c.b16 %v1393, %v1387
    %v1922 = vpack.c.b16 %v1394, %v1388
    %v1923 = vpack.c.b16 %v1395, %v1389
    %v1924 = vpack.c.b16 %v1396, %v1390
    %v1925 = vpack.c.b16 %v1397, %v1391
    %v1926 = vpack.c.b16 %v1404, %v1398
    %v1927 = vpack.c.b16 %v1405, %v1399
    %v1928 = vpack.c.b16 %v1406, %v1400
    %v1929 = vpack.c.b16 %v1407, %v1401
    %v1930 = vpack.c.b16 %v1408, %v1402
    %v1931 = vpack.c.b16 %v1409, %v1403
    %v1932 = vpack.c.b16 %v1416, %v1410
    %v1933 = vpack.c.b16 %v1417, %v1411
    %v1934 = vpack.c.b16 %v1418, %v1412
    %v1935 = vpack.c.b16 %v1419, %v1413
    %v1936 = vpack.c.b16 %v1420, %v1414
    %v1937 = vpack.c.b16 %v1421, %v1415
    %v1938 = vpack.c.b16 %v1428, %v1422
    %v1939 = vpack.c.b16 %v1429, %v1423
    %v1940 = vpack.c.b16 %v1430, %v1424
    %v1941 = vpack.c.b16 %v1431, %v1425
    %v1942 = vpack.c.b16 %v1432, %v1426
    %v1943 = vpack.c.b16 %v1433, %v1427
    %v1944 = vpack.c.b16 %v1440, %v1434
    %v1945 = vpack.c.b16 %v1441, %v1435
    %v1946 = vpack.c.b16 %v1442, %v1436
    %v1947 = vpack.c.b16 %v1443, %v1437
    %v1948 = vpack.c.b16 %v1444, %v1438
    %v1949 = vpack.c.b16 %v1445, %v1439
    %v1950 = vpack.c.b16 %v1452, %v1446
    %v1951 = vpack.c.b16 %v1453, %v1447
    %v1952 = vpack.c.b16 %v1454, %v1448
    %v1953 = vpack.c.b16 %v1455, %v1449
    %v1954 = vpack.c.b16 %v1456, %v1450
    %v1955 = vpack.c.b16 %v1457, %v1451
    %v1956 = vpack.c.b16 %v1464, %v1458
    %v1957 = vpack.c.b16 %v1465, %v1459
    %v1958 = vpack.c.b16 %v1466, %v1460
    %v1959 = vpack.c.b16 %v1467, %v1461
    %v1960 = vpack.c.b16 %v1468, %v1462
    %v1961 = vpack.c.b16 %v1469, %v1463
    %v1962 = vpack.c.b16 %v1476, %v1470
    %v1963 = vpack.c.b16 %v1477, %v1471
    %v1964 = vpack.c.b16 %v1478, %v1472
    %v1965 = vpack.c.b16 %v1479, %v1473
    %v1966 = vpack.c.b16 %v1480, %v1474
    %v1967 = vpack.c.b16 %v1481, %v1475
    %v1968 = vpack.c.b16 %v1488, %v1482
    %v1969 = vpack.c.b16 %v1489, %v1483
    %v1970 = vpack.c.b16 %v1490, %v1484
    %v1971 = vpack.c.b16 %v1491, %v1485
    %v1972 = vpack.c.b16 %v1492, %v1486
    %v1973 = vpack.c.b16 %v1493, %v1487
    %v1974 = vpack.c.b16 %v1500, %v1494
    %v1975 = vpack.c.b16 %v1501, %v1495
    %v1976 = vpack.c.b16 %v1502, %v1496
    %v1977 = vpack.c.b16 %v1503, %v1497
    %v1978 = vpack.c.b16 %v1504, %v1498
    %v1979 = vpack.c.b16 %v1505, %v1499
    %v1980 = vpack.c.b16 %v1512, %v1506
    %v1981 = vpack.c.b16 %v1513, %v1507
    %v1982 = vpack.c.b16 %v1514, %v1508
    %v1983 = vpack.c.b16 %v1515, %v1509
    %v1984 = vpack.c.b16 %v1516, %v1510
    %v1985 = vpack.c.b16 %v1517, %v1511
    %v1986 = vpack.c.b16 %v1524, %v1518
    %v1987 = vpack.c.b16 %v1525, %v1519
    %v1988 = vpack.c.b16 %v1526, %v1520
    %v1989 = vpack.c.b16 %v1527, %v1521
    %v1990 = vpack.c.b16 %v1528, %v1522
    %v1991 = vpack.c.b16 %v1529, %v1523
    %v1992 = vpack.c.b16 %v1536, %v1530
    %v1993 = vpack.c.b16 %v1537, %v1531
    %v1994 = vpack.c.b16 %v1538, %v1532
    %v1995 = vpack.c.b16 %v1539, %v1533
    %v1996 = vpack.c.b16 %v1540, %v1534
    %v1997 = vpack.c.b16 %v1541, %v1535
    %v1998 = vpack.c.b16 %v1548, %v1542
    %v1999 = vpack.c.b16 %v1549, %v1543
    %v2000 = vpack.c.b16 %v1550, %v1544
    %v2001 = vpack.c.b16 %v1551, %v1545
    %v2002 = vpack.c.b16 %v1552, %v1546
    %v2003 = vpack.c.b16 %v1553, %v1547
    %v2004 = vpack.c.b16 %v1560, %v1554
    %v2005 = vpack.c.b16 %v1561, %v1555
    %v2006 = vpack.c.b16 %v1562, %v1556
    %v2007 = vpack.c.b16 %v1563, %v1557
    %v2008 = vpack.c.b16 %v1564, %v1558
    %v2009 = vpack.c.b16 %v1565, %v1559
    %v2010 = vpack.c.b16 %v1572, %v1566
    %v2011 = vpack.c.b16 %v1573, %v1567
    %v2012 = vpack.c.b16 %v1574, %v1568
    %v2013 = vpack.c.b16 %v1575, %v1569
    %v2014 = vpack.c.b16 %v1576, %v1570
    %v2015 = vpack.c.b16 %v1577, %v1571
    %v2016 = vpack.c.b16 %v1584, %v1578
    %v2017 = vpack.c.b16 %v1585, %v1579
    %v2018 = vpack.c.b16 %v1586, %v1580
    %v2019 = vpack.c.b16 %v1587, %v1581
    %v2020 = vpack.c.b16 %v1588, %v1582
    %v2021 = vpack.c.b16 %v1589, %v1583
    %v2022 = vpack.c.b16 %v1596, %v1590
    %v2023 = vpack.c.b16 %v1597, %v1591
    %v2024 = vpack.c.b16 %v1598, %v1592
    %v2025 = vpack.c.b16 %v1599, %v1593
    %v2026 = vpack.c.b16 %v1600, %v1594
    %v2027 = vpack.c.b16 %v1601, %v1595
    %v2028 = vpack.c.b16 %v1608, %v1602
    %v2029 = vpack.c.b16 %v1609, %v1603
    %v2030 = vpack.c.b16 %v1610, %v1604
    %v2031 = vpack.c.b16 %v1611, %v1605
    %v2032 = vpack.c.b16 %v1612, %v1606
    %v2033 = vpack.c.b16 %v1613, %v1607
    %v2034 = vpack.c.b16 %v1620, %v1614
    %v2035 = vpack.c.b16 %v1621, %v1615
    %v2036 = vpack.c.b16 %v1622, %v1616
    %v2037 = vpack.c.b16 %v1623, %v1617
    %v2038 = vpack.c.b16 %v1624, %v1618
    %v2039 = vpack.c.b16 %v1625, %v1619
    %v2040 = vpack.c.b16 %v1632, %v1626
    %v2041 = vpack.c.b16 %v1633, %v1627
    %v2042 = vpack.c.b16 %v1634, %v1628
    %v2043 = vpack.c.b16 %v1635, %v1629
    %v2044 = vpack.c.b16 %v1636, %v1630
    %v2045 = vpack.c.b16 %v1637, %v1631
    %v2046 = vpack.c.b16 %v1644, %v1638
    %v2047 = vpack.c.b16 %v1645, %v1639
    %v2048 = vpack.c.b16 %v1646, %v1640
    %v2049 = vpack.c.b16 %v1647, %v1641
    %v2050 = vpack.c.b16 %v1648, %v1642
    %v2051 = vpack.c.b16 %v1649, %v1643
    %v2052 = vpack.c.b16 %v1656, %v1650
    %v2053 = vpack.c.b16 %v1657, %v1651
    %v2054 = vpack.c.b16 %v1658, %v1652
    %v2055 = vpack.c.b16 %v1659, %v1653
    %v2056 = vpack.c.b16 %v1660, %v1654
    %v2057 = vpack.c.b16 %v1661, %v1655
    %v2058 = vpack.c.b16 %v1668, %v1662
    %v2059 = vpack.c.b16 %v1669, %v1663
    %v2060 = vpack.c.b16 %v1670, %v1664
    %v2061 = vpack.c.b16 %v1671, %v1665
    %v2062 = vpack.c.b16 %v1672, %v1666
    %v2063 = vpack.c.b16 %v1673, %v1667
    %v2064 = vpack.c.b16 %v1680, %v1674
    %v2065 = vpack.c.b16 %v1681, %v1675
    %v2066 = vpack.c.b16 %v1682, %v1676
    %v2067 = vpack.c.b16 %v1683, %v1677
    %v2068 = vpack.c.b16 %v1684, %v1678
    %v2069 = vpack.c.b16 %v1685, %v1679
    %v2070 = vpack.c.b16 %v1692, %v1686
    %v2071 = vpack.c.b16 %v1693, %v1687
    %v2072 = vpack.c.b16 %v1694, %v1688
    %v2073 = vpack.c.b16 %v1695, %v1689
    %v2074 = vpack.c.b16 %v1696, %v1690
    %v2075 = vpack.c.b16 %v1697, %v1691
    %v2076 = vpack.c.b16 %v1698, %v1698
    %v2077 = vpack.c.b16 %v1699, %v1699
    %v2078 = vpack.c.b16 %v1700, %v1700
    %v2079 = vpack.c.b16 %v1701, %v1701
    %v2080 = vpack.c.b16 %v1702, %v1702
    %v2081 = vpack.c.b16 %v1703, %v1703
    %vm2454 = vcmask 850944
    %v2456 = vsel %vm2454, %v189, 0
    %vm2458 = vcmask 1043456
    %v2460 = vsel %vm2458, %v2076, 0
    %v2463 = vsel %vm2458, %v2077, 0
    %v2466 = vsel %vm2458, %v2078, 0
    %v2469 = vsel %vm2458, %v2079, 0
    %v2472 = vsel %vm2458, %v2080, 0
    %v2475 = vsel %vm2458, %v2081, 0
    %2477 = vmatpush.bf16.msra.mxu0 %v1746
    %2478 = vmatpush.bf16.msra.mxu0 %v1740
    %2479 = vmatpush.bf16.msra.mxu0 %v1734
    %2480 = vmatpush.bf16.msra.mxu0 %v1728
    %2481 = vmatpush.bf16.msra.mxu0 %v1722
    %2482 = vmatpush.bf16.msra.mxu0 %v1716
    %2483 = vmatpush.bf16.msra.mxu0 %v1710
    %2484 = vmatpush.bf16.msra.mxu0 %v1704
    %2485 = vmatmul.bf16.gmra.mxu0 %v182
    %v2486 = vpop.f32.mrf.mxu0
    %v2487 = vadd.f32 %v567, %v2486
    %v2488 = vpop.f32.mrf.mxu0
    %v2489 = vadd.f32 %v567, %v2488
    %2490 = vdwg.mxu0
    %2491 = vmatpush.bf16.msra.mxu0 %v1794
    %2492 = vmatpush.bf16.msra.mxu0 %v1788
    %2493 = vmatpush.bf16.msra.mxu0 %v1782
    %2494 = vmatpush.bf16.msra.mxu0 %v1776
    %2495 = vmatpush.bf16.msra.mxu0 %v1770
    %2496 = vmatpush.bf16.msra.mxu0 %v1764
    %2497 = vmatpush.bf16.msra.mxu0 %v1758
    %2498 = vmatpush.bf16.msra.mxu0 %v1752
    %2499 = vmatmul.bf16.gmra.mxu0 %v183
    %v2500 = vpop.f32.mrf.mxu0
    %v2501 = vadd.f32 %v2487, %v2500
    %v2502 = vpop.f32.mrf.mxu0
    %v2503 = vadd.f32 %v2489, %v2502
    %2504 = vdwg.mxu0
    %2505 = vmatpush.bf16.msra.mxu0 %v1842
    %2506 = vmatpush.bf16.msra.mxu0 %v1836
    %2507 = vmatpush.bf16.msra.mxu0 %v1830
    %2508 = vmatpush.bf16.msra.mxu0 %v1824
    %2509 = vmatpush.bf16.msra.mxu0 %v1818
    %2510 = vmatpush.bf16.msra.mxu0 %v1812
    %2511 = vmatpush.bf16.msra.mxu0 %v1806
    %2512 = vmatpush.bf16.msra.mxu0 %v1800
    %2513 = vmatmul.bf16.gmra.mxu0 %v184
    %v2514 = vpop.f32.mrf.mxu0
    %v2515 = vadd.f32 %v2501, %v2514
    %v2516 = vpop.f32.mrf.mxu0
    %v2517 = vadd.f32 %v2503, %v2516
    %2518 = vdwg.mxu0
    %2519 = vmatpush.bf16.msra.mxu0 %v1890
    %2520 = vmatpush.bf16.msra.mxu0 %v1884
    %2521 = vmatpush.bf16.msra.mxu0 %v1878
    %2522 = vmatpush.bf16.msra.mxu0 %v1872
    %2523 = vmatpush.bf16.msra.mxu0 %v1866
    %2524 = vmatpush.bf16.msra.mxu0 %v1860
    %2525 = vmatpush.bf16.msra.mxu0 %v1854
    %2526 = vmatpush.bf16.msra.mxu0 %v1848
    %2527 = vmatmul.bf16.gmra.mxu0 %v185
    %v2528 = vpop.f32.mrf.mxu0
    %v2529 = vadd.f32 %v2515, %v2528
    %v2530 = vpop.f32.mrf.mxu0
    %v2531 = vadd.f32 %v2517, %v2530
    %2532 = vdwg.mxu0
    %2533 = vmatpush.bf16.msra.mxu0 %v1938
    %2534 = vmatpush.bf16.msra.mxu0 %v1932
    %2535 = vmatpush.bf16.msra.mxu0 %v1926
    %2536 = vmatpush.bf16.msra.mxu0 %v1920
    %2537 = vmatpush.bf16.msra.mxu0 %v1914
    %2538 = vmatpush.bf16.msra.mxu0 %v1908
    %2539 = vmatpush.bf16.msra.mxu0 %v1902
    %2540 = vmatpush.bf16.msra.mxu0 %v1896
    %2541 = vmatmul.bf16.gmra.mxu0 %v186
    %v2542 = vpop.f32.mrf.mxu0
    %v2543 = vadd.f32 %v2529, %v2542
    %v2544 = vpop.f32.mrf.mxu0
    %v2545 = vadd.f32 %v2531, %v2544
    %2546 = vdwg.mxu0
    %2547 = vmatpush.bf16.msra.mxu0 %v1986
    %2548 = vmatpush.bf16.msra.mxu0 %v1980
    %2549 = vmatpush.bf16.msra.mxu0 %v1974
    %2550 = vmatpush.bf16.msra.mxu0 %v1968
    %2551 = vmatpush.bf16.msra.mxu0 %v1962
    %2552 = vmatpush.bf16.msra.mxu0 %v1956
    %2553 = vmatpush.bf16.msra.mxu0 %v1950
    %2554 = vmatpush.bf16.msra.mxu0 %v1944
    %2555 = vmatmul.bf16.gmra.mxu0 %v187
    %v2556 = vpop.f32.mrf.mxu0
    %v2557 = vadd.f32 %v2543, %v2556
    %v2558 = vpop.f32.mrf.mxu0
    %v2559 = vadd.f32 %v2545, %v2558
    %2560 = vdwg.mxu0
    %2561 = vmatpush.bf16.msra.mxu0 %v2034
    %2562 = vmatpush.bf16.msra.mxu0 %v2028
    %2563 = vmatpush.bf16.msra.mxu0 %v2022
    %2564 = vmatpush.bf16.msra.mxu0 %v2016
    %2565 = vmatpush.bf16.msra.mxu0 %v2010
    %2566 = vmatpush.bf16.msra.mxu0 %v2004
    %2567 = vmatpush.bf16.msra.mxu0 %v1998
    %2568 = vmatpush.bf16.msra.mxu0 %v1992
    %2569 = vmatmul.bf16.gmra.mxu0 %v188
    %v2570 = vpop.f32.mrf.mxu0
    %v2571 = vadd.f32 %v2557, %v2570
    %v2572 = vpop.f32.mrf.mxu0
    %v2573 = vadd.f32 %v2559, %v2572
    %2574 = vdwg.mxu0
    %2575 = vmatpush.bf16.msra.mxu0 0
    %2576 = vmatpush.bf16.msra.mxu0 %v2460
    %2577 = vmatpush.bf16.msra.mxu0 %v2070
    %2578 = vmatpush.bf16.msra.mxu0 %v2064
    %2579 = vmatpush.bf16.msra.mxu0 %v2058
    %2580 = vmatpush.bf16.msra.mxu0 %v2052
    %2581 = vmatpush.bf16.msra.mxu0 %v2046
    %2582 = vmatpush.bf16.msra.mxu0 %v2040
    %2583 = vmatmul.bf16.gmra.mxu0 %v2456
    %v2584 = vpop.f32.mrf.mxu0
    %v2585 = vadd.f32 %v2571, %v2584
    %v2586 = vpop.f32.mrf.mxu0
    %v2587 = vadd.f32 %v2573, %v2586
    %2588 = vdwg.mxu0
    %2589 = vmatpush.bf16.msra.mxu0 %v1747
    %2590 = vmatpush.bf16.msra.mxu0 %v1741
    %2591 = vmatpush.bf16.msra.mxu0 %v1735
    %2592 = vmatpush.bf16.msra.mxu0 %v1729
    %2593 = vmatpush.bf16.msra.mxu0 %v1723
    %2594 = vmatpush.bf16.msra.mxu0 %v1717
    %2595 = vmatpush.bf16.msra.mxu0 %v1711
    %2596 = vmatpush.bf16.msra.mxu0 %v1705
    %2597 = vmatmul.bf16.gmra.mxu0 %v182
    %v2598 = vpop.f32.mrf.mxu0
    %v2599 = vadd.f32 %v568, %v2598
    %v2600 = vpop.f32.mrf.mxu0
    %v2601 = vadd.f32 %v568, %v2600
    %2602 = vdwg.mxu0
    %2603 = vmatpush.bf16.msra.mxu0 %v1795
    %2604 = vmatpush.bf16.msra.mxu0 %v1789
    %2605 = vmatpush.bf16.msra.mxu0 %v1783
    %2606 = vmatpush.bf16.msra.mxu0 %v1777
    %2607 = vmatpush.bf16.msra.mxu0 %v1771
    %2608 = vmatpush.bf16.msra.mxu0 %v1765
    %2609 = vmatpush.bf16.msra.mxu0 %v1759
    %2610 = vmatpush.bf16.msra.mxu0 %v1753
    %2611 = vmatmul.bf16.gmra.mxu0 %v183
    %v2612 = vpop.f32.mrf.mxu0
    %v2613 = vadd.f32 %v2599, %v2612
    %v2614 = vpop.f32.mrf.mxu0
    %v2615 = vadd.f32 %v2601, %v2614
    %2616 = vdwg.mxu0
    %2617 = vmatpush.bf16.msra.mxu0 %v1843
    %2618 = vmatpush.bf16.msra.mxu0 %v1837
    %2619 = vmatpush.bf16.msra.mxu0 %v1831
    %2620 = vmatpush.bf16.msra.mxu0 %v1825
    %2621 = vmatpush.bf16.msra.mxu0 %v1819
    %2622 = vmatpush.bf16.msra.mxu0 %v1813
    %2623 = vmatpush.bf16.msra.mxu0 %v1807
    %2624 = vmatpush.bf16.msra.mxu0 %v1801
    %2625 = vmatmul.bf16.gmra.mxu0 %v184
    %v2626 = vpop.f32.mrf.mxu0
    %v2627 = vadd.f32 %v2613, %v2626
    %v2628 = vpop.f32.mrf.mxu0
    %v2629 = vadd.f32 %v2615, %v2628
    %2630 = vdwg.mxu0
    %2631 = vmatpush.bf16.msra.mxu0 %v1891
    %2632 = vmatpush.bf16.msra.mxu0 %v1885
    %2633 = vmatpush.bf16.msra.mxu0 %v1879
    %2634 = vmatpush.bf16.msra.mxu0 %v1873
    %2635 = vmatpush.bf16.msra.mxu0 %v1867
    %2636 = vmatpush.bf16.msra.mxu0 %v1861
    %2637 = vmatpush.bf16.msra.mxu0 %v1855
    %2638 = vmatpush.bf16.msra.mxu0 %v1849
    %2639 = vmatmul.bf16.gmra.mxu0 %v185
    %v2640 = vpop.f32.mrf.mxu0
    %v2641 = vadd.f32 %v2627, %v2640
    %v2642 = vpop.f32.mrf.mxu0
    %v2643 = vadd.f32 %v2629, %v2642
    %2644 = vdwg.mxu0
    %2645 = vmatpush.bf16.msra.mxu0 %v1939
    %2646 = vmatpush.bf16.msra.mxu0 %v1933
    %2647 = vmatpush.bf16.msra.mxu0 %v1927
    %2648 = vmatpush.bf16.msra.mxu0 %v1921
    %2649 = vmatpush.bf16.msra.mxu0 %v1915
    %2650 = vmatpush.bf16.msra.mxu0 %v1909
    %2651 = vmatpush.bf16.msra.mxu0 %v1903
    %2652 = vmatpush.bf16.msra.mxu0 %v1897
    %2653 = vmatmul.bf16.gmra.mxu0 %v186
    %v2654 = vpop.f32.mrf.mxu0
    %v2655 = vadd.f32 %v2641, %v2654
    %v2656 = vpop.f32.mrf.mxu0
    %v2657 = vadd.f32 %v2643, %v2656
    %2658 = vdwg.mxu0
    %2659 = vmatpush.bf16.msra.mxu0 %v1987
    %2660 = vmatpush.bf16.msra.mxu0 %v1981
    %2661 = vmatpush.bf16.msra.mxu0 %v1975
    %2662 = vmatpush.bf16.msra.mxu0 %v1969
    %2663 = vmatpush.bf16.msra.mxu0 %v1963
    %2664 = vmatpush.bf16.msra.mxu0 %v1957
    %2665 = vmatpush.bf16.msra.mxu0 %v1951
    %2666 = vmatpush.bf16.msra.mxu0 %v1945
    %2667 = vmatmul.bf16.gmra.mxu0 %v187
    %v2668 = vpop.f32.mrf.mxu0
    %v2669 = vadd.f32 %v2655, %v2668
    %v2670 = vpop.f32.mrf.mxu0
    %v2671 = vadd.f32 %v2657, %v2670
    %2672 = vdwg.mxu0
    %2673 = vmatpush.bf16.msra.mxu0 %v2035
    %2674 = vmatpush.bf16.msra.mxu0 %v2029
    %2675 = vmatpush.bf16.msra.mxu0 %v2023
    %2676 = vmatpush.bf16.msra.mxu0 %v2017
    %2677 = vmatpush.bf16.msra.mxu0 %v2011
    %2678 = vmatpush.bf16.msra.mxu0 %v2005
    %2679 = vmatpush.bf16.msra.mxu0 %v1999
    %2680 = vmatpush.bf16.msra.mxu0 %v1993
    %2681 = vmatmul.bf16.gmra.mxu0 %v188
    %v2682 = vpop.f32.mrf.mxu0
    %v2683 = vadd.f32 %v2669, %v2682
    %v2684 = vpop.f32.mrf.mxu0
    %v2685 = vadd.f32 %v2671, %v2684
    %2686 = vdwg.mxu0
    %2687 = vmatpush.bf16.msra.mxu0 0
    %2688 = vmatpush.bf16.msra.mxu0 %v2463
    %2689 = vmatpush.bf16.msra.mxu0 %v2071
    %2690 = vmatpush.bf16.msra.mxu0 %v2065
    %2691 = vmatpush.bf16.msra.mxu0 %v2059
    %2692 = vmatpush.bf16.msra.mxu0 %v2053
    %2693 = vmatpush.bf16.msra.mxu0 %v2047
    %2694 = vmatpush.bf16.msra.mxu0 %v2041
    %2695 = vmatmul.bf16.gmra.mxu0 %v2456
    %v2696 = vpop.f32.mrf.mxu0
    %v2697 = vadd.f32 %v2683, %v2696
    %v2698 = vpop.f32.mrf.mxu0
    %v2699 = vadd.f32 %v2685, %v2698
    %2700 = vdwg.mxu0
    %2701 = vmatpush.bf16.msra.mxu0 %v1748
    %2702 = vmatpush.bf16.msra.mxu0 %v1742
    %2703 = vmatpush.bf16.msra.mxu0 %v1736
    %2704 = vmatpush.bf16.msra.mxu0 %v1730
    %2705 = vmatpush.bf16.msra.mxu0 %v1724
    %2706 = vmatpush.bf16.msra.mxu0 %v1718
    %2707 = vmatpush.bf16.msra.mxu0 %v1712
    %2708 = vmatpush.bf16.msra.mxu0 %v1706
    %2709 = vmatmul.bf16.gmra.mxu0 %v182
    %v2710 = vpop.f32.mrf.mxu0
    %v2711 = vadd.f32 %v569, %v2710
    %v2712 = vpop.f32.mrf.mxu0
    %v2713 = vadd.f32 %v569, %v2712
    %2714 = vdwg.mxu0
    %2715 = vmatpush.bf16.msra.mxu0 %v1796
    %2716 = vmatpush.bf16.msra.mxu0 %v1790
    %2717 = vmatpush.bf16.msra.mxu0 %v1784
    %2718 = vmatpush.bf16.msra.mxu0 %v1778
    %2719 = vmatpush.bf16.msra.mxu0 %v1772
    %2720 = vmatpush.bf16.msra.mxu0 %v1766
    %2721 = vmatpush.bf16.msra.mxu0 %v1760
    %2722 = vmatpush.bf16.msra.mxu0 %v1754
    %2723 = vmatmul.bf16.gmra.mxu0 %v183
    %v2724 = vpop.f32.mrf.mxu0
    %v2725 = vadd.f32 %v2711, %v2724
    %v2726 = vpop.f32.mrf.mxu0
    %v2727 = vadd.f32 %v2713, %v2726
    %2728 = vdwg.mxu0
    %2729 = vmatpush.bf16.msra.mxu0 %v1844
    %2730 = vmatpush.bf16.msra.mxu0 %v1838
    %2731 = vmatpush.bf16.msra.mxu0 %v1832
    %2732 = vmatpush.bf16.msra.mxu0 %v1826
    %2733 = vmatpush.bf16.msra.mxu0 %v1820
    %2734 = vmatpush.bf16.msra.mxu0 %v1814
    %2735 = vmatpush.bf16.msra.mxu0 %v1808
    %2736 = vmatpush.bf16.msra.mxu0 %v1802
    %2737 = vmatmul.bf16.gmra.mxu0 %v184
    %v2738 = vpop.f32.mrf.mxu0
    %v2739 = vadd.f32 %v2725, %v2738
    %v2740 = vpop.f32.mrf.mxu0
    %v2741 = vadd.f32 %v2727, %v2740
    %2742 = vdwg.mxu0
    %2743 = vmatpush.bf16.msra.mxu0 %v1892
    %2744 = vmatpush.bf16.msra.mxu0 %v1886
    %2745 = vmatpush.bf16.msra.mxu0 %v1880
    %2746 = vmatpush.bf16.msra.mxu0 %v1874
    %2747 = vmatpush.bf16.msra.mxu0 %v1868
    %2748 = vmatpush.bf16.msra.mxu0 %v1862
    %2749 = vmatpush.bf16.msra.mxu0 %v1856
    %2750 = vmatpush.bf16.msra.mxu0 %v1850
    %2751 = vmatmul.bf16.gmra.mxu0 %v185
    %v2752 = vpop.f32.mrf.mxu0
    %v2753 = vadd.f32 %v2739, %v2752
    %v2754 = vpop.f32.mrf.mxu0
    %v2755 = vadd.f32 %v2741, %v2754
    %2756 = vdwg.mxu0
    %2757 = vmatpush.bf16.msra.mxu0 %v1940
    %2758 = vmatpush.bf16.msra.mxu0 %v1934
    %2759 = vmatpush.bf16.msra.mxu0 %v1928
    %2760 = vmatpush.bf16.msra.mxu0 %v1922
    %2761 = vmatpush.bf16.msra.mxu0 %v1916
    %2762 = vmatpush.bf16.msra.mxu0 %v1910
    %2763 = vmatpush.bf16.msra.mxu0 %v1904
    %2764 = vmatpush.bf16.msra.mxu0 %v1898
    %2765 = vmatmul.bf16.gmra.mxu0 %v186
    %v2766 = vpop.f32.mrf.mxu0
    %v2767 = vadd.f32 %v2753, %v2766
    %v2768 = vpop.f32.mrf.mxu0
    %v2769 = vadd.f32 %v2755, %v2768
    %2770 = vdwg.mxu0
    %2771 = vmatpush.bf16.msra.mxu0 %v1988
    %2772 = vmatpush.bf16.msra.mxu0 %v1982
    %2773 = vmatpush.bf16.msra.mxu0 %v1976
    %2774 = vmatpush.bf16.msra.mxu0 %v1970
    %2775 = vmatpush.bf16.msra.mxu0 %v1964
    %2776 = vmatpush.bf16.msra.mxu0 %v1958
    %2777 = vmatpush.bf16.msra.mxu0 %v1952
    %2778 = vmatpush.bf16.msra.mxu0 %v1946
    %2779 = vmatmul.bf16.gmra.mxu0 %v187
    %v2780 = vpop.f32.mrf.mxu0
    %v2781 = vadd.f32 %v2767, %v2780
    %v2782 = vpop.f32.mrf.mxu0
    %v2783 = vadd.f32 %v2769, %v2782
    %2784 = vdwg.mxu0
    %2785 = vmatpush.bf16.msra.mxu0 %v2036
    %2786 = vmatpush.bf16.msra.mxu0 %v2030
    %2787 = vmatpush.bf16.msra.mxu0 %v2024
    %2788 = vmatpush.bf16.msra.mxu0 %v2018
    %2789 = vmatpush.bf16.msra.mxu0 %v2012
    %2790 = vmatpush.bf16.msra.mxu0 %v2006
    %2791 = vmatpush.bf16.msra.mxu0 %v2000
    %2792 = vmatpush.bf16.msra.mxu0 %v1994
    %2793 = vmatmul.bf16.gmra.mxu0 %v188
    %v2794 = vpop.f32.mrf.mxu0
    %v2795 = vadd.f32 %v2781, %v2794
    %v2796 = vpop.f32.mrf.mxu0
    %v2797 = vadd.f32 %v2783, %v2796
    %2798 = vdwg.mxu0
    %2799 = vmatpush.bf16.msra.mxu0 0
    %2800 = vmatpush.bf16.msra.mxu0 %v2466
    %2801 = vmatpush.bf16.msra.mxu0 %v2072
    %2802 = vmatpush.bf16.msra.mxu0 %v2066
    %2803 = vmatpush.bf16.msra.mxu0 %v2060
    %2804 = vmatpush.bf16.msra.mxu0 %v2054
    %2805 = vmatpush.bf16.msra.mxu0 %v2048
    %2806 = vmatpush.bf16.msra.mxu0 %v2042
    %2807 = vmatmul.bf16.gmra.mxu0 %v2456
    %v2808 = vpop.f32.mrf.mxu0
    %v2809 = vadd.f32 %v2795, %v2808
    %v2810 = vpop.f32.mrf.mxu0
    %v2811 = vadd.f32 %v2797, %v2810
    %2812 = vdwg.mxu0
    %2813 = vmatpush.bf16.msra.mxu0 %v1749
    %2814 = vmatpush.bf16.msra.mxu0 %v1743
    %2815 = vmatpush.bf16.msra.mxu0 %v1737
    %2816 = vmatpush.bf16.msra.mxu0 %v1731
    %2817 = vmatpush.bf16.msra.mxu0 %v1725
    %2818 = vmatpush.bf16.msra.mxu0 %v1719
    %2819 = vmatpush.bf16.msra.mxu0 %v1713
    %2820 = vmatpush.bf16.msra.mxu0 %v1707
    %2821 = vmatmul.bf16.gmra.mxu0 %v182
    %v2822 = vpop.f32.mrf.mxu0
    %v2823 = vadd.f32 %v570, %v2822
    %v2824 = vpop.f32.mrf.mxu0
    %v2825 = vadd.f32 %v570, %v2824
    %2826 = vdwg.mxu0
    %2827 = vmatpush.bf16.msra.mxu0 %v1797
    %2828 = vmatpush.bf16.msra.mxu0 %v1791
    %2829 = vmatpush.bf16.msra.mxu0 %v1785
    %2830 = vmatpush.bf16.msra.mxu0 %v1779
    %2831 = vmatpush.bf16.msra.mxu0 %v1773
    %2832 = vmatpush.bf16.msra.mxu0 %v1767
    %2833 = vmatpush.bf16.msra.mxu0 %v1761
    %2834 = vmatpush.bf16.msra.mxu0 %v1755
    %2835 = vmatmul.bf16.gmra.mxu0 %v183
    %v2836 = vpop.f32.mrf.mxu0
    %v2837 = vadd.f32 %v2823, %v2836
    %v2838 = vpop.f32.mrf.mxu0
    %v2839 = vadd.f32 %v2825, %v2838
    %2840 = vdwg.mxu0
    %2841 = vmatpush.bf16.msra.mxu0 %v1845
    %2842 = vmatpush.bf16.msra.mxu0 %v1839
    %2843 = vmatpush.bf16.msra.mxu0 %v1833
    %2844 = vmatpush.bf16.msra.mxu0 %v1827
    %2845 = vmatpush.bf16.msra.mxu0 %v1821
    %2846 = vmatpush.bf16.msra.mxu0 %v1815
    %2847 = vmatpush.bf16.msra.mxu0 %v1809
    %2848 = vmatpush.bf16.msra.mxu0 %v1803
    %2849 = vmatmul.bf16.gmra.mxu0 %v184
    %v2850 = vpop.f32.mrf.mxu0
    %v2851 = vadd.f32 %v2837, %v2850
    %v2852 = vpop.f32.mrf.mxu0
    %v2853 = vadd.f32 %v2839, %v2852
    %2854 = vdwg.mxu0
    %2855 = vmatpush.bf16.msra.mxu0 %v1893
    %2856 = vmatpush.bf16.msra.mxu0 %v1887
    %2857 = vmatpush.bf16.msra.mxu0 %v1881
    %2858 = vmatpush.bf16.msra.mxu0 %v1875
    %2859 = vmatpush.bf16.msra.mxu0 %v1869
    %2860 = vmatpush.bf16.msra.mxu0 %v1863
    %2861 = vmatpush.bf16.msra.mxu0 %v1857
    %2862 = vmatpush.bf16.msra.mxu0 %v1851
    %2863 = vmatmul.bf16.gmra.mxu0 %v185
    %v2864 = vpop.f32.mrf.mxu0
    %v2865 = vadd.f32 %v2851, %v2864
    %v2866 = vpop.f32.mrf.mxu0
    %v2867 = vadd.f32 %v2853, %v2866
    %2868 = vdwg.mxu0
    %2869 = vmatpush.bf16.msra.mxu0 %v1941
    %2870 = vmatpush.bf16.msra.mxu0 %v1935
    %2871 = vmatpush.bf16.msra.mxu0 %v1929
    %2872 = vmatpush.bf16.msra.mxu0 %v1923
    %2873 = vmatpush.bf16.msra.mxu0 %v1917
    %2874 = vmatpush.bf16.msra.mxu0 %v1911
    %2875 = vmatpush.bf16.msra.mxu0 %v1905
    %2876 = vmatpush.bf16.msra.mxu0 %v1899
    %2877 = vmatmul.bf16.gmra.mxu0 %v186
    %v2878 = vpop.f32.mrf.mxu0
    %v2879 = vadd.f32 %v2865, %v2878
    %v2880 = vpop.f32.mrf.mxu0
    %v2881 = vadd.f32 %v2867, %v2880
    %2882 = vdwg.mxu0
    %2883 = vmatpush.bf16.msra.mxu0 %v1989
    %2884 = vmatpush.bf16.msra.mxu0 %v1983
    %2885 = vmatpush.bf16.msra.mxu0 %v1977
    %2886 = vmatpush.bf16.msra.mxu0 %v1971
    %2887 = vmatpush.bf16.msra.mxu0 %v1965
    %2888 = vmatpush.bf16.msra.mxu0 %v1959
    %2889 = vmatpush.bf16.msra.mxu0 %v1953
    %2890 = vmatpush.bf16.msra.mxu0 %v1947
    %2891 = vmatmul.bf16.gmra.mxu0 %v187
    %v2892 = vpop.f32.mrf.mxu0
    %v2893 = vadd.f32 %v2879, %v2892
    %v2894 = vpop.f32.mrf.mxu0
    %v2895 = vadd.f32 %v2881, %v2894
    %2896 = vdwg.mxu0
    %2897 = vmatpush.bf16.msra.mxu0 %v2037
    %2898 = vmatpush.bf16.msra.mxu0 %v2031
    %2899 = vmatpush.bf16.msra.mxu0 %v2025
    %2900 = vmatpush.bf16.msra.mxu0 %v2019
    %2901 = vmatpush.bf16.msra.mxu0 %v2013
    %2902 = vmatpush.bf16.msra.mxu0 %v2007
    %2903 = vmatpush.bf16.msra.mxu0 %v2001
    %2904 = vmatpush.bf16.msra.mxu0 %v1995
    %2905 = vmatmul.bf16.gmra.mxu0 %v188
    %v2906 = vpop.f32.mrf.mxu0
    %v2907 = vadd.f32 %v2893, %v2906
    %v2908 = vpop.f32.mrf.mxu0
    %v2909 = vadd.f32 %v2895, %v2908
    %2910 = vdwg.mxu0
    %2911 = vmatpush.bf16.msra.mxu0 0
    %2912 = vmatpush.bf16.msra.mxu0 %v2469
    %2913 = vmatpush.bf16.msra.mxu0 %v2073
    %2914 = vmatpush.bf16.msra.mxu0 %v2067
    %2915 = vmatpush.bf16.msra.mxu0 %v2061
    %2916 = vmatpush.bf16.msra.mxu0 %v2055
    %2917 = vmatpush.bf16.msra.mxu0 %v2049
    %2918 = vmatpush.bf16.msra.mxu0 %v2043
    %2919 = vmatmul.bf16.gmra.mxu0 %v2456
    %v2920 = vpop.f32.mrf.mxu0
    %v2921 = vadd.f32 %v2907, %v2920
    %v2922 = vpop.f32.mrf.mxu0
    %v2923 = vadd.f32 %v2909, %v2922
    %2924 = vdwg.mxu0
    %2925 = vmatpush.bf16.msra.mxu0 %v1750
    %2926 = vmatpush.bf16.msra.mxu0 %v1744
    %2927 = vmatpush.bf16.msra.mxu0 %v1738
    %2928 = vmatpush.bf16.msra.mxu0 %v1732
    %2929 = vmatpush.bf16.msra.mxu0 %v1726
    %2930 = vmatpush.bf16.msra.mxu0 %v1720
    %2931 = vmatpush.bf16.msra.mxu0 %v1714
    %2932 = vmatpush.bf16.msra.mxu0 %v1708
    %2933 = vmatmul.bf16.gmra.mxu0 %v182
    %v2934 = vpop.f32.mrf.mxu0
    %v2935 = vadd.f32 %v571, %v2934
    %v2936 = vpop.f32.mrf.mxu0
    %v2937 = vadd.f32 %v571, %v2936
    %2938 = vdwg.mxu0
    %2939 = vmatpush.bf16.msra.mxu0 %v1798
    %2940 = vmatpush.bf16.msra.mxu0 %v1792
    %2941 = vmatpush.bf16.msra.mxu0 %v1786
    %2942 = vmatpush.bf16.msra.mxu0 %v1780
    %2943 = vmatpush.bf16.msra.mxu0 %v1774
    %2944 = vmatpush.bf16.msra.mxu0 %v1768
    %2945 = vmatpush.bf16.msra.mxu0 %v1762
    %2946 = vmatpush.bf16.msra.mxu0 %v1756
    %2947 = vmatmul.bf16.gmra.mxu0 %v183
    %v2948 = vpop.f32.mrf.mxu0
    %v2949 = vadd.f32 %v2935, %v2948
    %v2950 = vpop.f32.mrf.mxu0
    %v2951 = vadd.f32 %v2937, %v2950
    %2952 = vdwg.mxu0
    %2953 = vmatpush.bf16.msra.mxu0 %v1846
    %2954 = vmatpush.bf16.msra.mxu0 %v1840
    %2955 = vmatpush.bf16.msra.mxu0 %v1834
    %2956 = vmatpush.bf16.msra.mxu0 %v1828
    %2957 = vmatpush.bf16.msra.mxu0 %v1822
    %2958 = vmatpush.bf16.msra.mxu0 %v1816
    %2959 = vmatpush.bf16.msra.mxu0 %v1810
    %2960 = vmatpush.bf16.msra.mxu0 %v1804
    %2961 = vmatmul.bf16.gmra.mxu0 %v184
    %v2962 = vpop.f32.mrf.mxu0
    %v2963 = vadd.f32 %v2949, %v2962
    %v2964 = vpop.f32.mrf.mxu0
    %v2965 = vadd.f32 %v2951, %v2964
    %2966 = vdwg.mxu0
    %2967 = vmatpush.bf16.msra.mxu0 %v1894
    %2968 = vmatpush.bf16.msra.mxu0 %v1888
    %2969 = vmatpush.bf16.msra.mxu0 %v1882
    %2970 = vmatpush.bf16.msra.mxu0 %v1876
    %2971 = vmatpush.bf16.msra.mxu0 %v1870
    %2972 = vmatpush.bf16.msra.mxu0 %v1864
    %2973 = vmatpush.bf16.msra.mxu0 %v1858
    %2974 = vmatpush.bf16.msra.mxu0 %v1852
    %2975 = vmatmul.bf16.gmra.mxu0 %v185
    %v2976 = vpop.f32.mrf.mxu0
    %v2977 = vadd.f32 %v2963, %v2976
    %v2978 = vpop.f32.mrf.mxu0
    %v2979 = vadd.f32 %v2965, %v2978
    %2980 = vdwg.mxu0
    %2981 = vmatpush.bf16.msra.mxu0 %v1942
    %2982 = vmatpush.bf16.msra.mxu0 %v1936
    %2983 = vmatpush.bf16.msra.mxu0 %v1930
    %2984 = vmatpush.bf16.msra.mxu0 %v1924
    %2985 = vmatpush.bf16.msra.mxu0 %v1918
    %2986 = vmatpush.bf16.msra.mxu0 %v1912
    %2987 = vmatpush.bf16.msra.mxu0 %v1906
    %2988 = vmatpush.bf16.msra.mxu0 %v1900
    %2989 = vmatmul.bf16.gmra.mxu0 %v186
    %v2990 = vpop.f32.mrf.mxu0
    %v2991 = vadd.f32 %v2977, %v2990
    %v2992 = vpop.f32.mrf.mxu0
    %v2993 = vadd.f32 %v2979, %v2992
    %2994 = vdwg.mxu0
    %2995 = vmatpush.bf16.msra.mxu0 %v1990
    %2996 = vmatpush.bf16.msra.mxu0 %v1984
    %2997 = vmatpush.bf16.msra.mxu0 %v1978
    %2998 = vmatpush.bf16.msra.mxu0 %v1972
    %2999 = vmatpush.bf16.msra.mxu0 %v1966
    %3000 = vmatpush.bf16.msra.mxu0 %v1960
    %3001 = vmatpush.bf16.msra.mxu0 %v1954
    %3002 = vmatpush.bf16.msra.mxu0 %v1948
    %3003 = vmatmul.bf16.gmra.mxu0 %v187
    %v3004 = vpop.f32.mrf.mxu0
    %v3005 = vadd.f32 %v2991, %v3004
    %v3006 = vpop.f32.mrf.mxu0
    %v3007 = vadd.f32 %v2993, %v3006
    %3008 = vdwg.mxu0
    %3009 = vmatpush.bf16.msra.mxu0 %v2038
    %3010 = vmatpush.bf16.msra.mxu0 %v2032
    %3011 = vmatpush.bf16.msra.mxu0 %v2026
    %3012 = vmatpush.bf16.msra.mxu0 %v2020
    %3013 = vmatpush.bf16.msra.mxu0 %v2014
    %3014 = vmatpush.bf16.msra.mxu0 %v2008
    %3015 = vmatpush.bf16.msra.mxu0 %v2002
    %3016 = vmatpush.bf16.msra.mxu0 %v1996
    %3017 = vmatmul.bf16.gmra.mxu0 %v188
    %v3018 = vpop.f32.mrf.mxu0
    %v3019 = vadd.f32 %v3005, %v3018
    %v3020 = vpop.f32.mrf.mxu0
    %v3021 = vadd.f32 %v3007, %v3020
    %3022 = vdwg.mxu0
    %3023 = vmatpush.bf16.msra.mxu0 0
    %3024 = vmatpush.bf16.msra.mxu0 %v2472
    %3025 = vmatpush.bf16.msra.mxu0 %v2074
    %3026 = vmatpush.bf16.msra.mxu0 %v2068
    %3027 = vmatpush.bf16.msra.mxu0 %v2062
    %3028 = vmatpush.bf16.msra.mxu0 %v2056
    %3029 = vmatpush.bf16.msra.mxu0 %v2050
    %3030 = vmatpush.bf16.msra.mxu0 %v2044
    %3031 = vmatmul.bf16.gmra.mxu0 %v2456
    %v3032 = vpop.f32.mrf.mxu0
    %v3033 = vadd.f32 %v3019, %v3032
    %v3034 = vpop.f32.mrf.mxu0
    %v3035 = vadd.f32 %v3021, %v3034
    %3036 = vdwg.mxu0
    %3037 = vmatpush.bf16.msra.mxu0 %v1751
    %3038 = vmatpush.bf16.msra.mxu0 %v1745
    %3039 = vmatpush.bf16.msra.mxu0 %v1739
    %3040 = vmatpush.bf16.msra.mxu0 %v1733
    %3041 = vmatpush.bf16.msra.mxu0 %v1727
    %3042 = vmatpush.bf16.msra.mxu0 %v1721
    %3043 = vmatpush.bf16.msra.mxu0 %v1715
    %3044 = vmatpush.bf16.msra.mxu0 %v1709
    %3045 = vmatmul.bf16.gmra.mxu0 %v182
    %v3046 = vpop.f32.mrf.mxu0
    %v3047 = vadd.f32 %v572, %v3046
    %v3048 = vpop.f32.mrf.mxu0
    %v3049 = vadd.f32 %v572, %v3048
    %3050 = vdwg.mxu0
    %3051 = vmatpush.bf16.msra.mxu0 %v1799
    %3052 = vmatpush.bf16.msra.mxu0 %v1793
    %3053 = vmatpush.bf16.msra.mxu0 %v1787
    %3054 = vmatpush.bf16.msra.mxu0 %v1781
    %3055 = vmatpush.bf16.msra.mxu0 %v1775
    %3056 = vmatpush.bf16.msra.mxu0 %v1769
    %3057 = vmatpush.bf16.msra.mxu0 %v1763
    %3058 = vmatpush.bf16.msra.mxu0 %v1757
    %3059 = vmatmul.bf16.gmra.mxu0 %v183
    %v3060 = vpop.f32.mrf.mxu0
    %v3061 = vadd.f32 %v3047, %v3060
    %v3062 = vpop.f32.mrf.mxu0
    %v3063 = vadd.f32 %v3049, %v3062
    %3064 = vdwg.mxu0
    %3065 = vmatpush.bf16.msra.mxu0 %v1847
    %3066 = vmatpush.bf16.msra.mxu0 %v1841
    %3067 = vmatpush.bf16.msra.mxu0 %v1835
    %3068 = vmatpush.bf16.msra.mxu0 %v1829
    %3069 = vmatpush.bf16.msra.mxu0 %v1823
    %3070 = vmatpush.bf16.msra.mxu0 %v1817
    %3071 = vmatpush.bf16.msra.mxu0 %v1811
    %3072 = vmatpush.bf16.msra.mxu0 %v1805
    %3073 = vmatmul.bf16.gmra.mxu0 %v184
    %v3074 = vpop.f32.mrf.mxu0
    %v3075 = vadd.f32 %v3061, %v3074
    %v3076 = vpop.f32.mrf.mxu0
    %v3077 = vadd.f32 %v3063, %v3076
    %3078 = vdwg.mxu0
    %3079 = vmatpush.bf16.msra.mxu0 %v1895
    %3080 = vmatpush.bf16.msra.mxu0 %v1889
    %3081 = vmatpush.bf16.msra.mxu0 %v1883
    %3082 = vmatpush.bf16.msra.mxu0 %v1877
    %3083 = vmatpush.bf16.msra.mxu0 %v1871
    %3084 = vmatpush.bf16.msra.mxu0 %v1865
    %3085 = vmatpush.bf16.msra.mxu0 %v1859
    %3086 = vmatpush.bf16.msra.mxu0 %v1853
    %3087 = vmatmul.bf16.gmra.mxu0 %v185
    %v3088 = vpop.f32.mrf.mxu0
    %v3089 = vadd.f32 %v3075, %v3088
    %v3090 = vpop.f32.mrf.mxu0
    %v3091 = vadd.f32 %v3077, %v3090
    %3092 = vdwg.mxu0
    %3093 = vmatpush.bf16.msra.mxu0 %v1943
    %3094 = vmatpush.bf16.msra.mxu0 %v1937
    %3095 = vmatpush.bf16.msra.mxu0 %v1931
    %3096 = vmatpush.bf16.msra.mxu0 %v1925
    %3097 = vmatpush.bf16.msra.mxu0 %v1919
    %3098 = vmatpush.bf16.msra.mxu0 %v1913
    %3099 = vmatpush.bf16.msra.mxu0 %v1907
    %3100 = vmatpush.bf16.msra.mxu0 %v1901
    %3101 = vmatmul.bf16.gmra.mxu0 %v186
    %v3102 = vpop.f32.mrf.mxu0
    %v3103 = vadd.f32 %v3089, %v3102
    %v3104 = vpop.f32.mrf.mxu0
    %v3105 = vadd.f32 %v3091, %v3104
    %3106 = vdwg.mxu0
    %3107 = vmatpush.bf16.msra.mxu0 %v1991
    %3108 = vmatpush.bf16.msra.mxu0 %v1985
    %3109 = vmatpush.bf16.msra.mxu0 %v1979
    %3110 = vmatpush.bf16.msra.mxu0 %v1973
    %3111 = vmatpush.bf16.msra.mxu0 %v1967
    %3112 = vmatpush.bf16.msra.mxu0 %v1961
    %3113 = vmatpush.bf16.msra.mxu0 %v1955
    %3114 = vmatpush.bf16.msra.mxu0 %v1949
    %3115 = vmatmul.bf16.gmra.mxu0 %v187
    %v3116 = vpop.f32.mrf.mxu0
    %v3117 = vadd.f32 %v3103, %v3116
    %v3118 = vpop.f32.mrf.mxu0
    %v3119 = vadd.f32 %v3105, %v3118
    %3120 = vdwg.mxu0
    %3121 = vmatpush.bf16.msra.mxu0 %v2039
    %3122 = vmatpush.bf16.msra.mxu0 %v2033
    %3123 = vmatpush.bf16.msra.mxu0 %v2027
    %3124 = vmatpush.bf16.msra.mxu0 %v2021
    %3125 = vmatpush.bf16.msra.mxu0 %v2015
    %3126 = vmatpush.bf16.msra.mxu0 %v2009
    %3127 = vmatpush.bf16.msra.mxu0 %v2003
    %3128 = vmatpush.bf16.msra.mxu0 %v1997
    %3129 = vmatmul.bf16.gmra.mxu0 %v188
    %v3130 = vpop.f32.mrf.mxu0
    %v3131 = vadd.f32 %v3117, %v3130
    %v3132 = vpop.f32.mrf.mxu0
    %v3133 = vadd.f32 %v3119, %v3132
    %3134 = vdwg.mxu0
    %3135 = vmatpush.bf16.msra.mxu0 0
    %3136 = vmatpush.bf16.msra.mxu0 %v2475
    %3137 = vmatpush.bf16.msra.mxu0 %v2075
    %3138 = vmatpush.bf16.msra.mxu0 %v2069
    %3139 = vmatpush.bf16.msra.mxu0 %v2063
    %3140 = vmatpush.bf16.msra.mxu0 %v2057
    %3141 = vmatpush.bf16.msra.mxu0 %v2051
    %3142 = vmatpush.bf16.msra.mxu0 %v2045
    %3143 = vmatmul.bf16.gmra.mxu0 %v2456
    %v3144 = vpop.f32.mrf.mxu0
    %v3145 = vadd.f32 %v3131, %v3144
    %v3146 = vpop.f32.mrf.mxu0
    %v3147 = vadd.f32 %v3133, %v3146
    %3148 = vdwg.mxu0
    %v3149 = vmax.f32 %v2585, 0.0
    %v3150 = vmax.f32 %v2697, 0.0
    %v3151 = vmax.f32 %v2809, 0.0
    %v3152 = vmax.f32 %v2921, 0.0
    %v3153 = vmax.f32 %v3033, 0.0
    %v3154 = vmax.f32 %v3145, 0.0
    %v3155 = vmax.f32 %v2587, 0.0
    %v3156 = vmax.f32 %v2699, 0.0
    %v3157 = vmax.f32 %v2811, 0.0
    %v3158 = vmax.f32 %v2923, 0.0
    %v3159 = vmax.f32 %v3035, 0.0
    %v3160 = vmax.f32 %v3147, 0.0
    %v3161 = vpack.c.bf16 %v3155, %v3149
    %v3162 = vpack.c.bf16 %v3156, %v3150
    %v3163 = vpack.c.bf16 %v3157, %v3151
    %v3164 = vpack.c.bf16 %v3158, %v3152
    %v3165 = vpack.c.bf16 %v3159, %v3153
    %v3166 = vpack.c.bf16 %v3160, %v3154
    %v3167 = vld [vmem:[#allocation7] sm:$0xf]
    %v3168 = vld [vmem:[#allocation7 + $0x4] sm:$0xf]
    %v3169 = vld [vmem:[#allocation7 + $0x8] sm:$0xf]
    %v3170 = vld [vmem:[#allocation7 + $0xc] sm:$0xf]
    %v3171 = vld [vmem:[#allocation7 + $0x10] sm:$0xf]
    %v3172 = vld [vmem:[#allocation7 + $0x14] sm:$0xf]
    %v3173 = vld [vmem:[#allocation7 + $0x18] sm:$0xf]
    %v3174 = vld [vmem:[#allocation7 + $0x1c] sm:$0xf]
    %v3175 = vld [vmem:[#allocation7 + $0x20] sm:$0xf]
    %v3176 = vld [vmem:[#allocation7 + $0x24] sm:$0xf]
    %v3177 = vld [vmem:[#allocation7 + $0x28] sm:$0xf]
    %v3178 = vld [vmem:[#allocation7 + $0x2c] sm:$0xf]
    %v3179 = vld [vmem:[#allocation7 + $0x30] sm:$0xf]
    %v3180 = vld [vmem:[#allocation7 + $0x34] sm:$0xf]
    %v3181 = vld [vmem:[#allocation7 + $0x38] sm:$0xf]
    %v3182 = vld [vmem:[#allocation7 + $0x3c] sm:$0xf]
    %v3183 = vld [vmem:[#allocation7 + $0x40] sm:$0xf]
    %v3184 = vld [vmem:[#allocation7 + $0x44] sm:$0xf]
    %v3185 = vld [vmem:[#allocation7 + $0x48] sm:$0xf]
    %v3186 = vld [vmem:[#allocation7 + $0x4c] sm:$0xf]
    %v3187 = vld [vmem:[#allocation7 + $0x50] sm:$0xf]
    %v3188 = vld [vmem:[#allocation7 + $0x54] sm:$0xf]
    %v3189 = vld [vmem:[#allocation7 + $0x58] sm:$0xf]
    %v3190 = vld [vmem:[#allocation7 + $0x5c] sm:$0xf]
    %v3191 = vld [vmem:[#allocation7 + $0x60] sm:$0xf]
    %v3192 = vld [vmem:[#allocation7 + $0x64] sm:$0xf]
    %v3193 = vld [vmem:[#allocation7 + $0x68] sm:$0xf]
    %v3194 = vld [vmem:[#allocation7 + $0x6c] sm:$0xf]
    %v3195 = vld [vmem:[#allocation7 + $0x70] sm:$0xf]
    %v3196 = vld [vmem:[#allocation7 + $0x74] sm:$0xf]
    %v3197 = vld [vmem:[#allocation7 + $0x78] sm:$0xf]
    %v3198 = vld [vmem:[#allocation7 + $0x7c] sm:$0xf]
    %v3199 = vld [vmem:[#allocation7 + $0x80] sm:$0xf]
    %v3200 = vld [vmem:[#allocation7 + $0x84] sm:$0xf]
    %v3201 = vld [vmem:[#allocation7 + $0x88] sm:$0xf]
    %v3202 = vld [vmem:[#allocation7 + $0x8c] sm:$0xf]
    %v3203 = vld [vmem:[#allocation7 + $0x90] sm:$0xf]
    %v3204 = vld [vmem:[#allocation7 + $0x94] sm:$0xf]
    %v3205 = vld [vmem:[#allocation7 + $0x98] sm:$0xf]
    %v3206 = vld [vmem:[#allocation7 + $0x9c] sm:$0xf]
    %v3207 = vld [vmem:[#allocation7 + $0xa0] sm:$0xf]
    %v3208 = vld [vmem:[#allocation7 + $0xa4] sm:$0xf]
    %v3209 = vld [vmem:[#allocation7 + $0xa8] sm:$0xf]
    %v3210 = vld [vmem:[#allocation7 + $0xac] sm:$0xf]
    %v3211 = vld [vmem:[#allocation7 + $0xb0] sm:$0xf]
    %v3212 = vld [vmem:[#allocation7 + $0xb4] sm:$0xf]
    %v3213 = vld [vmem:[#allocation7 + $0xb8] sm:$0xf]
    %v3214 = vld [vmem:[#allocation7 + $0xbc] sm:$0xf]
    %v3215 = vld [vmem:[#allocation7 + $0xc0] sm:$0xf]
    %v3216 = vld [vmem:[#allocation7 + $0xc4] sm:$0xf]
    %v3217 = vld [vmem:[#allocation7 + $0xc8] sm:$0xf]
    %v3218 = vld [vmem:[#allocation7 + $0xcc] sm:$0xf]
    %v3219 = vld [vmem:[#allocation7 + $0xd0] sm:$0xf]
    %v3220 = vld [vmem:[#allocation7 + $0xd4] sm:$0xf]
    %v3221 = vld [vmem:[#allocation7 + $0xd8] sm:$0xf]
    %v3222 = vld [vmem:[#allocation7 + $0xdc] sm:$0xf]
    %v3223 = vld [vmem:[#allocation7 + $0xe0] sm:$0xf]
    %v3224 = vld [vmem:[#allocation7 + $0xe4] sm:$0xf]
    %v3225 = vld [vmem:[#allocation7 + $0xe8] sm:$0xf]
    %v3226 = vld [vmem:[#allocation7 + $0xec] sm:$0xf]
    %v3227 = vld [vmem:[#allocation7 + $0xf0] sm:$0xf]
    %v3228 = vld [vmem:[#allocation7 + $0xf4] sm:$0xf]
    %v3229 = vld [vmem:[#allocation7 + $0xf8] sm:$0xf]
    %v3230 = vld [vmem:[#allocation7 + $0xfc] sm:$0xf]
    %v3231 = vld [vmem:[#allocation7 + $0x100] sm:$0xf]
    %v3232 = vld [vmem:[#allocation7 + $0x104] sm:$0xf]
    %v3233 = vld [vmem:[#allocation7 + $0x108] sm:$0xf]
    %v3234 = vld [vmem:[#allocation7 + $0x10c] sm:$0xf]
    %v3235 = vld [vmem:[#allocation7 + $0x110] sm:$0xf]
    %v3236 = vld [vmem:[#allocation7 + $0x114] sm:$0xf]
    %v3237 = vld [vmem:[#allocation7 + $0x118] sm:$0xf]
    %v3238 = vld [vmem:[#allocation7 + $0x11c] sm:$0xf]
    %v3239 = vld [vmem:[#allocation7 + $0x120] sm:$0xf]
    %v3240 = vld [vmem:[#allocation7 + $0x124] sm:$0xf]
    %v3241 = vld [vmem:[#allocation7 + $0x128] sm:$0xf]
    %v3242 = vld [vmem:[#allocation7 + $0x12c] sm:$0xf]
    %v3243 = vld [vmem:[#allocation7 + $0x130] sm:$0xf]
    %v3244 = vld [vmem:[#allocation7 + $0x134] sm:$0xf]
    %v3245 = vld [vmem:[#allocation7 + $0x138] sm:$0xf]
    %v3246 = vld [vmem:[#allocation7 + $0x13c] sm:$0xf]
    %v3247 = vld [vmem:[#allocation7 + $0x140] sm:$0xf]
    %v3248 = vld [vmem:[#allocation7 + $0x144] sm:$0xf]
    %v3249 = vld [vmem:[#allocation7 + $0x148] sm:$0xf]
    %v3250 = vld [vmem:[#allocation7 + $0x14c] sm:$0xf]
    %v3251 = vld [vmem:[#allocation7 + $0x150] sm:$0xf]
    %v3252 = vld [vmem:[#allocation7 + $0x154] sm:$0xf]
    %v3253 = vld [vmem:[#allocation7 + $0x158] sm:$0xf]
    %v3254 = vld [vmem:[#allocation7 + $0x15c] sm:$0xf]
    %v3255 = vld [vmem:[#allocation7 + $0x160] sm:$0xf]
    %v3256 = vld [vmem:[#allocation7 + $0x164] sm:$0xf]
    %v3257 = vld [vmem:[#allocation7 + $0x168] sm:$0xf]
    %v3258 = vld [vmem:[#allocation7 + $0x16c] sm:$0xf]
    %v3259 = vld [vmem:[#allocation7 + $0x170] sm:$0xf]
    %v3260 = vld [vmem:[#allocation7 + $0x174] sm:$0xf]
    %v3261 = vld [vmem:[#allocation7 + $0x178] sm:$0xf]
    %v3262 = vld [vmem:[#allocation7 + $0x17c] sm:$0xf]
    %v3263 = vld [vmem:[#allocation9] sm:$0x1]
    %v3265 = vperm.slane %v3263, 0
    %v3363 = vunpack.c.l.b16 %v3167
    %v3364 = vunpack.c.l.b16 %v3168
    %v3365 = vunpack.c.l.b16 %v3169
    %v3366 = vunpack.c.l.b16 %v3170
    %v3367 = vunpack.c.l.b16 %v3171
    %v3368 = vunpack.c.l.b16 %v3172
    %v3369 = vunpack.c.l.b16 %v3173
    %v3370 = vunpack.c.l.b16 %v3174
    %v3371 = vunpack.c.l.b16 %v3175
    %v3372 = vunpack.c.l.b16 %v3176
    %v3373 = vunpack.c.l.b16 %v3177
    %v3374 = vunpack.c.l.b16 %v3178
    %v3375 = vunpack.c.l.b16 %v3179
    %v3376 = vunpack.c.l.b16 %v3180
    %v3377 = vunpack.c.l.b16 %v3181
    %v3378 = vunpack.c.l.b16 %v3182
    %v3379 = vunpack.c.l.b16 %v3183
    %v3380 = vunpack.c.l.b16 %v3184
    %v3381 = vunpack.c.l.b16 %v3185
    %v3382 = vunpack.c.l.b16 %v3186
    %v3383 = vunpack.c.l.b16 %v3187
    %v3384 = vunpack.c.l.b16 %v3188
    %v3385 = vunpack.c.l.b16 %v3189
    %v3386 = vunpack.c.l.b16 %v3190
    %v3387 = vunpack.c.l.b16 %v3191
    %v3388 = vunpack.c.l.b16 %v3192
    %v3389 = vunpack.c.l.b16 %v3193
    %v3390 = vunpack.c.l.b16 %v3194
    %v3391 = vunpack.c.l.b16 %v3195
    %v3392 = vunpack.c.l.b16 %v3196
    %v3393 = vunpack.c.l.b16 %v3197
    %v3394 = vunpack.c.l.b16 %v3198
    %v3395 = vunpack.c.l.b16 %v3199
    %v3396 = vunpack.c.l.b16 %v3200
    %v3397 = vunpack.c.l.b16 %v3201
    %v3398 = vunpack.c.l.b16 %v3202
    %v3399 = vunpack.c.l.b16 %v3203
    %v3400 = vunpack.c.l.b16 %v3204
    %v3401 = vunpack.c.l.b16 %v3205
    %v3402 = vunpack.c.l.b16 %v3206
    %v3403 = vunpack.c.l.b16 %v3207
    %v3404 = vunpack.c.l.b16 %v3208
    %v3405 = vunpack.c.l.b16 %v3209
    %v3406 = vunpack.c.l.b16 %v3210
    %v3407 = vunpack.c.l.b16 %v3211
    %v3408 = vunpack.c.l.b16 %v3212
    %v3409 = vunpack.c.l.b16 %v3213
    %v3410 = vunpack.c.l.b16 %v3214
    %v3411 = vunpack.c.l.b16 %v3215
    %v3412 = vunpack.c.l.b16 %v3216
    %v3413 = vunpack.c.l.b16 %v3217
    %v3414 = vunpack.c.l.b16 %v3218
    %v3415 = vunpack.c.l.b16 %v3219
    %v3416 = vunpack.c.l.b16 %v3220
    %v3417 = vunpack.c.l.b16 %v3221
    %v3418 = vunpack.c.l.b16 %v3222
    %v3419 = vunpack.c.l.b16 %v3223
    %v3420 = vunpack.c.l.b16 %v3224
    %v3421 = vunpack.c.l.b16 %v3225
    %v3422 = vunpack.c.l.b16 %v3226
    %v3423 = vunpack.c.l.b16 %v3227
    %v3424 = vunpack.c.l.b16 %v3228
    %v3425 = vunpack.c.l.b16 %v3229
    %v3426 = vunpack.c.l.b16 %v3230
    %v3427 = vunpack.c.l.b16 %v3231
    %v3428 = vunpack.c.l.b16 %v3232
    %v3429 = vunpack.c.l.b16 %v3233
    %v3430 = vunpack.c.l.b16 %v3234
    %v3431 = vunpack.c.l.b16 %v3235
    %v3432 = vunpack.c.l.b16 %v3236
    %v3433 = vunpack.c.l.b16 %v3237
    %v3434 = vunpack.c.l.b16 %v3238
    %v3435 = vunpack.c.l.b16 %v3239
    %v3436 = vunpack.c.l.b16 %v3240
    %v3437 = vunpack.c.l.b16 %v3241
    %v3438 = vunpack.c.l.b16 %v3242
    %v3439 = vunpack.c.l.b16 %v3243
    %v3440 = vunpack.c.l.b16 %v3244
    %v3441 = vunpack.c.l.b16 %v3245
    %v3442 = vunpack.c.l.b16 %v3246
    %v3443 = vunpack.c.l.b16 %v3247
    %v3444 = vunpack.c.l.b16 %v3248
    %v3445 = vunpack.c.l.b16 %v3249
    %v3446 = vunpack.c.l.b16 %v3250
    %v3447 = vunpack.c.l.b16 %v3251
    %v3448 = vunpack.c.l.b16 %v3252
    %v3449 = vunpack.c.l.b16 %v3253
    %v3450 = vunpack.c.l.b16 %v3254
    %v3451 = vunpack.c.l.b16 %v3255
    %v3452 = vunpack.c.l.b16 %v3256
    %v3453 = vunpack.c.l.b16 %v3257
    %v3454 = vunpack.c.l.b16 %v3258
    %v3455 = vunpack.c.l.b16 %v3259
    %v3456 = vunpack.c.l.b16 %v3260
    %v3457 = vunpack.c.l.b16 %v3261
    %v3458 = vunpack.c.l.b16 %v3262
    %v3459 = vpack.c.b16 %v3364, %v3363
    %v3460 = vpack.c.b16 %v3366, %v3365
    %v3461 = vpack.c.b16 %v3368, %v3367
    %v3462 = vpack.c.b16 %v3370, %v3369
    %v3463 = vpack.c.b16 %v3372, %v3371
    %v3464 = vpack.c.b16 %v3374, %v3373
    %v3465 = vpack.c.b16 %v3376, %v3375
    %v3466 = vpack.c.b16 %v3378, %v3377
    %v3467 = vpack.c.b16 %v3380, %v3379
    %v3468 = vpack.c.b16 %v3382, %v3381
    %v3469 = vpack.c.b16 %v3384, %v3383
    %v3470 = vpack.c.b16 %v3386, %v3385
    %v3471 = vpack.c.b16 %v3388, %v3387
    %v3472 = vpack.c.b16 %v3390, %v3389
    %v3473 = vpack.c.b16 %v3392, %v3391
    %v3474 = vpack.c.b16 %v3394, %v3393
    %v3475 = vpack.c.b16 %v3396, %v3395
    %v3476 = vpack.c.b16 %v3398, %v3397
    %v3477 = vpack.c.b16 %v3400, %v3399
    %v3478 = vpack.c.b16 %v3402, %v3401
    %v3479 = vpack.c.b16 %v3404, %v3403
    %v3480 = vpack.c.b16 %v3406, %v3405
    %v3481 = vpack.c.b16 %v3408, %v3407
    %v3482 = vpack.c.b16 %v3410, %v3409
    %v3483 = vpack.c.b16 %v3412, %v3411
    %v3484 = vpack.c.b16 %v3414, %v3413
    %v3485 = vpack.c.b16 %v3416, %v3415
    %v3486 = vpack.c.b16 %v3418, %v3417
    %v3487 = vpack.c.b16 %v3420, %v3419
    %v3488 = vpack.c.b16 %v3422, %v3421
    %v3489 = vpack.c.b16 %v3424, %v3423
    %v3490 = vpack.c.b16 %v3426, %v3425
    %v3491 = vpack.c.b16 %v3428, %v3427
    %v3492 = vpack.c.b16 %v3430, %v3429
    %v3493 = vpack.c.b16 %v3432, %v3431
    %v3494 = vpack.c.b16 %v3434, %v3433
    %v3495 = vpack.c.b16 %v3436, %v3435
    %v3496 = vpack.c.b16 %v3438, %v3437
    %v3497 = vpack.c.b16 %v3440, %v3439
    %v3498 = vpack.c.b16 %v3442, %v3441
    %v3499 = vpack.c.b16 %v3444, %v3443
    %v3500 = vpack.c.b16 %v3446, %v3445
    %v3501 = vpack.c.b16 %v3448, %v3447
    %v3502 = vpack.c.b16 %v3450, %v3449
    %v3503 = vpack.c.b16 %v3452, %v3451
    %v3504 = vpack.c.b16 %v3454, %v3453
    %v3505 = vpack.c.b16 %v3456, %v3455
    %v3506 = vpack.c.b16 %v3458, %v3457
    %3555 = vmatpush.bf16.msra.mxu0 %v3466
    %3556 = vmatpush.bf16.msra.mxu0 %v3465
    %3557 = vmatpush.bf16.msra.mxu0 %v3464
    %3558 = vmatpush.bf16.msra.mxu0 %v3463
    %3559 = vmatpush.bf16.msra.mxu0 %v3462
    %3560 = vmatpush.bf16.msra.mxu0 %v3461
    %3561 = vmatpush.bf16.msra.mxu0 %v3460
    %3562 = vmatpush.bf16.msra.mxu0 %v3459
    %3563 = vmatmul.bf16.gmra.mxu0 %v3161
    %v3564 = vpop.f32.mrf.mxu0
    %v3565 = vadd.f32 %v3265, %v3564
    %v3566 = vpop.f32.mrf.mxu0
    %v3567 = vadd.f32 %v3265, %v3566
    %3568 = vdwg.mxu0
    %3569 = vmatpush.bf16.msra.mxu0 %v3474
    %3570 = vmatpush.bf16.msra.mxu0 %v3473
    %3571 = vmatpush.bf16.msra.mxu0 %v3472
    %3572 = vmatpush.bf16.msra.mxu0 %v3471
    %3573 = vmatpush.bf16.msra.mxu0 %v3470
    %3574 = vmatpush.bf16.msra.mxu0 %v3469
    %3575 = vmatpush.bf16.msra.mxu0 %v3468
    %3576 = vmatpush.bf16.msra.mxu0 %v3467
    %3577 = vmatmul.bf16.gmra.mxu0 %v3162
    %v3578 = vpop.f32.mrf.mxu0
    %v3579 = vadd.f32 %v3565, %v3578
    %v3580 = vpop.f32.mrf.mxu0
    %v3581 = vadd.f32 %v3567, %v3580
    %3582 = vdwg.mxu0
    %3583 = vmatpush.bf16.msra.mxu0 %v3482
    %3584 = vmatpush.bf16.msra.mxu0 %v3481
    %3585 = vmatpush.bf16.msra.mxu0 %v3480
    %3586 = vmatpush.bf16.msra.mxu0 %v3479
    %3587 = vmatpush.bf16.msra.mxu0 %v3478
    %3588 = vmatpush.bf16.msra.mxu0 %v3477
    %3589 = vmatpush.bf16.msra.mxu0 %v3476
    %3590 = vmatpush.bf16.msra.mxu0 %v3475
    %3591 = vmatmul.bf16.gmra.mxu0 %v3163
    %v3592 = vpop.f32.mrf.mxu0
    %v3593 = vadd.f32 %v3579, %v3592
    %v3594 = vpop.f32.mrf.mxu0
    %v3595 = vadd.f32 %v3581, %v3594
    %3596 = vdwg.mxu0
    %3597 = vmatpush.bf16.msra.mxu0 %v3490
    %3598 = vmatpush.bf16.msra.mxu0 %v3489
    %3599 = vmatpush.bf16.msra.mxu0 %v3488
    %3600 = vmatpush.bf16.msra.mxu0 %v3487
    %3601 = vmatpush.bf16.msra.mxu0 %v3486
    %3602 = vmatpush.bf16.msra.mxu0 %v3485
    %3603 = vmatpush.bf16.msra.mxu0 %v3484
    %3604 = vmatpush.bf16.msra.mxu0 %v3483
    %3605 = vmatmul.bf16.gmra.mxu0 %v3164
    %v3606 = vpop.f32.mrf.mxu0
    %v3607 = vadd.f32 %v3593, %v3606
    %v3608 = vpop.f32.mrf.mxu0
    %v3609 = vadd.f32 %v3595, %v3608
    %3610 = vdwg.mxu0
    %3611 = vmatpush.bf16.msra.mxu0 %v3498
    %3612 = vmatpush.bf16.msra.mxu0 %v3497
    %3613 = vmatpush.bf16.msra.mxu0 %v3496
    %3614 = vmatpush.bf16.msra.mxu0 %v3495
    %3615 = vmatpush.bf16.msra.mxu0 %v3494
    %3616 = vmatpush.bf16.msra.mxu0 %v3493
    %3617 = vmatpush.bf16.msra.mxu0 %v3492
    %3618 = vmatpush.bf16.msra.mxu0 %v3491
    %3619 = vmatmul.bf16.gmra.mxu0 %v3165
    %v3620 = vpop.f32.mrf.mxu0
    %v3621 = vadd.f32 %v3607, %v3620
    %v3622 = vpop.f32.mrf.mxu0
    %v3623 = vadd.f32 %v3609, %v3622
    %3624 = vdwg.mxu0
    %3625 = vmatpush.bf16.msra.mxu0 %v3506
    %3626 = vmatpush.bf16.msra.mxu0 %v3505
    %3627 = vmatpush.bf16.msra.mxu0 %v3504
    %3628 = vmatpush.bf16.msra.mxu0 %v3503
    %3629 = vmatpush.bf16.msra.mxu0 %v3502
    %3630 = vmatpush.bf16.msra.mxu0 %v3501
    %3631 = vmatpush.bf16.msra.mxu0 %v3500
    %3632 = vmatpush.bf16.msra.mxu0 %v3499
    %3633 = vmatmul.bf16.gmra.mxu0 %v3166
    %v3634 = vpop.f32.mrf.mxu0
    %v3635 = vadd.f32 %v3621, %v3634
    %v3636 = vpop.f32.mrf.mxu0
    %v3637 = vadd.f32 %v3623, %v3636
    %3638 = vdwg.mxu0
    %v3639 = vlaneseq
    %v3640 = vand.u32 %v3639, 127
    %vm3641 = vcmp.ge.s32.totalorder %v3640, 20
    %vm3642 = vcmp.lt.s32.totalorder %v3640, 25
    %vm3643 = vmand %vm3641, %vm3642
    %v3644 = vsel %vm3643, %v3635, -inf
    %v3645 = vsel %vm3643, %v3637, -inf
    %3646 = vmax.xlane.f32.xlu0 %v3644
    %v3647 = vpop.xlane.xlu0 %3646
    %3648 = vmax.xlane.f32.xlu0 %v3645
    %v3649 = vpop.xlane.xlu0 %3648
    %v3650 = vsub.f32 %v3644, %v3647
    %v3651 = vsub.f32 %v3645, %v3649
    %v3652 = vmul.f32 %v3650, 1.442695
    %v3653 = vpow.pop %v3652
    %v3654 = vmul.f32 %v3651, 1.442695
    %v3655 = vpow.pop %v3654
    %3656 = vadd.xlane.f32.xlu0 %v3653
    %v3657 = vpop.xlane.xlu0 %3656
    %3658 = vadd.xlane.f32.xlu0 %v3655
    %v3659 = vpop.xlane.xlu0 %3658
    %v3660 = vrcp.pop %v3657
    %v3661 = vmul.f32 %v3657, %v3660
    %v3662 = vsub.f32 1.0, %v3661
    %v3663 = vmul.f32 %v3660, %v3662
    %v3664 = vadd.f32 %v3660, %v3663
    %vm3665 = vweird.f32 %v3657
    %vm3666 = vweird.f32 %v3660
    %vm3667 = vmor %vm3665, %vm3666
    %v3668 = vsel %vm3667, %v3660, %v3664
    %v3669 = vand.u32 2147483647, %v3657
    %vm3670 = vcmp.eq.f32.partialorder %v3669, 8.507059e+37
    %v3671 = vand.u32 %v3657, 2147483648
    %v3672 = vor.u32 1.1754944e-38, %v3671
    %v3673 = vsel %vm3670, %v3672, %v3668
    %v3674 = vrcp.pop %v3659
    %v3675 = vmul.f32 %v3659, %v3674
    %v3676 = vsub.f32 1.0, %v3675
    %v3677 = vmul.f32 %v3674, %v3676
    %v3678 = vadd.f32 %v3674, %v3677
    %vm3679 = vweird.f32 %v3659
    %vm3680 = vweird.f32 %v3674
    %vm3681 = vmor %vm3679, %vm3680
    %v3682 = vsel %vm3681, %v3674, %v3678
    %v3683 = vand.u32 2147483647, %v3659
    %vm3684 = vcmp.eq.f32.partialorder %v3683, 8.507059e+37
    %v3685 = vand.u32 %v3659, 2147483648
    %v3686 = vor.u32 1.1754944e-38, %v3685
    %v3687 = vsel %vm3684, %v3686, %v3682
    %v3688 = vmul.f32 %v3653, %v3673
    %v3689 = vmul.f32 %v3655, %v3687
    %v3690 = vsel %vm3643, %v3688, %v3635
    %v3691 = vsel %vm3643, %v3689, %v3637
    %3692 = vst [vmem:[#allocation10] sm:$0xff] %v3690
    %3693 = vst [vmem:[#allocation10 + $0x8] sm:$0xff] %v3691
    // Predicated region
    $region42: #{fire_detection_heads.1} parent=1 // pred_check
      _
    $region43: #{fire_detection_heads.1} parent=1 // pred_check_branch
      %3695 = sbr.rel (0) target = $region45
    $region44: #{fire_detection_heads.1} parent=1 // pred_region
      // Predicated region
      $region46: #{fire_detection_heads.1} parent=44 // pred_check
        _
      $region47: #{fire_detection_heads.1} parent=44 // pred_check_branch
        %3697 = sbr.rel (0) target = $region49
      $region48: #{fire_detection_heads.1} parent=44 // pred_region
        // Predicated region
        $region50: #{fire_detection_heads.1} parent=48 // pred_check
          _
        $region51: #{fire_detection_heads.1} parent=48 // pred_check_branch
          %3699 = sbr.rel target = $region53
        $region52: #{fire_detection_heads.1} parent=48 // pred_region
          // Predicated region
          $region65: #{fire_detection_heads.1} parent=52 // pred_check
            _
          $region66: #{fire_detection_heads.1} parent=52 // pred_check_branch
            %3715 = sbr.rel (0) target = $region68
          $region67: #{fire_detection_heads.1} parent=52 // pred_region
            %s3717 = ssub.s32 4, 1
            loop: start=0, step=1, limit=1
            $region69: #{fire_detection_heads.1} parent=67 // loop_pre_header
              _
            $region70: #{fire_detection_heads.1} parent=67 // loop_header
              %s3719 = sphi 0, %s3723
              %p3720 = scmp.ge.s32.totalorder %s3719, 1
              %s3724 = sphi [#allocation10], [#allocation10]
              %s3725 = sphi %s5, %s5
            $region71: #{fire_detection_heads.1} parent=67 // loop_header_branch
              %3722 = sbr.rel (%p3720) target = $region75
            $region72: #{fire_detection_heads.1} parent=67 // loop_body
              %v3726 = vld [vmem:[%s3724] sm:%s3717]
              %3727 = vst [vmem:[%s3725] sm:%s3717] %v3726
            $region73: #{fire_detection_heads.1} parent=67 // loop_footer
              %s3723 = sadd.s32 1, %s3719
            $region74: #{fire_detection_heads.1} parent=67 // loop_footer_branch
              %3718 = sbr.rel target = $region70
            $region75: #{fire_detection_heads.1} parent=67 // loop_exit
              _
          $region68: #{fire_detection_heads.1} parent=52 // pred_fallthru
            _
        $region53: #{fire_detection_heads.1} parent=48 // pred_fallthru
          _
        // Predicated region
        $region54: #{fire_detection_heads.1} parent=48 // pred_check
          _
        $region55: #{fire_detection_heads.1} parent=48 // pred_check_branch
          %3701 = sbr.rel (0) target = $region57
        $region56: #{fire_detection_heads.1} parent=48 // pred_region
          %s3703 = ssub.s32 4, 1
          loop: start=0, step=1, limit=1
          $region58: #{fire_detection_heads.1} parent=56 // loop_pre_header
            _
          $region59: #{fire_detection_heads.1} parent=56 // loop_header
            %s3705 = sphi 0, %s3709
            %p3706 = scmp.ge.s32.totalorder %s3705, 1
            %s3710 = sphi [#allocation10], [#allocation10]
            %s3711 = sphi %s5, %s5
          $region60: #{fire_detection_heads.1} parent=56 // loop_header_branch
            %3708 = sbr.rel (%p3706) target = $region64
          $region61: #{fire_detection_heads.1} parent=56 // loop_body
            %v3712 = vld [vmem:[%s3710] sm:%s3703]
            %3713 = vst [vmem:[%s3711] sm:%s3703] %v3712
          $region62: #{fire_detection_heads.1} parent=56 // loop_footer
            %s3709 = sadd.s32 1, %s3705
          $region63: #{fire_detection_heads.1} parent=56 // loop_footer_branch
            %3704 = sbr.rel target = $region59
          $region64: #{fire_detection_heads.1} parent=56 // loop_exit
            _
        $region57: #{fire_detection_heads.1} parent=48 // pred_fallthru
          _
      $region49: #{fire_detection_heads.1} parent=44 // pred_fallthru
        _
      %3728 = vnop
    $region45: #{fire_detection_heads.1} parent=1 // pred_fallthru
      _
    // Predicated region
    $region76: #{fire_detection_heads.1} parent=1 // pred_check
      _
    $region77: #{fire_detection_heads.1} parent=1 // pred_check_branch
      %3730 = sbr.rel (0) target = $region79
    $region78: #{fire_detection_heads.1} parent=1 // pred_region
      _
    $region79: #{fire_detection_heads.1} parent=1 // pred_fallthru
      _
    %3731 = vsyncpa [#allocation3], 1
    %3732 = vsyncpa [#allocation5], 1
    %3733 = vsyncpa [#allocation8], 1

</llo_original>
